<compile_context>
chip_gen: v6e
topology: v6e:2x2x1
jax: 0.10.0
libtpu: 0.0.40
codegen_flags: <defaults>
</compile_context>

<pallas_src>
import math
import functools

import jax
import jax.numpy as jnp
from jax.experimental import pallas as pl
from jax.experimental.pallas import tpu as pltpu


def _gelu(x):
    # BERT/GPT tanh-approx gelu (matches the module's `gelu`)
    return 0.5 * x * (1.0 + jnp.tanh(math.sqrt(2.0 / math.pi) * (x + 0.044715 * x ** 3)))


# ---------------------------------------------------------------------------
# Fused kernel: per-batch LayerNorm -> multi-graph multi-head cross-attention
#               -> FFN (Wo folded into W1 block rows) -> gated residual add
# ---------------------------------------------------------------------------
def fused_kernel(h_ref, nodes_ref, mask_ref, lnw_ref, lnb_ref,
                 wq_ref, wkv_ref, wf_ref, w2_ref, gate_ref,
                 out_ref, h1_ref, *, G, N, heads, dh, eps):
    h = h_ref[0]                                        # (S, D) f32
    S, D = h.shape
    inner = heads * dh

    # ---- LayerNorm (torch default: biased variance, eps=1e-5), f32
    mean = jnp.mean(h, axis=-1, keepdims=True)
    var = jnp.mean((h - mean) ** 2, axis=-1, keepdims=True)
    normed = (h - mean) * jax.lax.rsqrt(var + eps)
    normed = normed * lnw_ref[...] + lnb_ref[...]

    # ---- Q projection (bf16 operands, f32 accumulation) + scaling
    q = jnp.dot(normed.astype(jnp.bfloat16), wq_ref[...],
                preferred_element_type=jnp.float32)     # (S, inner)
    q = q * (dh ** -0.5)
    qh = q.astype(jnp.bfloat16).reshape(S, heads, dh)   # (S, H, dh)

    # ---- K/V for ALL graphs with ONE fused matmul (Wkv = [Wk | Wv])
    kv_in = nodes_ref[0].reshape(G * N, nodes_ref.shape[3]).astype(jnp.bfloat16)
    kv = jnp.dot(kv_in, wkv_ref[...], preferred_element_type=jnp.float32)  # (G*N, 2*inner)
    k_all = kv[:, :inner].astype(jnp.bfloat16).reshape(G * N, heads, dh)
    v_all = kv[:, inner:].astype(jnp.bfloat16).reshape(G * N, heads, dh)

    # ---- merged head-batched scores over all graphs: (H, S, G*N), f32
    scores = jnp.einsum('shd,mhd->hsm', qh, k_all,
                        preferred_element_type=jnp.float32)

    # additive mask bias (matches extend_mask exactly; stays in f32)
    neg_all = (1.0 - mask_ref[0]) * jnp.finfo(jnp.float32).min   # (G, N)

    # ---- per-graph softmax / PV / Wfused accumulation into VMEM scratch
    h1_ref[...] = jnp.zeros_like(h1_ref)
    for g in range(G):                                  # small static loop
        sg = scores[:, :, g * N:(g + 1) * N] + neg_all[g:g + 1, :]   # (H, S, N)
        m = jnp.max(sg, axis=-1, keepdims=True)
        e = jnp.exp(sg - m)
        p = e * pl.reciprocal(jnp.sum(e, axis=-1, keepdims=True), approx=True)

        # head-batched PV, laid out as (S, H, dh) then flattened = "unshape"
        og = jnp.einsum('hsn,nhd->shd', p.astype(jnp.bfloat16),
                        v_all[g * N:(g + 1) * N],
                        preferred_element_type=jnp.float32).reshape(S, inner)

        # cat_g(o_g @ Wo) @ W1  ==  sum_g  o_g @ (Wo @ W1[g*D:(g+1)*D])
        h1_ref[...] += jnp.dot(og.astype(jnp.bfloat16),
                               wf_ref[g * inner:(g + 1) * inner, :],
                               preferred_element_type=jnp.float32)

    # ---- FFN tail (gelu in f32) + gated residual
    a = _gelu(h1_ref[...])
    y = jnp.dot(a.astype(jnp.bfloat16), w2_ref[...],
                preferred_element_type=jnp.float32)      # (S, D)
    out_ref[0] = h + gate_ref[0, 0] * y


# ---------------------------------------------------------------------------
# Wrapper
# ---------------------------------------------------------------------------
def gated_xattn_forward(hidden, nodes, nodes_mask, params):
    B, S, D = hidden.shape
    _, G, N, Dkv = nodes.shape
    heads = params["heads"]
    dh = Dkv // heads
    inner = dh * heads
    ff_in, ff_hid = params["w1"].shape
    assert ff_in == G * D

    lnw = params["ln_w"].reshape(1, D).astype(jnp.float32)
    lnb = params["ln_b"].reshape(1, D).astype(jnp.float32)

    # bf16 weights for the MXU (accumulation stays f32 inside the kernel)
    wq = params["wq"].astype(jnp.bfloat16)                                   # (D, inner)
    wkv = jnp.concatenate([params["wk"], params["wv"]], axis=1).astype(jnp.bfloat16)  # (Dkv, 2*inner)
    # Fold Wo into the per-graph block rows of W1 (precompute in f32)
    w1_blocks = params["w1"].reshape(G, D, ff_hid)
    wfused = jnp.einsum('id,gdf->gif', params["wo"], w1_blocks) \
                .reshape(G * inner, ff_hid).astype(jnp.bfloat16)             # (G*inner, ff_hid)
    w2 = params["w2"].astype(jnp.bfloat16)                                   # (ff_hid, D)

    # ---- scoped-VMEM budget sized to the per-step working set
    bf16, f32 = 2, 4
    weight_bytes = (wq.size + wkv.size + wfused.size + w2.size) * bf16 \
                   + (lnw.size + lnb.size) * f32
    step_io_bytes = (S * D + G * N * Dkv + G * N + S * D) * f32
    live_bytes = (heads * S * G * N + G * N * 2 * inner + S * inner
                  + 2 * S * ff_hid) * f32
    est = 2 * (weight_bytes + step_io_bytes) + live_bytes + (4 << 20)
    vmem_limit = int(min(max(est, 16 << 20), 48 << 20))

    kernel = functools.partial(fused_kernel, G=G, N=N, heads=heads, dh=dh, eps=1e-5)

    out = pl.pallas_call(
        kernel,
        out_shape=jax.ShapeDtypeStruct((B, S, D), jnp.float32),
        grid_spec=pltpu.PrefetchScalarGridSpec(
            num_scalar_prefetch=0,
            grid=(B,),
            in_specs=[
                pl.BlockSpec((1, S, D), lambda b: (b, 0, 0)),              # hidden
                pl.BlockSpec((1, G, N, Dkv), lambda b: (b, 0, 0, 0)),      # nodes
                pl.BlockSpec((1, G, N), lambda b: (b, 0, 0)),              # nodes_mask
                pl.BlockSpec((1, D), lambda b: (0, 0)),                    # ln_w
                pl.BlockSpec((1, D), lambda b: (0, 0)),                    # ln_b
                pl.BlockSpec((D, inner), lambda b: (0, 0)),                # Wq (bf16)
                pl.BlockSpec((Dkv, 2 * inner), lambda b: (0, 0)),          # Wkv (bf16)
                pl.BlockSpec((G * inner, ff_hid), lambda b: (0, 0)),       # Wo@W1 (bf16)
                pl.BlockSpec((ff_hid, D), lambda b: (0, 0)),               # W2 (bf16)
                pl.BlockSpec(memory_space=pltpu.MemorySpace.SMEM),         # gate scalar
            ],
            out_specs=pl.BlockSpec((1, S, D), lambda b: (b, 0, 0)),
            scratch_shapes=[pltpu.VMEM((S, ff_hid), jnp.float32)],         # h1 accumulator
        ),
        compiler_params=pltpu.CompilerParams(
            dimension_semantics=("parallel",),
            vmem_limit_bytes=vmem_limit),
    )(hidden, nodes, nodes_mask.astype(jnp.float32), lnw, lnb,
      wq, wkv, wfused, w2, params["gate"].reshape(1, 1))

    # TODO(synk): previous_kv / use_cache=True KV-caching path not implemented;
    # this mirrors the use_cache=False path of the module (returns kv=None).
    return out, None


# ---------------------------------------------------------------------------
# Deterministic parameter init (shapes follow the module's __init__)
# ---------------------------------------------------------------------------
def init_params(key, dim, dim_kv, num_graph, heads, mult=4):
    dh = dim_kv // heads
    inner = dh * heads
    mult_eff = 0.5 if num_graph >= 4 else mult
    ff_in = num_graph * dim
    ff_hid = int(ff_in * mult_eff)
    ks = jax.random.split(key, 6)
    s = 0.1
    return dict(
        heads=heads,
        ln_w=jnp.ones((dim,), jnp.float32),
        ln_b=jnp.zeros((dim,), jnp.float32),
        wq=jax.random.normal(ks[0], (dim, inner), jnp.float32) * s,
        wk=jax.random.normal(ks[1], (dim_kv, inner), jnp.float32) * s,
        wv=jax.random.normal(ks[2], (dim_kv, inner), jnp.float32) * s,
        wo=jax.random.normal(ks[3], (inner, dim), jnp.float32) * s,
        w1=jax.random.normal(ks[4], (ff_in, ff_hid), jnp.float32) * s,
        w2=jax.random.normal(ks[5], (ff_hid, dim), jnp.float32) * s,
        # module inits gate to 0.0; use 0.1 here so the attention/FFN path
        # actually contributes to the output in this synthetic test.
        gate=jnp.array([0.1], jnp.float32),
    )


# ---------------------------------------------------------------------------
# Pure-JAX reference (mirrors the PyTorch forward exactly, all f32)
# ---------------------------------------------------------------------------
def reference_forward(hidden, nodes, nodes_mask, params):
    B, S, D = hidden.shape
    _, G, N, Dkv = nodes.shape
    heads = params["heads"]
    dh = Dkv // heads
    inner = dh * heads
    eps = 1e-5

    mean = hidden.mean(-1, keepdims=True)
    var = ((hidden - mean) ** 2).mean(-1, keepdims=True)
    normed = (hidden - mean) / jnp.sqrt(var + eps) * params["ln_w"] + params["ln_b"]

    q = (normed @ params["wq"]).reshape(B, S, heads, dh).transpose(0, 2, 1, 3)
    q = q * dh ** -0.5
    outs = []
    for i in range(G):
        k = (nodes[:, i] @ params["wk"]).reshape(B, N, heads, dh).transpose(0, 2, 1, 3)
        v = (nodes[:, i] @ params["wv"]).reshape(B, N, heads, dh).transpose(0, 2, 1, 3)
        scores = q @ k.transpose(0, 1, 3, 2)
        scores = scores + ((1.0 - nodes_mask[:, i])
                           * jnp.finfo(jnp.float32).min)[:, None, None, :]
        p = jax.nn.softmax(scores, axis=-1)
        o = (p @ v).transpose(0, 2, 1, 3).reshape(B, S, inner) @ params["wo"]
        outs.append(o)
    cat = jnp.concatenate(outs, axis=-1)
    y = _gelu(cat @ params["w1"]) @ params["w2"]
    return hidden + params["gate"][0] * y


if __name__ == "__main__":
    B, S, D = 2, 8, 32        # batch, seq, hidden dim
    G, N, Dkv = 2, 16, 32     # num_graph, nodes per graph, kv dim
    heads = 4

    key = jax.random.PRNGKey(0)
    k1, k2, k3, kp = jax.random.split(key, 4)
    hidden = jax.random.normal(k1, (B, S, D), jnp.float32)
    nodes = jax.random.normal(k2, (B, G, N, Dkv), jnp.float32)
    nodes_mask = (jax.random.uniform(k3, (B, G, N)) < 0.7).astype(jnp.float32)
    params = init_params(kp, D, Dkv, G, heads)

    out, kv = gated_xattn_forward(hidden, nodes, nodes_mask, params)
    out = jax.block_until_ready(out)

    ref = reference_forward(hidden, nodes, nodes_mask, params)
    max_err = float(jnp.max(jnp.abs(out - ref)))
    # bf16 MXU operands + approx reciprocal -> compare against the f32
    # reference with a correspondingly loosened tolerance.
    assert jnp.allclose(out, ref, atol=1e-2, rtol=1e-2), f"max_err={max_err}"
    print("KERNEL_OK")
</pallas_src>

<mosaic_0001>
module attributes {stable_mosaic.version = 11 : i64} {
  func.func @fused_kernel(%arg0: i32, %arg1: memref<1x8x32xf32, #tpu.memory_space<vmem>>, %arg2: memref<1x2x16x32xf32, #tpu.memory_space<vmem>>, %arg3: memref<1x2x16xf32, #tpu.memory_space<vmem>>, %arg4: memref<1x32xf32, #tpu.memory_space<vmem>>, %arg5: memref<1x32xf32, #tpu.memory_space<vmem>>, %arg6: memref<32x32xbf16, #tpu.memory_space<vmem>>, %arg7: memref<32x64xbf16, #tpu.memory_space<vmem>>, %arg8: memref<64x256xbf16, #tpu.memory_space<vmem>>, %arg9: memref<256x32xbf16, #tpu.memory_space<vmem>>, %arg10: memref<1x1xf32, #tpu.memory_space<smem>>, %arg11: memref<1x8x32xf32, #tpu.memory_space<vmem>>, %arg12: memref<8x256xf32, #tpu.memory_space<vmem>>) attributes {dimension_semantics = [#tpu.dimension_semantics<parallel>], iteration_bounds = array<i64: 2>, scalar_prefetch = 0 : i64, scratch_operands = 1 : i64, tpu.core_type = #tpu.core_type<tc>, window_params = [{transform_indices = @transform_0, window_bounds = array<i64: 1, 8, 32>}, {transform_indices = @transform_1, window_bounds = array<i64: 1, 2, 16, 32>}, {transform_indices = @transform_2, window_bounds = array<i64: 1, 2, 16>}, {pipeline_mode = #tpu.pipeline_mode<synchronous>, transform_indices = @transform_3, window_bounds = array<i64: 1, 32>}, {pipeline_mode = #tpu.pipeline_mode<synchronous>, transform_indices = @transform_4, window_bounds = array<i64: 1, 32>}, {pipeline_mode = #tpu.pipeline_mode<synchronous>, transform_indices = @transform_5, window_bounds = array<i64: 32, 32>}, {pipeline_mode = #tpu.pipeline_mode<synchronous>, transform_indices = @transform_6, window_bounds = array<i64: 32, 64>}, {pipeline_mode = #tpu.pipeline_mode<synchronous>, transform_indices = @transform_7, window_bounds = array<i64: 64, 256>}, {pipeline_mode = #tpu.pipeline_mode<synchronous>, transform_indices = @transform_8, window_bounds = array<i64: 256, 32>}, {transform_indices = @transform_9, window_bounds = array<i64: 1, 1>}, {transform_indices = @transform_10, window_bounds = array<i64: 1, 8, 32>}]} {
    %c0 = arith.constant 0 : index
    %c0_0 = arith.constant 0 : index
    %c0_1 = arith.constant 0 : index
    %0 = vector.load %arg1[%c0, %c0_0, %c0_1] : memref<1x8x32xf32, #tpu.memory_space<vmem>>, vector<1x8x32xf32>
    %1 = vector.shape_cast %0 : vector<1x8x32xf32> to vector<8x32xf32>
    %cst = arith.constant dense<0.000000e+00> : vector<8xf32>
    %2 = vector.multi_reduction <add>, %1, %cst [1] : vector<8x32xf32> to vector<8xf32>
    %3 = vector.shape_cast %2 : vector<8xf32> to vector<8x1xf32>
    %cst_2 = arith.constant 3.200000e+01 : f32
    %4 = vector.broadcast %cst_2 : f32 to vector<8x1xf32>
    %5 = arith.divf %3, %4 : vector<8x1xf32>
    %6 = vector.broadcast %5 : vector<8x1xf32> to vector<8x32xf32>
    %7 = arith.subf %1, %6 : vector<8x32xf32>
    %8 = arith.mulf %7, %7 : vector<8x32xf32>
    %cst_3 = arith.constant dense<0.000000e+00> : vector<8xf32>
    %9 = vector.multi_reduction <add>, %8, %cst_3 [1] : vector<8x32xf32> to vector<8xf32>
    %10 = vector.shape_cast %9 : vector<8xf32> to vector<8x1xf32>
    %cst_4 = arith.constant 3.200000e+01 : f32
    %11 = vector.broadcast %cst_4 : f32 to vector<8x1xf32>
    %12 = arith.divf %10, %11 : vector<8x1xf32>
    %13 = vector.broadcast %5 : vector<8x1xf32> to vector<8x32xf32>
    %14 = arith.subf %1, %13 : vector<8x32xf32>
    %cst_5 = arith.constant 9.99999974E-6 : f32
    %15 = vector.broadcast %cst_5 : f32 to vector<8x1xf32>
    %16 = arith.addf %12, %15 : vector<8x1xf32>
    %17 = math.rsqrt %16 : vector<8x1xf32>
    %18 = vector.broadcast %17 : vector<8x1xf32> to vector<8x32xf32>
    %19 = arith.mulf %14, %18 : vector<8x32xf32>
    %c0_6 = arith.constant 0 : index
    %c0_7 = arith.constant 0 : index
    %20 = vector.load %arg4[%c0_6, %c0_7] : memref<1x32xf32, #tpu.memory_space<vmem>>, vector<1x32xf32>
    %21 = vector.broadcast %20 : vector<1x32xf32> to vector<8x32xf32>
    %22 = arith.mulf %19, %21 : vector<8x32xf32>
    %c0_8 = arith.constant 0 : index
    %c0_9 = arith.constant 0 : index
    %23 = vector.load %arg5[%c0_8, %c0_9] : memref<1x32xf32, #tpu.memory_space<vmem>>, vector<1x32xf32>
    %24 = vector.broadcast %23 : vector<1x32xf32> to vector<8x32xf32>
    %25 = arith.addf %22, %24 : vector<8x32xf32>
    %26 = arith.truncf %25 : vector<8x32xf32> to vector<8x32xbf16>
    %c0_10 = arith.constant 0 : index
    %c0_11 = arith.constant 0 : index
    %27 = vector.load %arg6[%c0_10, %c0_11] : memref<32x32xbf16, #tpu.memory_space<vmem>>, vector<32x32xbf16>
    %cst_12 = arith.constant dense<0.000000e+00> : vector<8x32xf32>
    %28 = tpu.matmul %26, %27, %cst_12 {dimension_numbers = #tpu.dot_dimension_numbers<[1], [0], [0], [1], [0, 0, 1, 1], [], []>} : vector<8x32xbf16>, vector<32x32xbf16>, vector<8x32xf32> -> vector<8x32xf32>
    %cst_13 = arith.constant 0.353553385 : f32
    %29 = vector.broadcast %cst_13 : f32 to vector<8x32xf32>
    %30 = arith.mulf %28, %29 : vector<8x32xf32>
    %31 = arith.truncf %30 : vector<8x32xf32> to vector<8x32xbf16>
    %32 = vector.shape_cast %31 : vector<8x32xbf16> to vector<8x4x8xbf16>
    %c0_14 = arith.constant 0 : index
    %c0_15 = arith.constant 0 : index
    %c0_16 = arith.constant 0 : index
    %c0_17 = arith.constant 0 : index
    %33 = vector.load %arg2[%c0_14, %c0_15, %c0_16, %c0_17] : memref<1x2x16x32xf32, #tpu.memory_space<vmem>>, vector<1x2x16x32xf32>
    %34 = vector.shape_cast %33 : vector<1x2x16x32xf32> to vector<2x16x32xf32>
    %35 = vector.shape_cast %34 : vector<2x16x32xf32> to vector<32x32xf32>
    %36 = arith.truncf %35 : vector<32x32xf32> to vector<32x32xbf16>
    %c0_18 = arith.constant 0 : index
    %c0_19 = arith.constant 0 : index
    %37 = vector.load %arg7[%c0_18, %c0_19] : memref<32x64xbf16, #tpu.memory_space<vmem>>, vector<32x64xbf16>
    %cst_20 = arith.constant dense<0.000000e+00> : vector<32x64xf32>
    %38 = tpu.matmul %36, %37, %cst_20 {dimension_numbers = #tpu.dot_dimension_numbers<[1], [0], [0], [1], [0, 0, 1, 1], [], []>} : vector<32x32xbf16>, vector<32x64xbf16>, vector<32x64xf32> -> vector<32x64xf32>
    %39 = vector.extract_strided_slice %38 {offsets = [0, 0], sizes = [32, 32], strides = [1, 1]} : vector<32x64xf32> to vector<32x32xf32>
    %40 = arith.truncf %39 : vector<32x32xf32> to vector<32x32xbf16>
    %41 = vector.shape_cast %40 : vector<32x32xbf16> to vector<32x4x8xbf16>
    %42 = vector.extract_strided_slice %38 {offsets = [0, 32], sizes = [32, 32], strides = [1, 1]} : vector<32x64xf32> to vector<32x32xf32>
    %43 = arith.truncf %42 : vector<32x32xf32> to vector<32x32xbf16>
    %44 = vector.shape_cast %43 : vector<32x32xbf16> to vector<32x4x8xbf16>
    "tpu.trace_start"() <{level = 10 : i32, message = "shd,mhd->hsm"}> : () -> ()
    %cst_21 = arith.constant dense<0.000000e+00> : vector<4x8x32xf32>
    %45 = tpu.matmul %32, %41, %cst_21 {dimension_numbers = #tpu.dot_dimension_numbers<[2], [2], [0], [0], [0, 1, 0, 0, 1, 0], [1], [1]>} : vector<8x4x8xbf16>, vector<32x4x8xbf16>, vector<4x8x32xf32> -> vector<4x8x32xf32>
    "tpu.trace_stop"() : () -> ()
    %c0_22 = arith.constant 0 : index
    %c0_23 = arith.constant 0 : index
    %c0_24 = arith.constant 0 : index
    %46 = vector.load %arg3[%c0_22, %c0_23, %c0_24] : memref<1x2x16xf32, #tpu.memory_space<vmem>>, vector<1x2x16xf32>
    %47 = vector.shape_cast %46 : vector<1x2x16xf32> to vector<2x16xf32>
    %cst_25 = arith.constant 1.000000e+00 : f32
    %48 = vector.broadcast %cst_25 : f32 to vector<2x16xf32>
    %49 = arith.subf %48, %47 : vector<2x16xf32>
    %cst_26 = arith.constant -3.40282347E+38 : f32
    %50 = vector.broadcast %cst_26 : f32 to vector<2x16xf32>
    %51 = arith.mulf %49, %50 : vector<2x16xf32>
    %cst_27 = arith.constant 0.000000e+00 : f32
    %52 = vector.broadcast %cst_27 : f32 to vector<8x256xf32>
    %c0_28 = arith.constant 0 : index
    %c0_29 = arith.constant 0 : index
    %53 = vector.load %arg12[%c0_28, %c0_29] : memref<8x256xf32, #tpu.memory_space<vmem>>, vector<8x256xf32>
    tpu.vector_store %arg12[%c0_28, %c0_29], %52 {strides = array<i32>} : memref<8x256xf32, #tpu.memory_space<vmem>>, vector<8x256xf32>,
    %54 = vector.extract_strided_slice %45 {offsets = [0, 0, 0], sizes = [4, 8, 16], strides = [1, 1, 1]} : vector<4x8x32xf32> to vector<4x8x16xf32>
    %55 = vector.extract_strided_slice %51 {offsets = [0, 0], sizes = [1, 16], strides = [1, 1]} : vector<2x16xf32> to vector<1x16xf32>
    %56 = vector.shape_cast %55 : vector<1x16xf32> to vector<1x1x16xf32>
    %57 = vector.broadcast %56 : vector<1x1x16xf32> to vector<4x8x16xf32>
    %58 = arith.addf %54, %57 : vector<4x8x16xf32>
    %cst_30 = arith.constant dense<0xFF800000> : vector<4x8xf32>
    %59 = vector.multi_reduction <maximumf>, %58, %cst_30 [2] : vector<4x8x16xf32> to vector<4x8xf32>
    %60 = vector.shape_cast %59 : vector<4x8xf32> to vector<4x8x1xf32>
    %61 = vector.broadcast %60 : vector<4x8x1xf32> to vector<4x8x16xf32>
    %62 = arith.subf %58, %61 : vector<4x8x16xf32>
    %63 = math.exp %62 : vector<4x8x16xf32>
    %cst_31 = arith.constant dense<0.000000e+00> : vector<4x8xf32>
    %64 = vector.multi_reduction <add>, %63, %cst_31 [2] : vector<4x8x16xf32> to vector<4x8xf32>
    %65 = vector.shape_cast %64 : vector<4x8xf32> to vector<4x8x1xf32>
    %66 = tpu.reciprocal %65 {approx = true} : vector<4x8x1xf32> -> vector<4x8x1xf32>
    %67 = vector.broadcast %66 : vector<4x8x1xf32> to vector<4x8x16xf32>
    %68 = arith.mulf %63, %67 : vector<4x8x16xf32>
    %69 = arith.truncf %68 : vector<4x8x16xf32> to vector<4x8x16xbf16>
    %70 = vector.extract_strided_slice %44 {offsets = [0, 0, 0], sizes = [16, 4, 8], strides = [1, 1, 1]} : vector<32x4x8xbf16> to vector<16x4x8xbf16>
    "tpu.trace_start"() <{level = 10 : i32, message = "hsn,nhd->shd"}> : () -> ()
    %cst_32 = arith.constant dense<0.000000e+00> : vector<4x8x8xf32>
    %71 = tpu.matmul %70, %69, %cst_32 {dimension_numbers = #tpu.dot_dimension_numbers<[0], [2], [2], [1], [0, 1, 0, 2, 1, 1], [1], [0]>} : vector<16x4x8xbf16>, vector<4x8x16xbf16>, vector<4x8x8xf32> -> vector<4x8x8xf32>
    %72 = tpu.transpose %71, [2, 0, 1] : vector<4x8x8xf32> -> vector<8x4x8xf32>
    "tpu.trace_stop"() : () -> ()
    %73 = vector.shape_cast %72 : vector<8x4x8xf32> to vector<8x32xf32>
    %c0_33 = arith.constant 0 : index
    %c0_34 = arith.constant 0 : index
    %74 = vector.load %arg12[%c0_33, %c0_34] : memref<8x256xf32, #tpu.memory_space<vmem>>, vector<8x256xf32>
    %75 = arith.truncf %73 : vector<8x32xf32> to vector<8x32xbf16>
    %c0_35 = arith.constant 0 : index
    %c0_36 = arith.constant 0 : index
    %76 = vector.load %arg8[%c0_35, %c0_36] : memref<64x256xbf16, #tpu.memory_space<vmem>>, vector<32x256xbf16>
    %cst_37 = arith.constant dense<0.000000e+00> : vector<8x256xf32>
    %77 = tpu.matmul %75, %76, %cst_37 {dimension_numbers = #tpu.dot_dimension_numbers<[1], [0], [0], [1], [0, 0, 1, 1], [], []>} : vector<8x32xbf16>, vector<32x256xbf16>, vector<8x256xf32> -> vector<8x256xf32>
    %78 = arith.addf %74, %77 : vector<8x256xf32>
    %c0_38 = arith.constant 0 : index
    %c0_39 = arith.constant 0 : index
    %79 = vector.load %arg12[%c0_38, %c0_39] : memref<8x256xf32, #tpu.memory_space<vmem>>, vector<8x256xf32>
    tpu.vector_store %arg12[%c0_38, %c0_39], %78 {strides = array<i32>} : memref<8x256xf32, #tpu.memory_space<vmem>>, vector<8x256xf32>,
    %80 = vector.extract_strided_slice %45 {offsets = [0, 0, 16], sizes = [4, 8, 16], strides = [1, 1, 1]} : vector<4x8x32xf32> to vector<4x8x16xf32>
    %81 = vector.extract_strided_slice %51 {offsets = [1, 0], sizes = [1, 16], strides = [1, 1]} : vector<2x16xf32> to vector<1x16xf32>
    %82 = vector.shape_cast %81 : vector<1x16xf32> to vector<1x1x16xf32>
    %83 = vector.broadcast %82 : vector<1x1x16xf32> to vector<4x8x16xf32>
    %84 = arith.addf %80, %83 : vector<4x8x16xf32>
    %cst_40 = arith.constant dense<0xFF800000> : vector<4x8xf32>
    %85 = vector.multi_reduction <maximumf>, %84, %cst_40 [2] : vector<4x8x16xf32> to vector<4x8xf32>
    %86 = vector.shape_cast %85 : vector<4x8xf32> to vector<4x8x1xf32>
    %87 = vector.broadcast %86 : vector<4x8x1xf32> to vector<4x8x16xf32>
    %88 = arith.subf %84, %87 : vector<4x8x16xf32>
    %89 = math.exp %88 : vector<4x8x16xf32>
    %cst_41 = arith.constant dense<0.000000e+00> : vector<4x8xf32>
    %90 = vector.multi_reduction <add>, %89, %cst_41 [2] : vector<4x8x16xf32> to vector<4x8xf32>
    %91 = vector.shape_cast %90 : vector<4x8xf32> to vector<4x8x1xf32>
    %92 = tpu.reciprocal %91 {approx = true} : vector<4x8x1xf32> -> vector<4x8x1xf32>
    %93 = vector.broadcast %92 : vector<4x8x1xf32> to vector<4x8x16xf32>
    %94 = arith.mulf %89, %93 : vector<4x8x16xf32>
    %95 = arith.truncf %94 : vector<4x8x16xf32> to vector<4x8x16xbf16>
    %96 = vector.extract_strided_slice %44 {offsets = [16, 0, 0], sizes = [16, 4, 8], strides = [1, 1, 1]} : vector<32x4x8xbf16> to vector<16x4x8xbf16>
    "tpu.trace_start"() <{level = 10 : i32, message = "hsn,nhd->shd"}> : () -> ()
    %cst_42 = arith.constant dense<0.000000e+00> : vector<4x8x8xf32>
    %97 = tpu.matmul %96, %95, %cst_42 {dimension_numbers = #tpu.dot_dimension_numbers<[0], [2], [2], [1], [0, 1, 0, 2, 1, 1], [1], [0]>} : vector<16x4x8xbf16>, vector<4x8x16xbf16>, vector<4x8x8xf32> -> vector<4x8x8xf32>
    %98 = tpu.transpose %97, [2, 0, 1] : vector<4x8x8xf32> -> vector<8x4x8xf32>
    "tpu.trace_stop"() : () -> ()
    %99 = vector.shape_cast %98 : vector<8x4x8xf32> to vector<8x32xf32>
    %c0_43 = arith.constant 0 : index
    %c0_44 = arith.constant 0 : index
    %100 = vector.load %arg12[%c0_43, %c0_44] : memref<8x256xf32, #tpu.memory_space<vmem>>, vector<8x256xf32>
    %101 = arith.truncf %99 : vector<8x32xf32> to vector<8x32xbf16>
    %c32 = arith.constant 32 : index
    %c0_45 = arith.constant 0 : index
    %102 = vector.load %arg8[%c32, %c0_45] : memref<64x256xbf16, #tpu.memory_space<vmem>>, vector<32x256xbf16>
    %cst_46 = arith.constant dense<0.000000e+00> : vector<8x256xf32>
    %103 = tpu.matmul %101, %102, %cst_46 {dimension_numbers = #tpu.dot_dimension_numbers<[1], [0], [0], [1], [0, 0, 1, 1], [], []>} : vector<8x32xbf16>, vector<32x256xbf16>, vector<8x256xf32> -> vector<8x256xf32>
    %104 = arith.addf %100, %103 : vector<8x256xf32>
    %c0_47 = arith.constant 0 : index
    %c0_48 = arith.constant 0 : index
    %105 = vector.load %arg12[%c0_47, %c0_48] : memref<8x256xf32, #tpu.memory_space<vmem>>, vector<8x256xf32>
    tpu.vector_store %arg12[%c0_47, %c0_48], %104 {strides = array<i32>} : memref<8x256xf32, #tpu.memory_space<vmem>>, vector<8x256xf32>,
    %c0_49 = arith.constant 0 : index
    %c0_50 = arith.constant 0 : index
    %106 = vector.load %arg12[%c0_49, %c0_50] : memref<8x256xf32, #tpu.memory_space<vmem>>, vector<8x256xf32>
    %cst_51 = arith.constant 5.000000e-01 : f32
    %107 = vector.broadcast %cst_51 : f32 to vector<8x256xf32>
    %108 = arith.mulf %107, %106 : vector<8x256xf32>
    %109 = arith.mulf %106, %106 : vector<8x256xf32>
    %110 = arith.mulf %106, %109 : vector<8x256xf32>
    %cst_52 = arith.constant 4.471500e-02 : f32
    %111 = vector.broadcast %cst_52 : f32 to vector<8x256xf32>
    %112 = arith.mulf %111, %110 : vector<8x256xf32>
    %113 = arith.addf %106, %112 : vector<8x256xf32>
    %cst_53 = arith.constant 0.797884583 : f32
    %114 = vector.broadcast %cst_53 : f32 to vector<8x256xf32>
    %115 = arith.mulf %114, %113 : vector<8x256xf32>
    %116 = math.tanh %115 : vector<8x256xf32>
    %cst_54 = arith.constant 1.000000e+00 : f32
    %117 = vector.broadcast %cst_54 : f32 to vector<8x256xf32>
    %118 = arith.addf %117, %116 : vector<8x256xf32>
    %119 = arith.mulf %108, %118 : vector<8x256xf32>
    %120 = arith.truncf %119 : vector<8x256xf32> to vector<8x256xbf16>
    %c0_55 = arith.constant 0 : index
    %c0_56 = arith.constant 0 : index
    %121 = vector.load %arg9[%c0_55, %c0_56] : memref<256x32xbf16, #tpu.memory_space<vmem>>, vector<256x32xbf16>
    %cst_57 = arith.constant dense<0.000000e+00> : vector<8x32xf32>
    %122 = tpu.matmul %120, %121, %cst_57 {dimension_numbers = #tpu.dot_dimension_numbers<[1], [0], [0], [1], [0, 0, 1, 1], [], []>} : vector<8x256xbf16>, vector<256x32xbf16>, vector<8x32xf32> -> vector<8x32xf32>
    %c0_58 = arith.constant 0 : index
    %c0_59 = arith.constant 0 : index
    %123 = memref.load %arg10[%c0_58, %c0_59] : memref<1x1xf32, #tpu.memory_space<smem>>
    %124 = vector.broadcast %123 : f32 to vector<8x32xf32>
    %125 = arith.mulf %124, %122 : vector<8x32xf32>
    %126 = arith.addf %1, %125 : vector<8x32xf32>
    %c0_60 = arith.constant 0 : index
    %c0_61 = arith.constant 0 : index
    %c0_62 = arith.constant 0 : index
    %127 = vector.load %arg11[%c0_60, %c0_61, %c0_62] : memref<1x8x32xf32, #tpu.memory_space<vmem>>, vector<1x8x32xf32>
    %128 = vector.shape_cast %127 : vector<1x8x32xf32> to vector<8x32xf32>
    %129 = vector.shape_cast %126 : vector<8x32xf32> to vector<1x8x32xf32>
    tpu.vector_store %arg11[%c0_60, %c0_61, %c0_62], %129 {strides = array<i32>} : memref<1x8x32xf32, #tpu.memory_space<vmem>>, vector<1x8x32xf32>,
    return
  }
  func.func @transform_0(%arg0: i32) -> (i32, i32, i32) {
    %c0_i32 = arith.constant 0 : i32
    %c0_i32_0 = arith.constant 0 : i32
    %c0_i32_1 = arith.constant 0 : i32
    return %arg0, %c0_i32, %c0_i32_0 : i32, i32, i32
  }
  func.func @transform_1(%arg0: i32) -> (i32, i32, i32, i32) {
    %c0_i32 = arith.constant 0 : i32
    %c0_i32_0 = arith.constant 0 : i32
    %c0_i32_1 = arith.constant 0 : i32
    %c0_i32_2 = arith.constant 0 : i32
    return %arg0, %c0_i32, %c0_i32_0, %c0_i32_1 : i32, i32, i32, i32
  }
  func.func @transform_2(%arg0: i32) -> (i32, i32, i32) {
    %c0_i32 = arith.constant 0 : i32
    %c0_i32_0 = arith.constant 0 : i32
    %c0_i32_1 = arith.constant 0 : i32
    return %arg0, %c0_i32, %c0_i32_0 : i32, i32, i32
  }
  func.func @transform_3(%arg0: i32) -> (i32, i32) {
    %c0_i32 = arith.constant 0 : i32
    %c0_i32_0 = arith.constant 0 : i32
    %c0_i32_1 = arith.constant 0 : i32
    return %c0_i32, %c0_i32_0 : i32, i32
  }
  func.func @transform_4(%arg0: i32) -> (i32, i32) {
    %c0_i32 = arith.constant 0 : i32
    %c0_i32_0 = arith.constant 0 : i32
    %c0_i32_1 = arith.constant 0 : i32
    return %c0_i32, %c0_i32_0 : i32, i32
  }
  func.func @transform_5(%arg0: i32) -> (i32, i32) {
    %c0_i32 = arith.constant 0 : i32
    %c0_i32_0 = arith.constant 0 : i32
    %c0_i32_1 = arith.constant 0 : i32
    return %c0_i32, %c0_i32_0 : i32, i32
  }
  func.func @transform_6(%arg0: i32) -> (i32, i32) {
    %c0_i32 = arith.constant 0 : i32
    %c0_i32_0 = arith.constant 0 : i32
    %c0_i32_1 = arith.constant 0 : i32
    return %c0_i32, %c0_i32_0 : i32, i32
  }
  func.func @transform_7(%arg0: i32) -> (i32, i32) {
    %c0_i32 = arith.constant 0 : i32
    %c0_i32_0 = arith.constant 0 : i32
    %c0_i32_1 = arith.constant 0 : i32
    return %c0_i32, %c0_i32_0 : i32, i32
  }
  func.func @transform_8(%arg0: i32) -> (i32, i32) {
    %c0_i32 = arith.constant 0 : i32
    %c0_i32_0 = arith.constant 0 : i32
    %c0_i32_1 = arith.constant 0 : i32
    return %c0_i32, %c0_i32_0 : i32, i32
  }
  func.func @transform_9(%arg0: i32) -> (i32, i32) {
    %c0_i32 = arith.constant 0 : i32
    %c0_i32_0 = arith.constant 0 : i32
    %c0_i32_1 = arith.constant 0 : i32
    return %c0_i32, %c0_i32_0 : i32, i32
  }
  func.func @transform_10(%arg0: i32) -> (i32, i32, i32) {
    %c0_i32 = arith.constant 0 : i32
    %c0_i32_0 = arith.constant 0 : i32
    %c0_i32_1 = arith.constant 0 : i32
    return %arg0, %c0_i32, %c0_i32_0 : i32, i32, i32
  }
}

</mosaic_0001>

<llo_original>
// kernel: tpu_custom_call.1
$region0: #{tpu_custom_call.1}
  #allocation0 [shape = 'u32[]', space=smem, size = 0x4, offset = 0x4, fixed_abs, tag = 'smem constant byte address 0x4 - core index']
  #allocation1 [shape = 'u32[144,128]{1,0:T(1,128)}', space=vmem, size = 0x12000, scoped, tag = 'internal scratch']
  #allocation2 [shape = 'f32[8,256]{1,0:T(8,128)}', space=vmem, size = 0x2000, scoped, tag = 'scratch operand']
  #allocation3 [shape = 'f32[1,1]{1,0:T(1,128)S(6)}', space=smem, size = 0x200, scoped, tag = 'scoped memory for tpu_custom_call.1']
  %s0 = inlined_call_operand.vmem [shape: f32[2,8,32], index: 0, kind: input, shape index: {}]
  %s1 = inlined_call_operand.vmem [shape: f32[2,2,16,32], index: 1, kind: input, shape index: {}]
  %s2 = inlined_call_operand.vmem [shape: f32[2,2,16], index: 2, kind: input, shape index: {}]
  %s3 = inlined_call_operand.vmem [shape: f32[1,32], index: 3, kind: input, shape index: {}]
  %s4 = inlined_call_operand.vmem [shape: f32[1,32], index: 4, kind: input, shape index: {}]
  %s5 = inlined_call_operand.vmem [shape: bf16[32,32], index: 5, kind: input, shape index: {}]
  %s6 = inlined_call_operand.hbm [shape: bf16[32,64], index: 6, kind: input, shape index: {}]
  %s7 = inlined_call_operand.vmem [shape: bf16[64,256], index: 7, kind: input, shape index: {}]
  %s8 = inlined_call_operand.vmem [shape: bf16[256,32], index: 8, kind: input, shape index: {}]
  %s9 = inlined_call_operand.<no memory space> [shape: f32[1,1], index: 9, kind: input, shape index: {}]
  %s10 = inlined_call_operand.hbm [shape: f32[2,8,32], index: 10, kind: output, shape index: {}]
  %s11 = sld [smem:[#allocation0]]
  $region77: #{tpu_custom_call.1} parent=0
    _
  %s13 = ssub.s32 1, %s11
  %s14 = scalar_select 0, %s13, %s11
  %15 = sst [smem:[#allocation3]] %s9
  $region1: #{tpu_custom_call.1} parent=0
    #allocation4 [shape = 'u8[8192]{0}', space=vmem, size = 0x2000, scoped, tag = 'input window, operand 6, single buffered']
    #allocation5 [shape = 's32[2]{0}', space=sflag, size = 0x8, scoped, tag = 'scoped memory for tpu_custom_call.1']
    #allocation6 [shape = 's32[2]{0}', space=sflag, size = 0x8, scoped, tag = 'scoped memory for tpu_custom_call.1']
    #allocation7 [shape = 'u8[8192]{0}', space=vmem, size = 0x2000, scoped, tag = 'output window, operand 0']
    %16 = vsyncpa [#allocation5], 0
    %17 = vsyncpa [#allocation6], 0
    %s18 = scalar_lea.sflag [#allocation6], 1
    %19 = vsyncpa %s18, 0
    loop: start=0, step=1, limit=4
    $region2: #{tpu_custom_call.1} parent=1 // loop_pre_header
      _
    $region3: #{tpu_custom_call.1} parent=1 // loop_header
      %s21 = sphi 0, %s25
      %p22 = scmp.ge.s32.totalorder %s21, 4
      %s31 = sphi 0, %s33
      %s34 = sphi 0, %s31
      %s35 = sphi 0, %s34
      %s51 = sphi 0, %s35
      %s57 = sphi 0, %s59
      %s60 = sphi 0, %s57
      %s61 = sphi 0, %s60
      %s77 = sphi 0, %s61
      %s83 = sphi 0, %s85
      %s86 = sphi 0, %s83
      %s87 = sphi 0, %s86
      %s103 = sphi 0, %s87
      %s107 = sphi 0, %s107
      %s109 = sphi 0, %s107
      %s110 = sphi 0, %s109
      %s124 = sphi 0, %s110
      %s128 = sphi 0, %s128
      %s130 = sphi 0, %s128
      %s131 = sphi 0, %s130
      %s145 = sphi 0, %s131
      %s149 = sphi 0, %s149
      %s151 = sphi 0, %s149
      %s152 = sphi 0, %s151
      %s166 = sphi 0, %s152
      %s170 = sphi 0, %s170
      %s172 = sphi 0, %s170
      %s173 = sphi 0, %s172
      %s187 = sphi 0, %s173
      %s191 = sphi 0, %s191
      %s193 = sphi 0, %s191
      %s194 = sphi 0, %s193
      %s208 = sphi 0, %s194
      %s212 = sphi 0, %s212
      %s214 = sphi 0, %s212
      %s215 = sphi 0, %s214
      %s229 = sphi 0, %s215
      %s233 = sphi 0, %s233
      %s235 = sphi 0, %s233
      %s236 = sphi 0, %s235
      %s250 = sphi 0, %s236
      %s256 = sphi 0, %s258
      %s259 = sphi 0, %s256
      %s260 = sphi 0, %s259
      %s276 = sphi 0, %s260
    $region4: #{tpu_custom_call.1} parent=1 // loop_header_branch
      %24 = sbr.rel (%p22) target = $region8
    $region5: #{tpu_custom_call.1} parent=1 // loop_body
      %s26 = ssub.s32 %s21, 1
      %s27 = ssub.s32 %s21, 2
      %s28 = sadd.s32 %s21, 1
      %s29 = ssub.s32 %s21, %s28
      %p30 = scmp.eq.s32.totalorder %s29, 0
      %s32 = sadd.s32 %s31, 1
      %s33 = scalar_select %p30, %s31, %s32
      %p36 = pneg %p30
      %p37 = scmp.eq.s32.totalorder %s21, 1
      %p38 = por %p36, %p37
      %p39 = scmp.ne.s32.totalorder %s31, %s34
      %p40 = scmp.eq.s32.totalorder %s21, 0
      %p41 = por %p39, %p40
      %p42 = scmp.ne.s32.totalorder %s31, %s34
      %p43 = scmp.eq.s32.totalorder %s26, 1
      %p44 = por %p42, %p43
      %p45 = scmp.ne.s32.totalorder %s34, %s35
      %p46 = scmp.eq.s32.totalorder %s26, 0
      %p47 = por %p45, %p46
      %p48 = scmp.ne.s32.totalorder %s34, %s35
      %p49 = scmp.eq.s32.totalorder %s27, 1
      %p50 = por %p48, %p49
      %p52 = scmp.ne.s32.totalorder %s35, %s51
      %p53 = scmp.eq.s32.totalorder %s27, 0
      %p54 = por %p52, %p53
      %s55 = ssub.s32 %s21, %s28
      %p56 = scmp.eq.s32.totalorder %s55, 0
      %s58 = sadd.s32 %s57, 1
      %s59 = scalar_select %p56, %s57, %s58
      %p62 = pneg %p56
      %p63 = scmp.eq.s32.totalorder %s21, 1
      %p64 = por %p62, %p63
      %p65 = scmp.ne.s32.totalorder %s57, %s60
      %p66 = scmp.eq.s32.totalorder %s21, 0
      %p67 = por %p65, %p66
      %p68 = scmp.ne.s32.totalorder %s57, %s60
      %p69 = scmp.eq.s32.totalorder %s26, 1
      %p70 = por %p68, %p69
      %p71 = scmp.ne.s32.totalorder %s60, %s61
      %p72 = scmp.eq.s32.totalorder %s26, 0
      %p73 = por %p71, %p72
      %p74 = scmp.ne.s32.totalorder %s60, %s61
      %p75 = scmp.eq.s32.totalorder %s27, 1
      %p76 = por %p74, %p75
      %p78 = scmp.ne.s32.totalorder %s61, %s77
      %p79 = scmp.eq.s32.totalorder %s27, 0
      %p80 = por %p78, %p79
      %s81 = ssub.s32 %s21, %s28
      %p82 = scmp.eq.s32.totalorder %s81, 0
      %s84 = sadd.s32 %s83, 1
      %s85 = scalar_select %p82, %s83, %s84
      %p88 = pneg %p82
      %p89 = scmp.eq.s32.totalorder %s21, 1
      %p90 = por %p88, %p89
      %p91 = scmp.ne.s32.totalorder %s83, %s86
      %p92 = scmp.eq.s32.totalorder %s21, 0
      %p93 = por %p91, %p92
      %p94 = scmp.ne.s32.totalorder %s83, %s86
      %p95 = scmp.eq.s32.totalorder %s26, 1
      %p96 = por %p94, %p95
      %p97 = scmp.ne.s32.totalorder %s86, %s87
      %p98 = scmp.eq.s32.totalorder %s26, 0
      %p99 = por %p97, %p98
      %p100 = scmp.ne.s32.totalorder %s86, %s87
      %p101 = scmp.eq.s32.totalorder %s27, 1
      %p102 = por %p100, %p101
      %p104 = scmp.ne.s32.totalorder %s87, %s103
      %p105 = scmp.eq.s32.totalorder %s27, 0
      %p106 = por %p104, %p105
      %s108 = sadd.s32 %s107, 1
      %p111 = scmp.eq.s32.totalorder %s21, 1
      %p112 = scmp.ne.s32.totalorder %s107, %s109
      %p113 = scmp.eq.s32.totalorder %s21, 0
      %p114 = por %p112, %p113
      %p115 = scmp.ne.s32.totalorder %s107, %s109
      %p116 = scmp.eq.s32.totalorder %s26, 1
      %p117 = por %p115, %p116
      %p118 = scmp.ne.s32.totalorder %s109, %s110
      %p119 = scmp.eq.s32.totalorder %s26, 0
      %p120 = por %p118, %p119
      %p121 = scmp.ne.s32.totalorder %s109, %s110
      %p122 = scmp.eq.s32.totalorder %s27, 1
      %p123 = por %p121, %p122
      %p125 = scmp.ne.s32.totalorder %s110, %s124
      %p126 = scmp.eq.s32.totalorder %s27, 0
      %p127 = por %p125, %p126
      %s129 = sadd.s32 %s128, 1
      %p132 = scmp.eq.s32.totalorder %s21, 1
      %p133 = scmp.ne.s32.totalorder %s128, %s130
      %p134 = scmp.eq.s32.totalorder %s21, 0
      %p135 = por %p133, %p134
      %p136 = scmp.ne.s32.totalorder %s128, %s130
      %p137 = scmp.eq.s32.totalorder %s26, 1
      %p138 = por %p136, %p137
      %p139 = scmp.ne.s32.totalorder %s130, %s131
      %p140 = scmp.eq.s32.totalorder %s26, 0
      %p141 = por %p139, %p140
      %p142 = scmp.ne.s32.totalorder %s130, %s131
      %p143 = scmp.eq.s32.totalorder %s27, 1
      %p144 = por %p142, %p143
      %p146 = scmp.ne.s32.totalorder %s131, %s145
      %p147 = scmp.eq.s32.totalorder %s27, 0
      %p148 = por %p146, %p147
      %s150 = sadd.s32 %s149, 1
      %p153 = scmp.eq.s32.totalorder %s21, 1
      %p154 = scmp.ne.s32.totalorder %s149, %s151
      %p155 = scmp.eq.s32.totalorder %s21, 0
      %p156 = por %p154, %p155
      %p157 = scmp.ne.s32.totalorder %s149, %s151
      %p158 = scmp.eq.s32.totalorder %s26, 1
      %p159 = por %p157, %p158
      %p160 = scmp.ne.s32.totalorder %s151, %s152
      %p161 = scmp.eq.s32.totalorder %s26, 0
      %p162 = por %p160, %p161
      %p163 = scmp.ne.s32.totalorder %s151, %s152
      %p164 = scmp.eq.s32.totalorder %s27, 1
      %p165 = por %p163, %p164
      %p167 = scmp.ne.s32.totalorder %s152, %s166
      %p168 = scmp.eq.s32.totalorder %s27, 0
      %p169 = por %p167, %p168
      %s171 = sadd.s32 %s170, 1
      %p174 = scmp.eq.s32.totalorder %s21, 1
      %p175 = scmp.ne.s32.totalorder %s170, %s172
      %p176 = scmp.eq.s32.totalorder %s21, 0
      %p177 = por %p175, %p176
      %p178 = scmp.ne.s32.totalorder %s170, %s172
      %p179 = scmp.eq.s32.totalorder %s26, 1
      %p180 = por %p178, %p179
      %p181 = scmp.ne.s32.totalorder %s172, %s173
      %p182 = scmp.eq.s32.totalorder %s26, 0
      %p183 = por %p181, %p182
      %p184 = scmp.ne.s32.totalorder %s172, %s173
      %p185 = scmp.eq.s32.totalorder %s27, 1
      %p186 = por %p184, %p185
      %p188 = scmp.ne.s32.totalorder %s173, %s187
      %p189 = scmp.eq.s32.totalorder %s27, 0
      %p190 = por %p188, %p189
      %s192 = sadd.s32 %s191, 1
      %p195 = scmp.eq.s32.totalorder %s21, 1
      %p196 = scmp.ne.s32.totalorder %s191, %s193
      %p197 = scmp.eq.s32.totalorder %s21, 0
      %p198 = por %p196, %p197
      %p199 = scmp.ne.s32.totalorder %s191, %s193
      %p200 = scmp.eq.s32.totalorder %s26, 1
      %p201 = por %p199, %p200
      %p202 = scmp.ne.s32.totalorder %s193, %s194
      %p203 = scmp.eq.s32.totalorder %s26, 0
      %p204 = por %p202, %p203
      %p205 = scmp.ne.s32.totalorder %s193, %s194
      %p206 = scmp.eq.s32.totalorder %s27, 1
      %p207 = por %p205, %p206
      %p209 = scmp.ne.s32.totalorder %s194, %s208
      %p210 = scmp.eq.s32.totalorder %s27, 0
      %p211 = por %p209, %p210
      %s213 = sadd.s32 %s212, 1
      %p216 = scmp.eq.s32.totalorder %s21, 1
      %p217 = scmp.ne.s32.totalorder %s212, %s214
      %p218 = scmp.eq.s32.totalorder %s21, 0
      %p219 = por %p217, %p218
      %p220 = scmp.ne.s32.totalorder %s212, %s214
      %p221 = scmp.eq.s32.totalorder %s26, 1
      %p222 = por %p220, %p221
      %p223 = scmp.ne.s32.totalorder %s214, %s215
      %p224 = scmp.eq.s32.totalorder %s26, 0
      %p225 = por %p223, %p224
      %p226 = scmp.ne.s32.totalorder %s214, %s215
      %p227 = scmp.eq.s32.totalorder %s27, 1
      %p228 = por %p226, %p227
      %p230 = scmp.ne.s32.totalorder %s215, %s229
      %p231 = scmp.eq.s32.totalorder %s27, 0
      %p232 = por %p230, %p231
      %s234 = sadd.s32 %s233, 1
      %p237 = scmp.eq.s32.totalorder %s21, 1
      %p238 = scmp.ne.s32.totalorder %s233, %s235
      %p239 = scmp.eq.s32.totalorder %s21, 0
      %p240 = por %p238, %p239
      %p241 = scmp.ne.s32.totalorder %s233, %s235
      %p242 = scmp.eq.s32.totalorder %s26, 1
      %p243 = por %p241, %p242
      %p244 = scmp.ne.s32.totalorder %s235, %s236
      %p245 = scmp.eq.s32.totalorder %s26, 0
      %p246 = por %p244, %p245
      %p247 = scmp.ne.s32.totalorder %s235, %s236
      %p248 = scmp.eq.s32.totalorder %s27, 1
      %p249 = por %p247, %p248
      %p251 = scmp.ne.s32.totalorder %s236, %s250
      %p252 = scmp.eq.s32.totalorder %s27, 0
      %p253 = por %p251, %p252
      %s254 = ssub.s32 %s21, %s28
      %p255 = scmp.eq.s32.totalorder %s254, 0
      %s257 = sadd.s32 %s256, 1
      %s258 = scalar_select %p255, %s256, %s257
      %p261 = pneg %p255
      %p262 = scmp.eq.s32.totalorder %s21, 1
      %p263 = por %p261, %p262
      %p264 = scmp.ne.s32.totalorder %s256, %s259
      %p265 = scmp.eq.s32.totalorder %s21, 0
      %p266 = por %p264, %p265
      %p267 = scmp.ne.s32.totalorder %s256, %s259
      %p268 = scmp.eq.s32.totalorder %s26, 1
      %p269 = por %p267, %p268
      %p270 = scmp.ne.s32.totalorder %s259, %s260
      %p271 = scmp.eq.s32.totalorder %s26, 0
      %p272 = por %p270, %p271
      %p273 = scmp.ne.s32.totalorder %s259, %s260
      %p274 = scmp.eq.s32.totalorder %s27, 1
      %p275 = por %p273, %p274
      %p277 = scmp.ne.s32.totalorder %s260, %s276
      %p278 = scmp.eq.s32.totalorder %s27, 0
      %p279 = por %p277, %p278
      %p280 = scmp.le.s32.totalorder 1, %s21
      %p281 = scmp.lt.s32.totalorder %s21, 3
      %p282 = pnand %p280, %p281
      %p283 = pneg %p282
      // Predicated region
      $region9: #{tpu_custom_call.1} parent=5 // pred_check
        _
      $region10: #{tpu_custom_call.1} parent=5 // pred_check_branch
        %285 = sbr.rel (%p282) target = $region12
      $region11: #{tpu_custom_call.1} parent=5 // pred_region
        %s286 = ssub.s32 %s21, 1
        // Predicated region
        $region13: #{tpu_custom_call.1} parent=11 // pred_check
          %p287 = pneg %p120
        $region14: #{tpu_custom_call.1} parent=11 // pred_check_branch
          %289 = sbr.rel (%p287) target = $region16
        $region15: #{tpu_custom_call.1} parent=11 // pred_region
          _
        $region16: #{tpu_custom_call.1} parent=11 // pred_fallthru
          _
        // Predicated region
        $region17: #{tpu_custom_call.1} parent=11 // pred_check
          %p290 = pneg %p141
        $region18: #{tpu_custom_call.1} parent=11 // pred_check_branch
          %292 = sbr.rel (%p290) target = $region20
        $region19: #{tpu_custom_call.1} parent=11 // pred_region
          _
        $region20: #{tpu_custom_call.1} parent=11 // pred_fallthru
          _
        // Predicated region
        $region21: #{tpu_custom_call.1} parent=11 // pred_check
          %p293 = pneg %p162
        $region22: #{tpu_custom_call.1} parent=11 // pred_check_branch
          %295 = sbr.rel (%p293) target = $region24
        $region23: #{tpu_custom_call.1} parent=11 // pred_region
          _
        $region24: #{tpu_custom_call.1} parent=11 // pred_fallthru
          _
        // Predicated region
        $region25: #{tpu_custom_call.1} parent=11 // pred_check
          %p296 = pneg %p183
        $region26: #{tpu_custom_call.1} parent=11 // pred_check_branch
          %298 = sbr.rel (%p296) target = $region28
        $region27: #{tpu_custom_call.1} parent=11 // pred_region
          %s300 = ssub.s32 256, 256
          %301 = vsyncadd [#allocation5], %s300
          %s302 = sshll.u32 [#allocation4], 4
          %s303 = int_to_ptr.vmem [resolvable:$true] %s302
          %308 = dma.hbm_to_vmem [thread:$0]  %s6, 256, %s303, [#allocation5], 64, 64, 4
        $region28: #{tpu_custom_call.1} parent=11 // pred_fallthru
          _
        // Predicated region
        $region29: #{tpu_custom_call.1} parent=11 // pred_check
          %p309 = pneg %p204
        $region30: #{tpu_custom_call.1} parent=11 // pred_check_branch
          %311 = sbr.rel (%p309) target = $region32
        $region31: #{tpu_custom_call.1} parent=11 // pred_region
          _
        $region32: #{tpu_custom_call.1} parent=11 // pred_fallthru
          _
        // Predicated region
        $region33: #{tpu_custom_call.1} parent=11 // pred_check
          %p312 = pneg %p225
        $region34: #{tpu_custom_call.1} parent=11 // pred_check_branch
          %314 = sbr.rel (%p312) target = $region36
        $region35: #{tpu_custom_call.1} parent=11 // pred_region
          _
        $region36: #{tpu_custom_call.1} parent=11 // pred_fallthru
          _
        // Predicated region
        $region37: #{tpu_custom_call.1} parent=11 // pred_check
          %p315 = pneg %p246
        $region38: #{tpu_custom_call.1} parent=11 // pred_check_branch
          %317 = sbr.rel (%p315) target = $region40
        $region39: #{tpu_custom_call.1} parent=11 // pred_region
          _
        $region40: #{tpu_custom_call.1} parent=11 // pred_fallthru
          _
      $region12: #{tpu_custom_call.1} parent=5 // pred_fallthru
        _
      %p318 = scmp.lt.s32.totalorder %s21, 2
      // Predicated region
      $region41: #{tpu_custom_call.1} parent=5 // pred_check
        %p319 = pneg %p318
      $region42: #{tpu_custom_call.1} parent=5 // pred_check_branch
        %321 = sbr.rel (%p319) target = $region44
      $region43: #{tpu_custom_call.1} parent=5 // pred_region
        // Predicated region
        $region45: #{tpu_custom_call.1} parent=43 // pred_check
          %p322 = pneg %p41
        $region46: #{tpu_custom_call.1} parent=43 // pred_check_branch
          %324 = sbr.rel (%p322) target = $region48
        $region47: #{tpu_custom_call.1} parent=43 // pred_region
          %p325 = scmp.lt.s32.totalorder %s21, 1
          %s326 = scalar_select %p325, %s21, 1
          %s327 = smul.addr %s326, 8
          %s328 = scalar_lea.vmem %s0, %s327
        $region48: #{tpu_custom_call.1} parent=43 // pred_fallthru
          _
        // Predicated region
        $region49: #{tpu_custom_call.1} parent=43 // pred_check
          %p329 = pneg %p67
        $region50: #{tpu_custom_call.1} parent=43 // pred_check_branch
          %331 = sbr.rel (%p329) target = $region52
        $region51: #{tpu_custom_call.1} parent=43 // pred_region
          %p332 = scmp.lt.s32.totalorder %s21, 1
          %s333 = scalar_select %p332, %s21, 1
          %s334 = smul.addr %s333, 4
          %s335 = smul.addr %s334, 8
          %s336 = scalar_lea.vmem %s1, %s335
        $region52: #{tpu_custom_call.1} parent=43 // pred_fallthru
          _
        // Predicated region
        $region53: #{tpu_custom_call.1} parent=43 // pred_check
          %p337 = pneg %p93
        $region54: #{tpu_custom_call.1} parent=43 // pred_check_branch
          %339 = sbr.rel (%p337) target = $region56
        $region55: #{tpu_custom_call.1} parent=43 // pred_region
          %p340 = scmp.lt.s32.totalorder %s21, 1
          %s341 = scalar_select %p340, %s21, 1
          %s342 = smul.addr %s341, 2
          %s343 = scalar_lea.vmem %s2, %s342
        $region56: #{tpu_custom_call.1} parent=43 // pred_fallthru
          _
      $region44: #{tpu_custom_call.1} parent=5 // pred_fallthru
        _
      %p344 = scmp.le.s32.totalorder 1, %s21
      %p345 = scmp.lt.s32.totalorder %s21, 3
      %p346 = pnand %p344, %p345
      %p347 = pneg %p346
      // Predicated region
      $region57: #{tpu_custom_call.1} parent=5 // pred_check
        _
      $region58: #{tpu_custom_call.1} parent=5 // pred_check_branch
        %349 = sbr.rel (%p346) target = $region60
      $region59: #{tpu_custom_call.1} parent=5 // pred_region
        %s350 = ssub.s32 %s21, 1
        // Predicated region
        $region61: #{tpu_custom_call.1} parent=59 // pred_check
          %p351 = pneg %p183
        $region62: #{tpu_custom_call.1} parent=59 // pred_check_branch
          %353 = sbr.rel (%p351) target = $region64
        $region63: #{tpu_custom_call.1} parent=59 // pred_region
          %354 = dma.done [#allocation5], 256
        $region64: #{tpu_custom_call.1} parent=59 // pred_fallthru
          _
        %p355 = scmp.lt.s32.totalorder %s26, 1
        %s356 = scalar_select %p355, %s26, 1
        %s357 = smul.addr %s356, 8
        %s358 = scalar_lea.vmem %s0, %s357
        %p359 = pneg %p47
        %p360 = pneg %p44
        %p361 = scmp.lt.s32.totalorder %s26, 1
        %s362 = scalar_select %p361, %s26, 1
        %s363 = smul.addr %s362, 4
        %s364 = smul.addr %s363, 8
        %s365 = scalar_lea.vmem %s1, %s364
        %p366 = pneg %p73
        %p367 = pneg %p70
        %p368 = scmp.lt.s32.totalorder %s26, 1
        %s369 = scalar_select %p368, %s26, 1
        %s370 = smul.addr %s369, 2
        %s371 = scalar_lea.vmem %s2, %s370
        %p372 = pneg %p99
        %p373 = pneg %p96
        %p374 = pneg %p120
        %p375 = pneg %p117
        %p376 = pneg %p141
        %p377 = pneg %p138
        %p378 = pneg %p162
        %p379 = pneg %p159
        %p380 = pneg %p183
        %p381 = pneg %p180
        %p382 = pneg %p204
        %p383 = pneg %p201
        %p384 = pneg %p225
        %p385 = pneg %p222
        %p386 = pneg %p246
        %p387 = pneg %p243
        %p388 = pneg %p272
        %p389 = pneg %p269
        %s390 = sand.u32 %s259, 1
        %s391 = scalar_lea.sflag [#allocation6], %s390
        %s392 = sand.u32 %s259, 1
        %s393 = smul.addr %s392, 8
        %s394 = scalar_lea.vmem [#allocation7], %s393
        %p395 = scmp.lt.s32.totalorder %s26, 1
        %s396 = scalar_select %p395, %s26, 1
        %s397 = smul.addr %s396, 8
        %s398 = scalar_lea.vmem %s0, %s397
        %p399 = scmp.lt.s32.totalorder %s26, 1
        %s400 = scalar_select %p399, %s26, 1
        %s401 = smul.addr %s400, 4
        %s402 = smul.addr %s401, 8
        %s403 = scalar_lea.vmem %s1, %s402
        %p404 = scmp.lt.s32.totalorder %s26, 1
        %s405 = scalar_select %p404, %s26, 1
        %s406 = smul.addr %s405, 2
        %s407 = scalar_lea.vmem %s2, %s406
        %v409 = vld [vmem:[%s398] sm:$0xff]
        %vm410 = vcmask 261120
        %v411 = vsel %vm410, %v409, 0.0
        %412 = vadd.xlane.f32.xlu0 %v411
        %v413 = vpop.xlane.xlu0 %412
        %v414 = vrcp.pop 32.0
        %v415 = vmul.f32 %v413, %v414
        %v416 = vsub.f32 %v409, %v415
        %v417 = vmul.f32 %v416, %v416
        %v418 = vsel %vm410, %v417, 0.0
        %419 = vadd.xlane.f32.xlu0 %v418
        %v420 = vpop.xlane.xlu0 %419
        %v421 = vmul.f32 %v420, %v414
        %v422 = vadd.f32 %v421, 1e-05
        %v423 = vrsqrt.pop %v422
        %v424 = vmul.f32 %v416, %v423
        %v425 = vld [vmem:[%s3] sm:$0x1]
        %v427 = vlaneseq
        %v428 = vshrl.u32 %v427, 7
        %v429 = vsub.s32 0, %v428
        %v430 = vrot.slane %v425, %v429
        %v432 = vmul.f32 %v424, %v430
        %v433 = vld [vmem:[%s4] sm:$0x1]
        %v435 = vlaneseq
        %v436 = vshrl.u32 %v435, 7
        %v437 = vsub.s32 0, %v436
        %v438 = vrot.slane %v433, %v437
        %v440 = vadd.f32 %v432, %v438
        %v441 = vpack.c.bf16 %v440, %v440
        %v442 = vld [vmem:[%s5] sm:$0xf]
        %v443 = vld [vmem:[%s5 + $0x4] sm:$0xf]
        %v444 = vld [vmem:[%s5 + $0x8] sm:$0xf]
        %v445 = vld [vmem:[%s5 + $0xc] sm:$0xf]
        %v450 = vunpack.c.l.b16 %v442
        %v451 = vunpack.c.l.b16 %v443
        %v452 = vunpack.c.l.b16 %v444
        %v453 = vunpack.c.l.b16 %v445
        %v454 = vpack.c.b16 %v451, %v450
        %v455 = vpack.c.b16 %v453, %v452
        %v459 = vsel %vm410, %v441, 0
        %461 = vmatprep.subr.bf16.mxu0 0
        %462 = vmatpush1.bf16.msra.mxu0 0
        %463 = vmatprep.subr.bf16.mxu0 0
        %464 = vmatpush1.bf16.msra.mxu0 0
        %465 = vmatprep.subr.bf16.mxu0 0
        %466 = vmatpush1.bf16.msra.mxu0 0
        %467 = vmatprep.subr.bf16.mxu0 0
        %468 = vmatpush1.bf16.msra.mxu0 0
        %469 = vmatprep.subr.bf16.mxu0 0
        %470 = vmatpush1.bf16.msra.mxu0 0
        %471 = vmatprep.subr.bf16.mxu0 0
        %472 = vmatpush1.bf16.msra.mxu0 0
        %473 = vmatprep.subr.bf16.mxu0 0
        %474 = vmatpush1.bf16.msra.mxu0 %v455
        %475 = vmatprep.subr.bf16.mxu0 0
        %476 = vmatpush1.bf16.msra.mxu0 %v454
        %477 = vmatprep.subr.bf16.mxu0 0
        %478 = vmatpush2.bf16.msra.mxu0 0
        %479 = vmatprep.subr.bf16.mxu0 0
        %480 = vmatpush2.bf16.msra.mxu0 0
        %481 = vmatprep.subr.bf16.mxu0 0
        %482 = vmatpush2.bf16.msra.mxu0 0
        %483 = vmatprep.subr.bf16.mxu0 0
        %484 = vmatpush2.bf16.msra.mxu0 0
        %485 = vmatprep.subr.bf16.mxu0 0
        %486 = vmatpush2.bf16.msra.mxu0 0
        %487 = vmatprep.subr.bf16.mxu0 0
        %488 = vmatpush2.bf16.msra.mxu0 0
        %489 = vmatprep.subr.bf16.mxu0 0
        %490 = vmatpush2.bf16.msra.mxu0 0
        %491 = vmatprep.subr.bf16.mxu0 0
        %492 = vmatpush2.bf16.msra.mxu0 0
        %493 = vmatprep.mubr.bf16.mxu0 0
        %494 = vmatmul.mubr.bf16.gmra.mxu0 %v459
        %v495 = vpop.f32.mrf.mxu0
        %v496 = vadd.f32 0.0, %v495
        %v497 = vpop.f32.mrf.mxu0
        %v498 = vpop.f32.mrf.mxu0
        %v499 = vpop.f32.mrf.mxu0
        %500 = vdwg.mxu0
        %v501 = vmul.f32 %v496, 0.35355338
        %v502 = vpack.c.bf16 %v501, %v501
        %504 = vrot.lane.b32.xlu0 %v502, 120
        %v505 = vpop.permute.xlu0 %504
        %506 = vrot.lane.b32.xlu0 %v502, 112
        %v507 = vpop.permute.xlu0 %506
        %508 = vrot.lane.b32.xlu0 %v502, 104
        %v509 = vpop.permute.xlu0 %508
        %v510 = vld [vmem:[%s403] sm:$0xff]
        %v511 = vld [vmem:[%s403 + $0x8] sm:$0xff]
        %v512 = vld [vmem:[%s403 + $0x10] sm:$0xff]
        %v513 = vld [vmem:[%s403 + $0x18] sm:$0xff]
        %v514 = vpack.c.bf16 %v511, %v510
        %v515 = vpack.c.bf16 %v513, %v512
        %v516 = vld [vmem:[#allocation4] sm:$0xf]
        %v517 = vld [vmem:[#allocation4 + $0x4] sm:$0xf]
        %v518 = vld [vmem:[#allocation4 + $0x8] sm:$0xf]
        %v519 = vld [vmem:[#allocation4 + $0xc] sm:$0xf]
        %v524 = vunpack.c.l.b16 %v516
        %v525 = vunpack.c.l.b16 %v517
        %v526 = vunpack.c.l.b16 %v518
        %v527 = vunpack.c.l.b16 %v519
        %v528 = vpack.c.b16 %v525, %v524
        %v529 = vpack.c.b16 %v527, %v526
        %v533 = vsel %vm410, %v514, 0
        %v536 = vsel %vm410, %v515, 0
        %538 = vmatprep.subr.bf16.mxu0 0
        %539 = vmatpush1.bf16.msra.mxu0 0
        %540 = vmatprep.subr.bf16.mxu0 0
        %541 = vmatpush1.bf16.msra.mxu0 0
        %542 = vmatprep.subr.bf16.mxu0 0
        %543 = vmatpush1.bf16.msra.mxu0 0
        %544 = vmatprep.subr.bf16.mxu0 0
        %545 = vmatpush1.bf16.msra.mxu0 0
        %546 = vmatprep.subr.bf16.mxu0 0
        %547 = vmatpush1.bf16.msra.mxu0 0
        %548 = vmatprep.subr.bf16.mxu0 0
        %549 = vmatpush1.bf16.msra.mxu0 0
        %550 = vmatprep.subr.bf16.mxu0 0
        %551 = vmatpush1.bf16.msra.mxu0 %v529
        %552 = vmatprep.subr.bf16.mxu0 0
        %553 = vmatpush1.bf16.msra.mxu0 %v528
        %554 = vmatprep.subr.bf16.mxu0 0
        %555 = vmatpush2.bf16.msra.mxu0 0
        %556 = vmatprep.subr.bf16.mxu0 0
        %557 = vmatpush2.bf16.msra.mxu0 0
        %558 = vmatprep.subr.bf16.mxu0 0
        %559 = vmatpush2.bf16.msra.mxu0 0
        %560 = vmatprep.subr.bf16.mxu0 0
        %561 = vmatpush2.bf16.msra.mxu0 0
        %562 = vmatprep.subr.bf16.mxu0 0
        %563 = vmatpush2.bf16.msra.mxu0 0
        %564 = vmatprep.subr.bf16.mxu0 0
        %565 = vmatpush2.bf16.msra.mxu0 0
        %566 = vmatprep.subr.bf16.mxu0 0
        %567 = vmatpush2.bf16.msra.mxu0 0
        %568 = vmatprep.subr.bf16.mxu0 0
        %569 = vmatpush2.bf16.msra.mxu0 0
        %570 = vmatprep.mubr.bf16.mxu0 0
        %571 = vmatmul.mubr.bf16.gmra.mxu0 %v533
        %v572 = vpop.f32.mrf.mxu0
        %v573 = vadd.f32 0.0, %v572
        %v574 = vpop.f32.mrf.mxu0
        %v575 = vpop.f32.mrf.mxu0
        %v576 = vadd.f32 0.0, %v575
        %v577 = vpop.f32.mrf.mxu0
        %578 = vmatprep.mubr.bf16.mxu0 0
        %579 = vmatmul.mubr.bf16.gmra.mxu0 %v536
        %v580 = vpop.f32.mrf.mxu0
        %v581 = vadd.f32 0.0, %v580
        %v582 = vpop.f32.mrf.mxu0
        %v583 = vpop.f32.mrf.mxu0
        %v584 = vadd.f32 0.0, %v583
        %v585 = vpop.f32.mrf.mxu0
        %586 = vdwg.mxu0
        %v587 = vpack.c.bf16 %v576, %v573
        %v588 = vpack.c.bf16 %v584, %v581
        %591 = vrot.lane.b32.xlu0 %v587, 120
        %v592 = vpop.permute.xlu0 %591
        %593 = vrot.lane.b32.xlu0 %v588, 120
        %v594 = vpop.permute.xlu0 %593
        %597 = vrot.lane.b32.xlu0 %v587, 112
        %v598 = vpop.permute.xlu0 %597
        %599 = vrot.lane.b32.xlu0 %v588, 112
        %v600 = vpop.permute.xlu0 %599
        %603 = vrot.lane.b32.xlu0 %v587, 104
        %v604 = vpop.permute.xlu0 %603
        %605 = vrot.lane.b32.xlu0 %v588, 104
        %v606 = vpop.permute.xlu0 %605
        %609 = vrot.lane.b32.xlu0 %v587, 96
        %v610 = vpop.permute.xlu0 %609
        %611 = vrot.lane.b32.xlu0 %v588, 96
        %v612 = vpop.permute.xlu0 %611
        %613 = vrot.lane.b32.xlu0 %v592, 96
        %v614 = vpop.permute.xlu0 %613
        %615 = vrot.lane.b32.xlu0 %v594, 96
        %v616 = vpop.permute.xlu0 %615
        %617 = vrot.lane.b32.xlu0 %v598, 96
        %v618 = vpop.permute.xlu0 %617
        %619 = vrot.lane.b32.xlu0 %v600, 96
        %v620 = vpop.permute.xlu0 %619
        %621 = vrot.lane.b32.xlu0 %v604, 96
        %v622 = vpop.permute.xlu0 %621
        %623 = vrot.lane.b32.xlu0 %v606, 96
        %v624 = vpop.permute.xlu0 %623
        %v627 = vpack.i.b16 %v614, %v610
        %v629 = vshrl.u32 %v610, 16
        %v630 = vshrl.u32 %v614, 16
        %v631 = vpack.i.b16 %v630, %v629
        %v635 = vpack.i.b16 %v622, %v618
        %v637 = vshrl.u32 %v618, 16
        %v638 = vshrl.u32 %v622, 16
        %v639 = vpack.i.b16 %v638, %v637
        %v642 = vpack.i.b16 0, 0
        %v644 = vshrl.u32 0, 16
        %v645 = vpack.i.b16 %v644, %v644
        %v649 = vpack.i.b16 %v616, %v612
        %v651 = vshrl.u32 %v612, 16
        %v652 = vshrl.u32 %v616, 16
        %v653 = vpack.i.b16 %v652, %v651
        %v657 = vpack.i.b16 %v624, %v620
        %v659 = vshrl.u32 %v620, 16
        %v660 = vshrl.u32 %v624, 16
        %v661 = vpack.i.b16 %v660, %v659
        %v663 = vcombine.high %v627, %v642
        %v665 = vunpack.c.l.s4 1983009808
        %v666 = vunpack.c.0.s8 %v665
        %v667 = vlaneseq
        %v668 = vshrl.u32 %v667, 7
        %v669 = vsub.s32 %v666, %v668
        %v670 = vrot.slane %v627, %v669
        %v672 = vunpack.c.l.s4 1983009808
        %v673 = vunpack.c.0.s8 %v672
        %v674 = vlaneseq
        %v675 = vshrl.u32 %v674, 7
        %v676 = vsub.s32 %v673, %v675
        %v677 = vrot.slane %v663, %v676
        %v678 = vcombine.high %v635, %v642
        %v680 = vunpack.c.l.s4 1983009808
        %v681 = vunpack.c.0.s8 %v680
        %v682 = vlaneseq
        %v683 = vshrl.u32 %v682, 7
        %v684 = vsub.s32 %v681, %v683
        %v685 = vrot.slane %v635, %v684
        %v687 = vunpack.c.l.s4 1983009808
        %v688 = vunpack.c.0.s8 %v687
        %v689 = vlaneseq
        %v690 = vshrl.u32 %v689, 7
        %v691 = vsub.s32 %v688, %v690
        %v692 = vrot.slane %v678, %v691
        %v693 = vcombine.low %v670, %v685
        %v694 = vcombine.high %v670, %v685
        %v696 = vunpack.c.l.s4 1934713408
        %v697 = vunpack.c.0.s8 %v696
        %v698 = vlaneseq
        %v699 = vshrl.u32 %v698, 7
        %v700 = vsub.s32 %v697, %v699
        %v701 = vrot.slane %v693, %v700
        %v703 = vunpack.c.l.s4 1934713408
        %v704 = vunpack.c.0.s8 %v703
        %v705 = vlaneseq
        %v706 = vshrl.u32 %v705, 7
        %v707 = vsub.s32 %v704, %v706
        %v708 = vrot.slane %v694, %v707
        %v709 = vcombine.low %v677, %v692
        %v710 = vcombine.high %v677, %v692
        %v712 = vunpack.c.l.s4 1934713408
        %v713 = vunpack.c.0.s8 %v712
        %v714 = vlaneseq
        %v715 = vshrl.u32 %v714, 7
        %v716 = vsub.s32 %v713, %v715
        %v717 = vrot.slane %v709, %v716
        %v719 = vunpack.c.l.s4 1934713408
        %v720 = vunpack.c.0.s8 %v719
        %v721 = vlaneseq
        %v722 = vshrl.u32 %v721, 7
        %v723 = vsub.s32 %v720, %v722
        %v724 = vrot.slane %v710, %v723
        %v725 = vcombine.high %v701, 0
        %v726 = vcombine.high %v708, 0
        %v727 = vcombine.high %v717, 0
        %v728 = vcombine.high %v724, 0
        %v729 = vcombine.high %v631, %v645
        %v731 = vunpack.c.l.s4 1983009808
        %v732 = vunpack.c.0.s8 %v731
        %v733 = vlaneseq
        %v734 = vshrl.u32 %v733, 7
        %v735 = vsub.s32 %v732, %v734
        %v736 = vrot.slane %v631, %v735
        %v738 = vunpack.c.l.s4 1983009808
        %v739 = vunpack.c.0.s8 %v738
        %v740 = vlaneseq
        %v741 = vshrl.u32 %v740, 7
        %v742 = vsub.s32 %v739, %v741
        %v743 = vrot.slane %v729, %v742
        %v744 = vcombine.high %v639, %v645
        %v746 = vunpack.c.l.s4 1983009808
        %v747 = vunpack.c.0.s8 %v746
        %v748 = vlaneseq
        %v749 = vshrl.u32 %v748, 7
        %v750 = vsub.s32 %v747, %v749
        %v751 = vrot.slane %v639, %v750
        %v753 = vunpack.c.l.s4 1983009808
        %v754 = vunpack.c.0.s8 %v753
        %v755 = vlaneseq
        %v756 = vshrl.u32 %v755, 7
        %v757 = vsub.s32 %v754, %v756
        %v758 = vrot.slane %v744, %v757
        %v759 = vcombine.low %v736, %v751
        %v760 = vcombine.high %v736, %v751
        %v762 = vunpack.c.l.s4 1934713408
        %v763 = vunpack.c.0.s8 %v762
        %v764 = vlaneseq
        %v765 = vshrl.u32 %v764, 7
        %v766 = vsub.s32 %v763, %v765
        %v767 = vrot.slane %v759, %v766
        %v769 = vunpack.c.l.s4 1934713408
        %v770 = vunpack.c.0.s8 %v769
        %v771 = vlaneseq
        %v772 = vshrl.u32 %v771, 7
        %v773 = vsub.s32 %v770, %v772
        %v774 = vrot.slane %v760, %v773
        %v775 = vcombine.low %v743, %v758
        %v776 = vcombine.high %v743, %v758
        %v778 = vunpack.c.l.s4 1934713408
        %v779 = vunpack.c.0.s8 %v778
        %v780 = vlaneseq
        %v781 = vshrl.u32 %v780, 7
        %v782 = vsub.s32 %v779, %v781
        %v783 = vrot.slane %v775, %v782
        %v785 = vunpack.c.l.s4 1934713408
        %v786 = vunpack.c.0.s8 %v785
        %v787 = vlaneseq
        %v788 = vshrl.u32 %v787, 7
        %v789 = vsub.s32 %v786, %v788
        %v790 = vrot.slane %v776, %v789
        %v791 = vcombine.high %v767, 0
        %v792 = vcombine.high %v774, 0
        %v793 = vcombine.high %v783, 0
        %v794 = vcombine.high %v790, 0
        %v795 = vcombine.high %v649, %v642
        %v797 = vunpack.c.l.s4 1983009808
        %v798 = vunpack.c.0.s8 %v797
        %v799 = vlaneseq
        %v800 = vshrl.u32 %v799, 7
        %v801 = vsub.s32 %v798, %v800
        %v802 = vrot.slane %v649, %v801
        %v804 = vunpack.c.l.s4 1983009808
        %v805 = vunpack.c.0.s8 %v804
        %v806 = vlaneseq
        %v807 = vshrl.u32 %v806, 7
        %v808 = vsub.s32 %v805, %v807
        %v809 = vrot.slane %v795, %v808
        %v810 = vcombine.high %v657, %v642
        %v812 = vunpack.c.l.s4 1983009808
        %v813 = vunpack.c.0.s8 %v812
        %v814 = vlaneseq
        %v815 = vshrl.u32 %v814, 7
        %v816 = vsub.s32 %v813, %v815
        %v817 = vrot.slane %v657, %v816
        %v819 = vunpack.c.l.s4 1983009808
        %v820 = vunpack.c.0.s8 %v819
        %v821 = vlaneseq
        %v822 = vshrl.u32 %v821, 7
        %v823 = vsub.s32 %v820, %v822
        %v824 = vrot.slane %v810, %v823
        %v825 = vcombine.low %v802, %v817
        %v826 = vcombine.high %v802, %v817
        %v828 = vunpack.c.l.s4 1934713408
        %v829 = vunpack.c.0.s8 %v828
        %v830 = vlaneseq
        %v831 = vshrl.u32 %v830, 7
        %v832 = vsub.s32 %v829, %v831
        %v833 = vrot.slane %v825, %v832
        %v835 = vunpack.c.l.s4 1934713408
        %v836 = vunpack.c.0.s8 %v835
        %v837 = vlaneseq
        %v838 = vshrl.u32 %v837, 7
        %v839 = vsub.s32 %v836, %v838
        %v840 = vrot.slane %v826, %v839
        %v841 = vcombine.low %v809, %v824
        %v842 = vcombine.high %v809, %v824
        %v844 = vunpack.c.l.s4 1934713408
        %v845 = vunpack.c.0.s8 %v844
        %v846 = vlaneseq
        %v847 = vshrl.u32 %v846, 7
        %v848 = vsub.s32 %v845, %v847
        %v849 = vrot.slane %v841, %v848
        %v851 = vunpack.c.l.s4 1934713408
        %v852 = vunpack.c.0.s8 %v851
        %v853 = vlaneseq
        %v854 = vshrl.u32 %v853, 7
        %v855 = vsub.s32 %v852, %v854
        %v856 = vrot.slane %v842, %v855
        %v857 = vcombine.high %v833, 0
        %v858 = vcombine.high %v840, 0
        %v859 = vcombine.high %v849, 0
        %v860 = vcombine.high %v856, 0
        %v861 = vcombine.high %v653, %v645
        %v863 = vunpack.c.l.s4 1983009808
        %v864 = vunpack.c.0.s8 %v863
        %v865 = vlaneseq
        %v866 = vshrl.u32 %v865, 7
        %v867 = vsub.s32 %v864, %v866
        %v868 = vrot.slane %v653, %v867
        %v870 = vunpack.c.l.s4 1983009808
        %v871 = vunpack.c.0.s8 %v870
        %v872 = vlaneseq
        %v873 = vshrl.u32 %v872, 7
        %v874 = vsub.s32 %v871, %v873
        %v875 = vrot.slane %v861, %v874
        %v876 = vcombine.high %v661, %v645
        %v878 = vunpack.c.l.s4 1983009808
        %v879 = vunpack.c.0.s8 %v878
        %v880 = vlaneseq
        %v881 = vshrl.u32 %v880, 7
        %v882 = vsub.s32 %v879, %v881
        %v883 = vrot.slane %v661, %v882
        %v885 = vunpack.c.l.s4 1983009808
        %v886 = vunpack.c.0.s8 %v885
        %v887 = vlaneseq
        %v888 = vshrl.u32 %v887, 7
        %v889 = vsub.s32 %v886, %v888
        %v890 = vrot.slane %v876, %v889
        %v891 = vcombine.low %v868, %v883
        %v892 = vcombine.high %v868, %v883
        %v894 = vunpack.c.l.s4 1934713408
        %v895 = vunpack.c.0.s8 %v894
        %v896 = vlaneseq
        %v897 = vshrl.u32 %v896, 7
        %v898 = vsub.s32 %v895, %v897
        %v899 = vrot.slane %v891, %v898
        %v901 = vunpack.c.l.s4 1934713408
        %v902 = vunpack.c.0.s8 %v901
        %v903 = vlaneseq
        %v904 = vshrl.u32 %v903, 7
        %v905 = vsub.s32 %v902, %v904
        %v906 = vrot.slane %v892, %v905
        %v907 = vcombine.low %v875, %v890
        %v908 = vcombine.high %v875, %v890
        %v910 = vunpack.c.l.s4 1934713408
        %v911 = vunpack.c.0.s8 %v910
        %v912 = vlaneseq
        %v913 = vshrl.u32 %v912, 7
        %v914 = vsub.s32 %v911, %v913
        %v915 = vrot.slane %v907, %v914
        %v917 = vunpack.c.l.s4 1934713408
        %v918 = vunpack.c.0.s8 %v917
        %v919 = vlaneseq
        %v920 = vshrl.u32 %v919, 7
        %v921 = vsub.s32 %v918, %v920
        %v922 = vrot.slane %v908, %v921
        %v923 = vcombine.high %v899, 0
        %v924 = vcombine.high %v906, 0
        %v925 = vcombine.high %v915, 0
        %v926 = vcombine.high %v922, 0
        %927 = vxpose.xlu0.c.b16.start [1/8] %v587, 128
        %928 = vxpose.xlu0.c.b16.cont [2/8] %v588, 128
        %929 = vxpose.xlu0.c.b16.cont [3/8] 0, 128
        %930 = vxpose.xlu0.c.b16.cont [4/8] 0, 128
        %931 = vxpose.xlu0.c.b16.cont [5/8] 0, 128
        %932 = vxpose.xlu0.c.b16.cont [6/8] 0, 128
        %933 = vxpose.xlu0.c.b16.cont [7/8] 0, 128
        %934 = vxpose.xlu0.c.b16.end [8/8] 0, 128
        %v935 = vpop.trf.xlu0
        %v936 = vpop.trf.xlu0
        %v937 = vpop.trf.xlu0
        %v938 = vpop.trf.xlu0
        %v939 = vpop.trf.xlu0
        %v940 = vpop.trf.xlu0
        %v941 = vpop.trf.xlu0
        %v942 = vpop.trf.xlu0
        %943 = vxpose.xlu0.c.b16.start [1/8] %v592, 128
        %944 = vxpose.xlu0.c.b16.cont [2/8] %v594, 128
        %945 = vxpose.xlu0.c.b16.cont [3/8] 0, 128
        %946 = vxpose.xlu0.c.b16.cont [4/8] 0, 128
        %947 = vxpose.xlu0.c.b16.cont [5/8] 0, 128
        %948 = vxpose.xlu0.c.b16.cont [6/8] 0, 128
        %949 = vxpose.xlu0.c.b16.cont [7/8] 0, 128
        %950 = vxpose.xlu0.c.b16.end [8/8] 0, 128
        %v951 = vpop.trf.xlu0
        %v952 = vpop.trf.xlu0
        %v953 = vpop.trf.xlu0
        %v954 = vpop.trf.xlu0
        %v955 = vpop.trf.xlu0
        %v956 = vpop.trf.xlu0
        %v957 = vpop.trf.xlu0
        %v958 = vpop.trf.xlu0
        %959 = vxpose.xlu0.c.b16.start [1/8] %v598, 128
        %960 = vxpose.xlu0.c.b16.cont [2/8] %v600, 128
        %961 = vxpose.xlu0.c.b16.cont [3/8] 0, 128
        %962 = vxpose.xlu0.c.b16.cont [4/8] 0, 128
        %963 = vxpose.xlu0.c.b16.cont [5/8] 0, 128
        %964 = vxpose.xlu0.c.b16.cont [6/8] 0, 128
        %965 = vxpose.xlu0.c.b16.cont [7/8] 0, 128
        %966 = vxpose.xlu0.c.b16.end [8/8] 0, 128
        %v967 = vpop.trf.xlu0
        %v968 = vpop.trf.xlu0
        %v969 = vpop.trf.xlu0
        %v970 = vpop.trf.xlu0
        %v971 = vpop.trf.xlu0
        %v972 = vpop.trf.xlu0
        %v973 = vpop.trf.xlu0
        %v974 = vpop.trf.xlu0
        %975 = vxpose.xlu0.c.b16.start [1/8] %v604, 128
        %976 = vxpose.xlu0.c.b16.cont [2/8] %v606, 128
        %977 = vxpose.xlu0.c.b16.cont [3/8] 0, 128
        %978 = vxpose.xlu0.c.b16.cont [4/8] 0, 128
        %979 = vxpose.xlu0.c.b16.cont [5/8] 0, 128
        %980 = vxpose.xlu0.c.b16.cont [6/8] 0, 128
        %981 = vxpose.xlu0.c.b16.cont [7/8] 0, 128
        %982 = vxpose.xlu0.c.b16.end [8/8] 0, 128
        %v983 = vpop.trf.xlu0
        %v984 = vpop.trf.xlu0
        %v985 = vpop.trf.xlu0
        %v986 = vpop.trf.xlu0
        %v987 = vpop.trf.xlu0
        %v988 = vpop.trf.xlu0
        %v989 = vpop.trf.xlu0
        %v990 = vpop.trf.xlu0
        %vm991 = vcmask 64512
        %v993 = vsel %vm991, %v502, 0
        %vm995 = vcmask 1043456
        %v997 = vsel %vm995, %v935, 0
        %999 = vmatprep.subr.bf16.mxu0 0
        %1000 = vmatpush1.bf16.msra.mxu0 0
        %1001 = vmatprep.subr.bf16.mxu0 0
        %1002 = vmatpush1.bf16.msra.mxu0 0
        %1003 = vmatprep.subr.bf16.mxu0 0
        %1004 = vmatpush1.bf16.msra.mxu0 0
        %1005 = vmatprep.subr.bf16.mxu0 0
        %1006 = vmatpush1.bf16.msra.mxu0 0
        %1007 = vmatprep.subr.bf16.mxu0 0
        %1008 = vmatpush1.bf16.msra.mxu0 0
        %1009 = vmatprep.subr.bf16.mxu0 0
        %1010 = vmatpush1.bf16.msra.mxu0 0
        %1011 = vmatprep.subr.bf16.mxu0 0
        %1012 = vmatpush1.bf16.msra.mxu0 0
        %1013 = vmatprep.subr.bf16.mxu0 0
        %1014 = vmatpush1.bf16.msra.mxu0 %v997
        %1015 = vmatprep.subr.bf16.mxu0 0
        %1016 = vmatpush2.bf16.msra.mxu0 0
        %1017 = vmatprep.subr.bf16.mxu0 0
        %1018 = vmatpush2.bf16.msra.mxu0 0
        %1019 = vmatprep.subr.bf16.mxu0 0
        %1020 = vmatpush2.bf16.msra.mxu0 0
        %1021 = vmatprep.subr.bf16.mxu0 0
        %1022 = vmatpush2.bf16.msra.mxu0 0
        %1023 = vmatprep.subr.bf16.mxu0 0
        %1024 = vmatpush2.bf16.msra.mxu0 0
        %1025 = vmatprep.subr.bf16.mxu0 0
        %1026 = vmatpush2.bf16.msra.mxu0 0
        %1027 = vmatprep.subr.bf16.mxu0 0
        %1028 = vmatpush2.bf16.msra.mxu0 0
        %1029 = vmatprep.subr.bf16.mxu0 0
        %1030 = vmatpush2.bf16.msra.mxu0 0
        %1031 = vmatprep.mubr.bf16.mxu0 0
        %1032 = vmatmul.mubr.bf16.gmra.mxu0 %v993
        %v1033 = vpop.f32.mrf.mxu0
        %v1034 = vadd.f32 0.0, %v1033
        %v1035 = vpop.f32.mrf.mxu0
        %v1036 = vpop.f32.mrf.mxu0
        %v1037 = vpop.f32.mrf.mxu0
        %1038 = vdwg.mxu0
        %v1040 = vsel %vm991, %v505, 0
        %v1043 = vsel %vm995, %v951, 0
        %1045 = vmatprep.subr.bf16.mxu0 0
        %1046 = vmatpush1.bf16.msra.mxu0 0
        %1047 = vmatprep.subr.bf16.mxu0 0
        %1048 = vmatpush1.bf16.msra.mxu0 0
        %1049 = vmatprep.subr.bf16.mxu0 0
        %1050 = vmatpush1.bf16.msra.mxu0 0
        %1051 = vmatprep.subr.bf16.mxu0 0
        %1052 = vmatpush1.bf16.msra.mxu0 0
        %1053 = vmatprep.subr.bf16.mxu0 0
        %1054 = vmatpush1.bf16.msra.mxu0 0
        %1055 = vmatprep.subr.bf16.mxu0 0
        %1056 = vmatpush1.bf16.msra.mxu0 0
        %1057 = vmatprep.subr.bf16.mxu0 0
        %1058 = vmatpush1.bf16.msra.mxu0 0
        %1059 = vmatprep.subr.bf16.mxu0 0
        %1060 = vmatpush1.bf16.msra.mxu0 %v1043
        %1061 = vmatprep.subr.bf16.mxu0 0
        %1062 = vmatpush2.bf16.msra.mxu0 0
        %1063 = vmatprep.subr.bf16.mxu0 0
        %1064 = vmatpush2.bf16.msra.mxu0 0
        %1065 = vmatprep.subr.bf16.mxu0 0
        %1066 = vmatpush2.bf16.msra.mxu0 0
        %1067 = vmatprep.subr.bf16.mxu0 0
        %1068 = vmatpush2.bf16.msra.mxu0 0
        %1069 = vmatprep.subr.bf16.mxu0 0
        %1070 = vmatpush2.bf16.msra.mxu0 0
        %1071 = vmatprep.subr.bf16.mxu0 0
        %1072 = vmatpush2.bf16.msra.mxu0 0
        %1073 = vmatprep.subr.bf16.mxu0 0
        %1074 = vmatpush2.bf16.msra.mxu0 0
        %1075 = vmatprep.subr.bf16.mxu0 0
        %1076 = vmatpush2.bf16.msra.mxu0 0
        %1077 = vmatprep.mubr.bf16.mxu0 0
        %1078 = vmatmul.mubr.bf16.gmra.mxu0 %v1040
        %v1079 = vpop.f32.mrf.mxu0
        %v1080 = vadd.f32 0.0, %v1079
        %v1081 = vpop.f32.mrf.mxu0
        %v1082 = vpop.f32.mrf.mxu0
        %v1083 = vpop.f32.mrf.mxu0
        %1084 = vdwg.mxu0
        %v1086 = vsel %vm991, %v507, 0
        %v1089 = vsel %vm995, %v967, 0
        %1091 = vmatprep.subr.bf16.mxu0 0
        %1092 = vmatpush1.bf16.msra.mxu0 0
        %1093 = vmatprep.subr.bf16.mxu0 0
        %1094 = vmatpush1.bf16.msra.mxu0 0
        %1095 = vmatprep.subr.bf16.mxu0 0
        %1096 = vmatpush1.bf16.msra.mxu0 0
        %1097 = vmatprep.subr.bf16.mxu0 0
        %1098 = vmatpush1.bf16.msra.mxu0 0
        %1099 = vmatprep.subr.bf16.mxu0 0
        %1100 = vmatpush1.bf16.msra.mxu0 0
        %1101 = vmatprep.subr.bf16.mxu0 0
        %1102 = vmatpush1.bf16.msra.mxu0 0
        %1103 = vmatprep.subr.bf16.mxu0 0
        %1104 = vmatpush1.bf16.msra.mxu0 0
        %1105 = vmatprep.subr.bf16.mxu0 0
        %1106 = vmatpush1.bf16.msra.mxu0 %v1089
        %1107 = vmatprep.subr.bf16.mxu0 0
        %1108 = vmatpush2.bf16.msra.mxu0 0
        %1109 = vmatprep.subr.bf16.mxu0 0
        %1110 = vmatpush2.bf16.msra.mxu0 0
        %1111 = vmatprep.subr.bf16.mxu0 0
        %1112 = vmatpush2.bf16.msra.mxu0 0
        %1113 = vmatprep.subr.bf16.mxu0 0
        %1114 = vmatpush2.bf16.msra.mxu0 0
        %1115 = vmatprep.subr.bf16.mxu0 0
        %1116 = vmatpush2.bf16.msra.mxu0 0
        %1117 = vmatprep.subr.bf16.mxu0 0
        %1118 = vmatpush2.bf16.msra.mxu0 0
        %1119 = vmatprep.subr.bf16.mxu0 0
        %1120 = vmatpush2.bf16.msra.mxu0 0
        %1121 = vmatprep.subr.bf16.mxu0 0
        %1122 = vmatpush2.bf16.msra.mxu0 0
        %1123 = vmatprep.mubr.bf16.mxu0 0
        %1124 = vmatmul.mubr.bf16.gmra.mxu0 %v1086
        %v1125 = vpop.f32.mrf.mxu0
        %v1126 = vadd.f32 0.0, %v1125
        %v1127 = vpop.f32.mrf.mxu0
        %v1128 = vpop.f32.mrf.mxu0
        %v1129 = vpop.f32.mrf.mxu0
        %1130 = vdwg.mxu0
        %v1132 = vsel %vm991, %v509, 0
        %v1135 = vsel %vm995, %v983, 0
        %1137 = vmatprep.subr.bf16.mxu0 0
        %1138 = vmatpush1.bf16.msra.mxu0 0
        %1139 = vmatprep.subr.bf16.mxu0 0
        %1140 = vmatpush1.bf16.msra.mxu0 0
        %1141 = vmatprep.subr.bf16.mxu0 0
        %1142 = vmatpush1.bf16.msra.mxu0 0
        %1143 = vmatprep.subr.bf16.mxu0 0
        %1144 = vmatpush1.bf16.msra.mxu0 0
        %1145 = vmatprep.subr.bf16.mxu0 0
        %1146 = vmatpush1.bf16.msra.mxu0 0
        %1147 = vmatprep.subr.bf16.mxu0 0
        %1148 = vmatpush1.bf16.msra.mxu0 0
        %1149 = vmatprep.subr.bf16.mxu0 0
        %1150 = vmatpush1.bf16.msra.mxu0 0
        %1151 = vmatprep.subr.bf16.mxu0 0
        %1152 = vmatpush1.bf16.msra.mxu0 %v1135
        %1153 = vmatprep.subr.bf16.mxu0 0
        %1154 = vmatpush2.bf16.msra.mxu0 0
        %1155 = vmatprep.subr.bf16.mxu0 0
        %1156 = vmatpush2.bf16.msra.mxu0 0
        %1157 = vmatprep.subr.bf16.mxu0 0
        %1158 = vmatpush2.bf16.msra.mxu0 0
        %1159 = vmatprep.subr.bf16.mxu0 0
        %1160 = vmatpush2.bf16.msra.mxu0 0
        %1161 = vmatprep.subr.bf16.mxu0 0
        %1162 = vmatpush2.bf16.msra.mxu0 0
        %1163 = vmatprep.subr.bf16.mxu0 0
        %1164 = vmatpush2.bf16.msra.mxu0 0
        %1165 = vmatprep.subr.bf16.mxu0 0
        %1166 = vmatpush2.bf16.msra.mxu0 0
        %1167 = vmatprep.subr.bf16.mxu0 0
        %1168 = vmatpush2.bf16.msra.mxu0 0
        %1169 = vmatprep.mubr.bf16.mxu0 0
        %1170 = vmatmul.mubr.bf16.gmra.mxu0 %v1132
        %v1171 = vpop.f32.mrf.mxu0
        %v1172 = vadd.f32 0.0, %v1171
        %v1173 = vpop.f32.mrf.mxu0
        %v1174 = vpop.f32.mrf.mxu0
        %v1175 = vpop.f32.mrf.mxu0
        %1176 = vdwg.mxu0
        %v1177 = vld [vmem:[%s407] sm:$0x3]
        %v1178 = vsub.f32 1.0, %v1177
        %v1179 = vmul.f32 %v1178, -3.4028235e+38
        %1180 = vst [vmem:[#allocation2] sm:$0xff] 0.0
        %1181 = vst [vmem:[#allocation2 + $0x8] sm:$0xff] 0.0
        %v1182 = vlaneseq
        %v1183 = vshrl.u32 %v1182, 7
        %v1184 = vsub.s32 0, %v1183
        %v1185 = vrot.slane %v1179, %v1184
        %v1186 = vadd.f32 %v1034, %v1185
        %v1187 = vadd.f32 %v1080, %v1185
        %v1188 = vadd.f32 %v1126, %v1185
        %v1189 = vadd.f32 %v1172, %v1185
        %vm1190 = vcmask 130048
        %v1191 = vsel %vm1190, %v1186, -inf
        %1192 = vmax.xlane.f32.xlu0 %v1191
        %v1193 = vpop.xlane.xlu0 %1192
        %v1194 = vsel %vm1190, %v1187, -inf
        %1195 = vmax.xlane.f32.xlu0 %v1194
        %v1196 = vpop.xlane.xlu0 %1195
        %v1197 = vsel %vm1190, %v1188, -inf
        %1198 = vmax.xlane.f32.xlu0 %v1197
        %v1199 = vpop.xlane.xlu0 %1198
        %v1200 = vsel %vm1190, %v1189, -inf
        %1201 = vmax.xlane.f32.xlu0 %v1200
        %v1202 = vpop.xlane.xlu0 %1201
        %v1203 = vsub.f32 %v1186, %v1193
        %v1204 = vsub.f32 %v1187, %v1196
        %v1205 = vsub.f32 %v1188, %v1199
        %v1206 = vsub.f32 %v1189, %v1202
        %v1207 = vmul.f32 %v1203, 1.442695
        %v1208 = vpow.pop %v1207
        %v1209 = vmul.f32 %v1204, 1.442695
        %v1210 = vpow.pop %v1209
        %v1211 = vmul.f32 %v1205, 1.442695
        %v1212 = vpow.pop %v1211
        %v1213 = vmul.f32 %v1206, 1.442695
        %v1214 = vpow.pop %v1213
        %v1215 = vsel %vm1190, %v1208, 0.0
        %1216 = vadd.xlane.f32.xlu0 %v1215
        %v1217 = vpop.xlane.xlu0 %1216
        %v1218 = vsel %vm1190, %v1210, 0.0
        %1219 = vadd.xlane.f32.xlu0 %v1218
        %v1220 = vpop.xlane.xlu0 %1219
        %v1221 = vsel %vm1190, %v1212, 0.0
        %1222 = vadd.xlane.f32.xlu0 %v1221
        %v1223 = vpop.xlane.xlu0 %1222
        %v1224 = vsel %vm1190, %v1214, 0.0
        %1225 = vadd.xlane.f32.xlu0 %v1224
        %v1226 = vpop.xlane.xlu0 %1225
        %v1227 = vrcp.pop %v1217
        %v1228 = vrcp.pop %v1220
        %v1229 = vrcp.pop %v1223
        %v1230 = vrcp.pop %v1226
        %v1231 = vmul.f32 %v1208, %v1227
        %v1232 = vmul.f32 %v1210, %v1228
        %v1233 = vmul.f32 %v1212, %v1229
        %v1234 = vmul.f32 %v1214, %v1230
        %v1235 = vpack.c.bf16 %v1231, %v1231
        %v1236 = vpack.c.bf16 %v1232, %v1232
        %v1237 = vpack.c.bf16 %v1233, %v1233
        %v1238 = vpack.c.bf16 %v1234, %v1234
        %1239 = vxpose.xlu0.c.b16.start [1/8] %v701, 128
        %1240 = vxpose.xlu0.c.b16.cont [2/8] 0, 128
        %1241 = vxpose.xlu0.c.b16.cont [3/8] 0, 128
        %1242 = vxpose.xlu0.c.b16.cont [4/8] 0, 128
        %1243 = vxpose.xlu0.c.b16.cont [5/8] 0, 128
        %1244 = vxpose.xlu0.c.b16.cont [6/8] 0, 128
        %1245 = vxpose.xlu0.c.b16.cont [7/8] 0, 128
        %1246 = vxpose.xlu0.c.b16.end [8/8] 0, 128
        %v1247 = vpop.trf.xlu0
        %v1248 = vpop.trf.xlu0
        %v1249 = vpop.trf.xlu0
        %v1250 = vpop.trf.xlu0
        %v1251 = vpop.trf.xlu0
        %v1252 = vpop.trf.xlu0
        %v1253 = vpop.trf.xlu0
        %v1254 = vpop.trf.xlu0
        %1255 = vxpose.xlu0.c.b16.start [1/8] %v767, 128
        %1256 = vxpose.xlu0.c.b16.cont [2/8] 0, 128
        %1257 = vxpose.xlu0.c.b16.cont [3/8] 0, 128
        %1258 = vxpose.xlu0.c.b16.cont [4/8] 0, 128
        %1259 = vxpose.xlu0.c.b16.cont [5/8] 0, 128
        %1260 = vxpose.xlu0.c.b16.cont [6/8] 0, 128
        %1261 = vxpose.xlu0.c.b16.cont [7/8] 0, 128
        %1262 = vxpose.xlu0.c.b16.end [8/8] 0, 128
        %v1263 = vpop.trf.xlu0
        %v1264 = vpop.trf.xlu0
        %v1265 = vpop.trf.xlu0
        %v1266 = vpop.trf.xlu0
        %v1267 = vpop.trf.xlu0
        %v1268 = vpop.trf.xlu0
        %v1269 = vpop.trf.xlu0
        %v1270 = vpop.trf.xlu0
        %1271 = vxpose.xlu0.c.b16.start [1/8] %v725, 128
        %1272 = vxpose.xlu0.c.b16.cont [2/8] 0, 128
        %1273 = vxpose.xlu0.c.b16.cont [3/8] 0, 128
        %1274 = vxpose.xlu0.c.b16.cont [4/8] 0, 128
        %1275 = vxpose.xlu0.c.b16.cont [5/8] 0, 128
        %1276 = vxpose.xlu0.c.b16.cont [6/8] 0, 128
        %1277 = vxpose.xlu0.c.b16.cont [7/8] 0, 128
        %1278 = vxpose.xlu0.c.b16.end [8/8] 0, 128
        %v1279 = vpop.trf.xlu0
        %v1280 = vpop.trf.xlu0
        %v1281 = vpop.trf.xlu0
        %v1282 = vpop.trf.xlu0
        %v1283 = vpop.trf.xlu0
        %v1284 = vpop.trf.xlu0
        %v1285 = vpop.trf.xlu0
        %v1286 = vpop.trf.xlu0
        %1287 = vxpose.xlu0.c.b16.start [1/8] %v791, 128
        %1288 = vxpose.xlu0.c.b16.cont [2/8] 0, 128
        %1289 = vxpose.xlu0.c.b16.cont [3/8] 0, 128
        %1290 = vxpose.xlu0.c.b16.cont [4/8] 0, 128
        %1291 = vxpose.xlu0.c.b16.cont [5/8] 0, 128
        %1292 = vxpose.xlu0.c.b16.cont [6/8] 0, 128
        %1293 = vxpose.xlu0.c.b16.cont [7/8] 0, 128
        %1294 = vxpose.xlu0.c.b16.end [8/8] 0, 128
        %v1295 = vpop.trf.xlu0
        %v1296 = vpop.trf.xlu0
        %v1297 = vpop.trf.xlu0
        %v1298 = vpop.trf.xlu0
        %v1299 = vpop.trf.xlu0
        %v1300 = vpop.trf.xlu0
        %v1301 = vpop.trf.xlu0
        %v1302 = vpop.trf.xlu0
        %1303 = vxpose.xlu0.c.b16.start [1/8] %v708, 128
        %1304 = vxpose.xlu0.c.b16.cont [2/8] 0, 128
        %1305 = vxpose.xlu0.c.b16.cont [3/8] 0, 128
        %1306 = vxpose.xlu0.c.b16.cont [4/8] 0, 128
        %1307 = vxpose.xlu0.c.b16.cont [5/8] 0, 128
        %1308 = vxpose.xlu0.c.b16.cont [6/8] 0, 128
        %1309 = vxpose.xlu0.c.b16.cont [7/8] 0, 128
        %1310 = vxpose.xlu0.c.b16.end [8/8] 0, 128
        %v1311 = vpop.trf.xlu0
        %v1312 = vpop.trf.xlu0
        %v1313 = vpop.trf.xlu0
        %v1314 = vpop.trf.xlu0
        %v1315 = vpop.trf.xlu0
        %v1316 = vpop.trf.xlu0
        %v1317 = vpop.trf.xlu0
        %v1318 = vpop.trf.xlu0
        %1319 = vxpose.xlu0.c.b16.start [1/8] %v774, 128
        %1320 = vxpose.xlu0.c.b16.cont [2/8] 0, 128
        %1321 = vxpose.xlu0.c.b16.cont [3/8] 0, 128
        %1322 = vxpose.xlu0.c.b16.cont [4/8] 0, 128
        %1323 = vxpose.xlu0.c.b16.cont [5/8] 0, 128
        %1324 = vxpose.xlu0.c.b16.cont [6/8] 0, 128
        %1325 = vxpose.xlu0.c.b16.cont [7/8] 0, 128
        %1326 = vxpose.xlu0.c.b16.end [8/8] 0, 128
        %v1327 = vpop.trf.xlu0
        %v1328 = vpop.trf.xlu0
        %v1329 = vpop.trf.xlu0
        %v1330 = vpop.trf.xlu0
        %v1331 = vpop.trf.xlu0
        %v1332 = vpop.trf.xlu0
        %v1333 = vpop.trf.xlu0
        %v1334 = vpop.trf.xlu0
        %1335 = vxpose.xlu0.c.b16.start [1/8] %v726, 128
        %1336 = vxpose.xlu0.c.b16.cont [2/8] 0, 128
        %1337 = vxpose.xlu0.c.b16.cont [3/8] 0, 128
        %1338 = vxpose.xlu0.c.b16.cont [4/8] 0, 128
        %1339 = vxpose.xlu0.c.b16.cont [5/8] 0, 128
        %1340 = vxpose.xlu0.c.b16.cont [6/8] 0, 128
        %1341 = vxpose.xlu0.c.b16.cont [7/8] 0, 128
        %1342 = vxpose.xlu0.c.b16.end [8/8] 0, 128
        %v1343 = vpop.trf.xlu0
        %v1344 = vpop.trf.xlu0
        %v1345 = vpop.trf.xlu0
        %v1346 = vpop.trf.xlu0
        %v1347 = vpop.trf.xlu0
        %v1348 = vpop.trf.xlu0
        %v1349 = vpop.trf.xlu0
        %v1350 = vpop.trf.xlu0
        %1351 = vxpose.xlu0.c.b16.start [1/8] %v792, 128
        %1352 = vxpose.xlu0.c.b16.cont [2/8] 0, 128
        %1353 = vxpose.xlu0.c.b16.cont [3/8] 0, 128
        %1354 = vxpose.xlu0.c.b16.cont [4/8] 0, 128
        %1355 = vxpose.xlu0.c.b16.cont [5/8] 0, 128
        %1356 = vxpose.xlu0.c.b16.cont [6/8] 0, 128
        %1357 = vxpose.xlu0.c.b16.cont [7/8] 0, 128
        %1358 = vxpose.xlu0.c.b16.end [8/8] 0, 128
        %v1359 = vpop.trf.xlu0
        %v1360 = vpop.trf.xlu0
        %v1361 = vpop.trf.xlu0
        %v1362 = vpop.trf.xlu0
        %v1363 = vpop.trf.xlu0
        %v1364 = vpop.trf.xlu0
        %v1365 = vpop.trf.xlu0
        %v1366 = vpop.trf.xlu0
        %1367 = vxpose.xlu0.c.b16.start [1/8] %v717, 128
        %1368 = vxpose.xlu0.c.b16.cont [2/8] 0, 128
        %1369 = vxpose.xlu0.c.b16.cont [3/8] 0, 128
        %1370 = vxpose.xlu0.c.b16.cont [4/8] 0, 128
        %1371 = vxpose.xlu0.c.b16.cont [5/8] 0, 128
        %1372 = vxpose.xlu0.c.b16.cont [6/8] 0, 128
        %1373 = vxpose.xlu0.c.b16.cont [7/8] 0, 128
        %1374 = vxpose.xlu0.c.b16.end [8/8] 0, 128
        %v1375 = vpop.trf.xlu0
        %v1376 = vpop.trf.xlu0
        %v1377 = vpop.trf.xlu0
        %v1378 = vpop.trf.xlu0
        %v1379 = vpop.trf.xlu0
        %v1380 = vpop.trf.xlu0
        %v1381 = vpop.trf.xlu0
        %v1382 = vpop.trf.xlu0
        %1383 = vxpose.xlu0.c.b16.start [1/8] %v783, 128
        %1384 = vxpose.xlu0.c.b16.cont [2/8] 0, 128
        %1385 = vxpose.xlu0.c.b16.cont [3/8] 0, 128
        %1386 = vxpose.xlu0.c.b16.cont [4/8] 0, 128
        %1387 = vxpose.xlu0.c.b16.cont [5/8] 0, 128
        %1388 = vxpose.xlu0.c.b16.cont [6/8] 0, 128
        %1389 = vxpose.xlu0.c.b16.cont [7/8] 0, 128
        %1390 = vxpose.xlu0.c.b16.end [8/8] 0, 128
        %v1391 = vpop.trf.xlu0
        %v1392 = vpop.trf.xlu0
        %v1393 = vpop.trf.xlu0
        %v1394 = vpop.trf.xlu0
        %v1395 = vpop.trf.xlu0
        %v1396 = vpop.trf.xlu0
        %v1397 = vpop.trf.xlu0
        %v1398 = vpop.trf.xlu0
        %1399 = vxpose.xlu0.c.b16.start [1/8] %v727, 128
        %1400 = vxpose.xlu0.c.b16.cont [2/8] 0, 128
        %1401 = vxpose.xlu0.c.b16.cont [3/8] 0, 128
        %1402 = vxpose.xlu0.c.b16.cont [4/8] 0, 128
        %1403 = vxpose.xlu0.c.b16.cont [5/8] 0, 128
        %1404 = vxpose.xlu0.c.b16.cont [6/8] 0, 128
        %1405 = vxpose.xlu0.c.b16.cont [7/8] 0, 128
        %1406 = vxpose.xlu0.c.b16.end [8/8] 0, 128
        %v1407 = vpop.trf.xlu0
        %v1408 = vpop.trf.xlu0
        %v1409 = vpop.trf.xlu0
        %v1410 = vpop.trf.xlu0
        %v1411 = vpop.trf.xlu0
        %v1412 = vpop.trf.xlu0
        %v1413 = vpop.trf.xlu0
        %v1414 = vpop.trf.xlu0
        %1415 = vxpose.xlu0.c.b16.start [1/8] %v793, 128
        %1416 = vxpose.xlu0.c.b16.cont [2/8] 0, 128
        %1417 = vxpose.xlu0.c.b16.cont [3/8] 0, 128
        %1418 = vxpose.xlu0.c.b16.cont [4/8] 0, 128
        %1419 = vxpose.xlu0.c.b16.cont [5/8] 0, 128
        %1420 = vxpose.xlu0.c.b16.cont [6/8] 0, 128
        %1421 = vxpose.xlu0.c.b16.cont [7/8] 0, 128
        %1422 = vxpose.xlu0.c.b16.end [8/8] 0, 128
        %v1423 = vpop.trf.xlu0
        %v1424 = vpop.trf.xlu0
        %v1425 = vpop.trf.xlu0
        %v1426 = vpop.trf.xlu0
        %v1427 = vpop.trf.xlu0
        %v1428 = vpop.trf.xlu0
        %v1429 = vpop.trf.xlu0
        %v1430 = vpop.trf.xlu0
        %1431 = vxpose.xlu0.c.b16.start [1/8] %v724, 128
        %1432 = vxpose.xlu0.c.b16.cont [2/8] 0, 128
        %1433 = vxpose.xlu0.c.b16.cont [3/8] 0, 128
        %1434 = vxpose.xlu0.c.b16.cont [4/8] 0, 128
        %1435 = vxpose.xlu0.c.b16.cont [5/8] 0, 128
        %1436 = vxpose.xlu0.c.b16.cont [6/8] 0, 128
        %1437 = vxpose.xlu0.c.b16.cont [7/8] 0, 128
        %1438 = vxpose.xlu0.c.b16.end [8/8] 0, 128
        %v1439 = vpop.trf.xlu0
        %v1440 = vpop.trf.xlu0
        %v1441 = vpop.trf.xlu0
        %v1442 = vpop.trf.xlu0
        %v1443 = vpop.trf.xlu0
        %v1444 = vpop.trf.xlu0
        %v1445 = vpop.trf.xlu0
        %v1446 = vpop.trf.xlu0
        %1447 = vxpose.xlu0.c.b16.start [1/8] %v790, 128
        %1448 = vxpose.xlu0.c.b16.cont [2/8] 0, 128
        %1449 = vxpose.xlu0.c.b16.cont [3/8] 0, 128
        %1450 = vxpose.xlu0.c.b16.cont [4/8] 0, 128
        %1451 = vxpose.xlu0.c.b16.cont [5/8] 0, 128
        %1452 = vxpose.xlu0.c.b16.cont [6/8] 0, 128
        %1453 = vxpose.xlu0.c.b16.cont [7/8] 0, 128
        %1454 = vxpose.xlu0.c.b16.end [8/8] 0, 128
        %v1455 = vpop.trf.xlu0
        %v1456 = vpop.trf.xlu0
        %v1457 = vpop.trf.xlu0
        %v1458 = vpop.trf.xlu0
        %v1459 = vpop.trf.xlu0
        %v1460 = vpop.trf.xlu0
        %v1461 = vpop.trf.xlu0
        %v1462 = vpop.trf.xlu0
        %1463 = vxpose.xlu0.c.b16.start [1/8] %v728, 128
        %1464 = vxpose.xlu0.c.b16.cont [2/8] 0, 128
        %1465 = vxpose.xlu0.c.b16.cont [3/8] 0, 128
        %1466 = vxpose.xlu0.c.b16.cont [4/8] 0, 128
        %1467 = vxpose.xlu0.c.b16.cont [5/8] 0, 128
        %1468 = vxpose.xlu0.c.b16.cont [6/8] 0, 128
        %1469 = vxpose.xlu0.c.b16.cont [7/8] 0, 128
        %1470 = vxpose.xlu0.c.b16.end [8/8] 0, 128
        %v1471 = vpop.trf.xlu0
        %v1472 = vpop.trf.xlu0
        %v1473 = vpop.trf.xlu0
        %v1474 = vpop.trf.xlu0
        %v1475 = vpop.trf.xlu0
        %v1476 = vpop.trf.xlu0
        %v1477 = vpop.trf.xlu0
        %v1478 = vpop.trf.xlu0
        %1479 = vxpose.xlu0.c.b16.start [1/8] %v794, 128
        %1480 = vxpose.xlu0.c.b16.cont [2/8] 0, 128
        %1481 = vxpose.xlu0.c.b16.cont [3/8] 0, 128
        %1482 = vxpose.xlu0.c.b16.cont [4/8] 0, 128
        %1483 = vxpose.xlu0.c.b16.cont [5/8] 0, 128
        %1484 = vxpose.xlu0.c.b16.cont [6/8] 0, 128
        %1485 = vxpose.xlu0.c.b16.cont [7/8] 0, 128
        %1486 = vxpose.xlu0.c.b16.end [8/8] 0, 128
        %v1487 = vpop.trf.xlu0
        %v1488 = vpop.trf.xlu0
        %v1489 = vpop.trf.xlu0
        %v1490 = vpop.trf.xlu0
        %v1491 = vpop.trf.xlu0
        %v1492 = vpop.trf.xlu0
        %v1493 = vpop.trf.xlu0
        %v1494 = vpop.trf.xlu0
        %v1495 = vcombine.low %v1247, %v1311
        %v1497 = vunpack.c.l.s4 1983009808
        %v1498 = vunpack.c.0.s8 %v1497
        %v1499 = vlaneseq
        %v1500 = vshrl.u32 %v1499, 7
        %v1501 = vsub.s32 %v1498, %v1500
        %v1502 = vrot.slane %v1495, %v1501
        %v1503 = vcombine.low %v1279, %v1343
        %v1505 = vunpack.c.l.s4 1983009808
        %v1506 = vunpack.c.0.s8 %v1505
        %v1507 = vlaneseq
        %v1508 = vshrl.u32 %v1507, 7
        %v1509 = vsub.s32 %v1506, %v1508
        %v1510 = vrot.slane %v1503, %v1509
        %v1511 = vcombine.low %v1375, %v1439
        %v1513 = vunpack.c.l.s4 1983009808
        %v1514 = vunpack.c.0.s8 %v1513
        %v1515 = vlaneseq
        %v1516 = vshrl.u32 %v1515, 7
        %v1517 = vsub.s32 %v1514, %v1516
        %v1518 = vrot.slane %v1511, %v1517
        %v1519 = vcombine.low %v1407, %v1471
        %v1521 = vunpack.c.l.s4 1983009808
        %v1522 = vunpack.c.0.s8 %v1521
        %v1523 = vlaneseq
        %v1524 = vshrl.u32 %v1523, 7
        %v1525 = vsub.s32 %v1522, %v1524
        %v1526 = vrot.slane %v1519, %v1525
        %v1527 = vcombine.low %v1502, %v1510
        %v1528 = vcombine.high %v1502, %v1510
        %v1530 = vunpack.c.l.s4 1934713408
        %v1531 = vunpack.c.0.s8 %v1530
        %v1532 = vlaneseq
        %v1533 = vshrl.u32 %v1532, 7
        %v1534 = vsub.s32 %v1531, %v1533
        %v1535 = vrot.slane %v1527, %v1534
        %v1537 = vunpack.c.l.s4 1934713408
        %v1538 = vunpack.c.0.s8 %v1537
        %v1539 = vlaneseq
        %v1540 = vshrl.u32 %v1539, 7
        %v1541 = vsub.s32 %v1538, %v1540
        %v1542 = vrot.slane %v1528, %v1541
        %v1543 = vcombine.low %v1518, %v1526
        %v1544 = vcombine.high %v1518, %v1526
        %v1546 = vunpack.c.l.s4 1934713408
        %v1547 = vunpack.c.0.s8 %v1546
        %v1548 = vlaneseq
        %v1549 = vshrl.u32 %v1548, 7
        %v1550 = vsub.s32 %v1547, %v1549
        %v1551 = vrot.slane %v1543, %v1550
        %v1553 = vunpack.c.l.s4 1934713408
        %v1554 = vunpack.c.0.s8 %v1553
        %v1555 = vlaneseq
        %v1556 = vshrl.u32 %v1555, 7
        %v1557 = vsub.s32 %v1554, %v1556
        %v1558 = vrot.slane %v1544, %v1557
        %v1559 = vcombine.low %v1535, %v1551
        %v1560 = vcombine.high %v1535, %v1551
        %v1561 = vcombine.low %v1542, %v1558
        %v1562 = vcombine.high %v1542, %v1558
        %v1563 = vcombine.low %v1263, %v1327
        %v1565 = vunpack.c.l.s4 1983009808
        %v1566 = vunpack.c.0.s8 %v1565
        %v1567 = vlaneseq
        %v1568 = vshrl.u32 %v1567, 7
        %v1569 = vsub.s32 %v1566, %v1568
        %v1570 = vrot.slane %v1563, %v1569
        %v1571 = vcombine.low %v1295, %v1359
        %v1573 = vunpack.c.l.s4 1983009808
        %v1574 = vunpack.c.0.s8 %v1573
        %v1575 = vlaneseq
        %v1576 = vshrl.u32 %v1575, 7
        %v1577 = vsub.s32 %v1574, %v1576
        %v1578 = vrot.slane %v1571, %v1577
        %v1579 = vcombine.low %v1391, %v1455
        %v1581 = vunpack.c.l.s4 1983009808
        %v1582 = vunpack.c.0.s8 %v1581
        %v1583 = vlaneseq
        %v1584 = vshrl.u32 %v1583, 7
        %v1585 = vsub.s32 %v1582, %v1584
        %v1586 = vrot.slane %v1579, %v1585
        %v1587 = vcombine.low %v1423, %v1487
        %v1589 = vunpack.c.l.s4 1983009808
        %v1590 = vunpack.c.0.s8 %v1589
        %v1591 = vlaneseq
        %v1592 = vshrl.u32 %v1591, 7
        %v1593 = vsub.s32 %v1590, %v1592
        %v1594 = vrot.slane %v1587, %v1593
        %v1595 = vcombine.low %v1570, %v1578
        %v1596 = vcombine.high %v1570, %v1578
        %v1598 = vunpack.c.l.s4 1934713408
        %v1599 = vunpack.c.0.s8 %v1598
        %v1600 = vlaneseq
        %v1601 = vshrl.u32 %v1600, 7
        %v1602 = vsub.s32 %v1599, %v1601
        %v1603 = vrot.slane %v1595, %v1602
        %v1605 = vunpack.c.l.s4 1934713408
        %v1606 = vunpack.c.0.s8 %v1605
        %v1607 = vlaneseq
        %v1608 = vshrl.u32 %v1607, 7
        %v1609 = vsub.s32 %v1606, %v1608
        %v1610 = vrot.slane %v1596, %v1609
        %v1611 = vcombine.low %v1586, %v1594
        %v1612 = vcombine.high %v1586, %v1594
        %v1614 = vunpack.c.l.s4 1934713408
        %v1615 = vunpack.c.0.s8 %v1614
        %v1616 = vlaneseq
        %v1617 = vshrl.u32 %v1616, 7
        %v1618 = vsub.s32 %v1615, %v1617
        %v1619 = vrot.slane %v1611, %v1618
        %v1621 = vunpack.c.l.s4 1934713408
        %v1622 = vunpack.c.0.s8 %v1621
        %v1623 = vlaneseq
        %v1624 = vshrl.u32 %v1623, 7
        %v1625 = vsub.s32 %v1622, %v1624
        %v1626 = vrot.slane %v1612, %v1625
        %v1627 = vcombine.low %v1603, %v1619
        %v1628 = vcombine.high %v1603, %v1619
        %v1629 = vcombine.low %v1610, %v1626
        %v1630 = vcombine.high %v1610, %v1626
        %v1633 = vpack.i.b16 %v1627, %v1559
        %v1635 = vshrl.u32 %v1559, 16
        %v1636 = vshrl.u32 %v1627, 16
        %v1637 = vpack.i.b16 %v1636, %v1635
        %v1641 = vpack.i.b16 %v1628, %v1560
        %v1643 = vshrl.u32 %v1560, 16
        %v1644 = vshrl.u32 %v1628, 16
        %v1645 = vpack.i.b16 %v1644, %v1643
        %v1649 = vpack.i.b16 %v1629, %v1561
        %v1651 = vshrl.u32 %v1561, 16
        %v1652 = vshrl.u32 %v1629, 16
        %v1653 = vpack.i.b16 %v1652, %v1651
        %v1657 = vpack.i.b16 %v1630, %v1562
        %v1659 = vshrl.u32 %v1562, 16
        %v1660 = vshrl.u32 %v1630, 16
        %v1661 = vpack.i.b16 %v1660, %v1659
        %1663 = vxpose.xlu0.c.b16.start [1/8] %v1633, 128
        %1664 = vxpose.xlu0.c.b16.cont [2/8] 0, 128
        %1665 = vxpose.xlu0.c.b16.cont [3/8] 0, 128
        %1666 = vxpose.xlu0.c.b16.cont [4/8] 0, 128
        %1667 = vxpose.xlu0.c.b16.cont [5/8] 0, 128
        %1668 = vxpose.xlu0.c.b16.cont [6/8] 0, 128
        %1669 = vxpose.xlu0.c.b16.cont [7/8] 0, 128
        %1670 = vxpose.xlu0.c.b16.end [8/8] 0, 128
        %v1671 = vpop.trf.xlu0
        %v1672 = vpop.trf.xlu0
        %v1673 = vpop.trf.xlu0
        %v1674 = vpop.trf.xlu0
        %v1675 = vpop.trf.xlu0
        %v1676 = vpop.trf.xlu0
        %v1677 = vpop.trf.xlu0
        %v1678 = vpop.trf.xlu0
        %1679 = vxpose.xlu0.c.b16.start [1/8] %v1637, 128
        %1680 = vxpose.xlu0.c.b16.cont [2/8] 0, 128
        %1681 = vxpose.xlu0.c.b16.cont [3/8] 0, 128
        %1682 = vxpose.xlu0.c.b16.cont [4/8] 0, 128
        %1683 = vxpose.xlu0.c.b16.cont [5/8] 0, 128
        %1684 = vxpose.xlu0.c.b16.cont [6/8] 0, 128
        %1685 = vxpose.xlu0.c.b16.cont [7/8] 0, 128
        %1686 = vxpose.xlu0.c.b16.end [8/8] 0, 128
        %v1687 = vpop.trf.xlu0
        %v1688 = vpop.trf.xlu0
        %v1689 = vpop.trf.xlu0
        %v1690 = vpop.trf.xlu0
        %v1691 = vpop.trf.xlu0
        %v1692 = vpop.trf.xlu0
        %v1693 = vpop.trf.xlu0
        %v1694 = vpop.trf.xlu0
        %1695 = vxpose.xlu0.c.b16.start [1/8] %v1641, 128
        %1696 = vxpose.xlu0.c.b16.cont [2/8] 0, 128
        %1697 = vxpose.xlu0.c.b16.cont [3/8] 0, 128
        %1698 = vxpose.xlu0.c.b16.cont [4/8] 0, 128
        %1699 = vxpose.xlu0.c.b16.cont [5/8] 0, 128
        %1700 = vxpose.xlu0.c.b16.cont [6/8] 0, 128
        %1701 = vxpose.xlu0.c.b16.cont [7/8] 0, 128
        %1702 = vxpose.xlu0.c.b16.end [8/8] 0, 128
        %v1703 = vpop.trf.xlu0
        %v1704 = vpop.trf.xlu0
        %v1705 = vpop.trf.xlu0
        %v1706 = vpop.trf.xlu0
        %v1707 = vpop.trf.xlu0
        %v1708 = vpop.trf.xlu0
        %v1709 = vpop.trf.xlu0
        %v1710 = vpop.trf.xlu0
        %1711 = vxpose.xlu0.c.b16.start [1/8] %v1645, 128
        %1712 = vxpose.xlu0.c.b16.cont [2/8] 0, 128
        %1713 = vxpose.xlu0.c.b16.cont [3/8] 0, 128
        %1714 = vxpose.xlu0.c.b16.cont [4/8] 0, 128
        %1715 = vxpose.xlu0.c.b16.cont [5/8] 0, 128
        %1716 = vxpose.xlu0.c.b16.cont [6/8] 0, 128
        %1717 = vxpose.xlu0.c.b16.cont [7/8] 0, 128
        %1718 = vxpose.xlu0.c.b16.end [8/8] 0, 128
        %v1719 = vpop.trf.xlu0
        %v1720 = vpop.trf.xlu0
        %v1721 = vpop.trf.xlu0
        %v1722 = vpop.trf.xlu0
        %v1723 = vpop.trf.xlu0
        %v1724 = vpop.trf.xlu0
        %v1725 = vpop.trf.xlu0
        %v1726 = vpop.trf.xlu0
        %1727 = vxpose.xlu0.c.b16.start [1/8] %v1649, 128
        %1728 = vxpose.xlu0.c.b16.cont [2/8] 0, 128
        %1729 = vxpose.xlu0.c.b16.cont [3/8] 0, 128
        %1730 = vxpose.xlu0.c.b16.cont [4/8] 0, 128
        %1731 = vxpose.xlu0.c.b16.cont [5/8] 0, 128
        %1732 = vxpose.xlu0.c.b16.cont [6/8] 0, 128
        %1733 = vxpose.xlu0.c.b16.cont [7/8] 0, 128
        %1734 = vxpose.xlu0.c.b16.end [8/8] 0, 128
        %v1735 = vpop.trf.xlu0
        %v1736 = vpop.trf.xlu0
        %v1737 = vpop.trf.xlu0
        %v1738 = vpop.trf.xlu0
        %v1739 = vpop.trf.xlu0
        %v1740 = vpop.trf.xlu0
        %v1741 = vpop.trf.xlu0
        %v1742 = vpop.trf.xlu0
        %1743 = vxpose.xlu0.c.b16.start [1/8] %v1653, 128
        %1744 = vxpose.xlu0.c.b16.cont [2/8] 0, 128
        %1745 = vxpose.xlu0.c.b16.cont [3/8] 0, 128
        %1746 = vxpose.xlu0.c.b16.cont [4/8] 0, 128
        %1747 = vxpose.xlu0.c.b16.cont [5/8] 0, 128
        %1748 = vxpose.xlu0.c.b16.cont [6/8] 0, 128
        %1749 = vxpose.xlu0.c.b16.cont [7/8] 0, 128
        %1750 = vxpose.xlu0.c.b16.end [8/8] 0, 128
        %v1751 = vpop.trf.xlu0
        %v1752 = vpop.trf.xlu0
        %v1753 = vpop.trf.xlu0
        %v1754 = vpop.trf.xlu0
        %v1755 = vpop.trf.xlu0
        %v1756 = vpop.trf.xlu0
        %v1757 = vpop.trf.xlu0
        %v1758 = vpop.trf.xlu0
        %1759 = vxpose.xlu0.c.b16.start [1/8] %v1657, 128
        %1760 = vxpose.xlu0.c.b16.cont [2/8] 0, 128
        %1761 = vxpose.xlu0.c.b16.cont [3/8] 0, 128
        %1762 = vxpose.xlu0.c.b16.cont [4/8] 0, 128
        %1763 = vxpose.xlu0.c.b16.cont [5/8] 0, 128
        %1764 = vxpose.xlu0.c.b16.cont [6/8] 0, 128
        %1765 = vxpose.xlu0.c.b16.cont [7/8] 0, 128
        %1766 = vxpose.xlu0.c.b16.end [8/8] 0, 128
        %v1767 = vpop.trf.xlu0
        %v1768 = vpop.trf.xlu0
        %v1769 = vpop.trf.xlu0
        %v1770 = vpop.trf.xlu0
        %v1771 = vpop.trf.xlu0
        %v1772 = vpop.trf.xlu0
        %v1773 = vpop.trf.xlu0
        %v1774 = vpop.trf.xlu0
        %1775 = vxpose.xlu0.c.b16.start [1/8] %v1661, 128
        %1776 = vxpose.xlu0.c.b16.cont [2/8] 0, 128
        %1777 = vxpose.xlu0.c.b16.cont [3/8] 0, 128
        %1778 = vxpose.xlu0.c.b16.cont [4/8] 0, 128
        %1779 = vxpose.xlu0.c.b16.cont [5/8] 0, 128
        %1780 = vxpose.xlu0.c.b16.cont [6/8] 0, 128
        %1781 = vxpose.xlu0.c.b16.cont [7/8] 0, 128
        %1782 = vxpose.xlu0.c.b16.end [8/8] 0, 128
        %v1783 = vpop.trf.xlu0
        %v1784 = vpop.trf.xlu0
        %v1785 = vpop.trf.xlu0
        %v1786 = vpop.trf.xlu0
        %v1787 = vpop.trf.xlu0
        %v1788 = vpop.trf.xlu0
        %v1789 = vpop.trf.xlu0
        %v1790 = vpop.trf.xlu0
        %v1791 = vcombine.low %v1671, %v1735
        %v1793 = vunpack.c.l.s4 1983009808
        %v1794 = vunpack.c.0.s8 %v1793
        %v1795 = vlaneseq
        %v1796 = vshrl.u32 %v1795, 7
        %v1797 = vsub.s32 %v1794, %v1796
        %v1798 = vrot.slane %v1791, %v1797
        %v1799 = vcombine.low %v1703, %v1767
        %v1801 = vunpack.c.l.s4 1983009808
        %v1802 = vunpack.c.0.s8 %v1801
        %v1803 = vlaneseq
        %v1804 = vshrl.u32 %v1803, 7
        %v1805 = vsub.s32 %v1802, %v1804
        %v1806 = vrot.slane %v1799, %v1805
        %v1807 = vcombine.low %v1798, %v1806
        %v1809 = vunpack.c.l.s4 1934713408
        %v1810 = vunpack.c.0.s8 %v1809
        %v1811 = vlaneseq
        %v1812 = vshrl.u32 %v1811, 7
        %v1813 = vsub.s32 %v1810, %v1812
        %v1814 = vrot.slane %v1807, %v1813
        %v1815 = vcombine.high %v1814, 0
        %v1816 = vcombine.low %v1687, %v1751
        %v1818 = vunpack.c.l.s4 1983009808
        %v1819 = vunpack.c.0.s8 %v1818
        %v1820 = vlaneseq
        %v1821 = vshrl.u32 %v1820, 7
        %v1822 = vsub.s32 %v1819, %v1821
        %v1823 = vrot.slane %v1816, %v1822
        %v1824 = vcombine.low %v1719, %v1783
        %v1826 = vunpack.c.l.s4 1983009808
        %v1827 = vunpack.c.0.s8 %v1826
        %v1828 = vlaneseq
        %v1829 = vshrl.u32 %v1828, 7
        %v1830 = vsub.s32 %v1827, %v1829
        %v1831 = vrot.slane %v1824, %v1830
        %v1832 = vcombine.low %v1823, %v1831
        %v1834 = vunpack.c.l.s4 1934713408
        %v1835 = vunpack.c.0.s8 %v1834
        %v1836 = vlaneseq
        %v1837 = vshrl.u32 %v1836, 7
        %v1838 = vsub.s32 %v1835, %v1837
        %v1839 = vrot.slane %v1832, %v1838
        %v1840 = vcombine.high %v1839, 0
        %v1843 = vpack.i.b16 %v1839, %v1814
        %v1844 = vshrl.u32 %v1814, 16
        %v1845 = vshrl.u32 %v1839, 16
        %v1846 = vpack.i.b16 %v1845, %v1844
        %v1849 = vpack.i.b16 %v1840, %v1815
        %v1850 = vshrl.u32 %v1815, 16
        %v1851 = vshrl.u32 %v1840, 16
        %v1852 = vpack.i.b16 %v1851, %v1850
        %v1854 = vsel %vm1190, %v1843, 0
        %v1857 = vsel %vm1190, %v1235, 0
        %1859 = vmatprep.subr.bf16.mxu0 0
        %1860 = vmatpush1.bf16.xpose.msra.mxu0 0
        %1861 = vmatprep.subr.bf16.mxu0 0
        %1862 = vmatpush1.bf16.xpose.msra.mxu0 0
        %1863 = vmatprep.subr.bf16.mxu0 0
        %1864 = vmatpush1.bf16.xpose.msra.mxu0 0
        %1865 = vmatprep.subr.bf16.mxu0 0
        %1866 = vmatpush1.bf16.xpose.msra.mxu0 0
        %1867 = vmatprep.subr.bf16.mxu0 0
        %1868 = vmatpush1.bf16.xpose.msra.mxu0 0
        %1869 = vmatprep.subr.bf16.mxu0 0
        %1870 = vmatpush1.bf16.xpose.msra.mxu0 0
        %1871 = vmatprep.subr.bf16.mxu0 0
        %1872 = vmatpush1.bf16.xpose.msra.mxu0 0
        %1873 = vmatprep.subr.bf16.mxu0 0
        %1874 = vmatpush1.bf16.xpose.msra.mxu0 %v1857
        %1875 = vmatprep.subr.bf16.mxu0 0
        %1876 = vmatpush2.bf16.xpose.msra.mxu0 0
        %1877 = vmatprep.subr.bf16.mxu0 0
        %1878 = vmatpush2.bf16.xpose.msra.mxu0 0
        %1879 = vmatprep.subr.bf16.mxu0 0
        %1880 = vmatpush2.bf16.xpose.msra.mxu0 0
        %1881 = vmatprep.subr.bf16.mxu0 0
        %1882 = vmatpush2.bf16.xpose.msra.mxu0 0
        %1883 = vmatprep.subr.bf16.mxu0 0
        %1884 = vmatpush2.bf16.xpose.msra.mxu0 0
        %1885 = vmatprep.subr.bf16.mxu0 0
        %1886 = vmatpush2.bf16.xpose.msra.mxu0 0
        %1887 = vmatprep.subr.bf16.mxu0 0
        %1888 = vmatpush2.bf16.xpose.msra.mxu0 0
        %1889 = vmatprep.subr.bf16.mxu0 0
        %1890 = vmatpush2.bf16.xpose.msra.mxu0 0
        %1891 = vmatprep.mubr.bf16.mxu0 0
        %1892 = vmatmul.mubr.bf16.gmra.mxu0 %v1854
        %v1893 = vpop.f32.mrf.mxu0
        %v1894 = vadd.f32 0.0, %v1893
        %v1895 = vpop.f32.mrf.mxu0
        %v1896 = vpop.f32.mrf.mxu0
        %v1897 = vpop.f32.mrf.mxu0
        %1898 = vdwg.mxu0
        %v1900 = vsel %vm1190, %v1846, 0
        %v1903 = vsel %vm1190, %v1236, 0
        %1905 = vmatprep.subr.bf16.mxu0 0
        %1906 = vmatpush1.bf16.xpose.msra.mxu0 0
        %1907 = vmatprep.subr.bf16.mxu0 0
        %1908 = vmatpush1.bf16.xpose.msra.mxu0 0
        %1909 = vmatprep.subr.bf16.mxu0 0
        %1910 = vmatpush1.bf16.xpose.msra.mxu0 0
        %1911 = vmatprep.subr.bf16.mxu0 0
        %1912 = vmatpush1.bf16.xpose.msra.mxu0 0
        %1913 = vmatprep.subr.bf16.mxu0 0
        %1914 = vmatpush1.bf16.xpose.msra.mxu0 0
        %1915 = vmatprep.subr.bf16.mxu0 0
        %1916 = vmatpush1.bf16.xpose.msra.mxu0 0
        %1917 = vmatprep.subr.bf16.mxu0 0
        %1918 = vmatpush1.bf16.xpose.msra.mxu0 0
        %1919 = vmatprep.subr.bf16.mxu0 0
        %1920 = vmatpush1.bf16.xpose.msra.mxu0 %v1903
        %1921 = vmatprep.subr.bf16.mxu0 0
        %1922 = vmatpush2.bf16.xpose.msra.mxu0 0
        %1923 = vmatprep.subr.bf16.mxu0 0
        %1924 = vmatpush2.bf16.xpose.msra.mxu0 0
        %1925 = vmatprep.subr.bf16.mxu0 0
        %1926 = vmatpush2.bf16.xpose.msra.mxu0 0
        %1927 = vmatprep.subr.bf16.mxu0 0
        %1928 = vmatpush2.bf16.xpose.msra.mxu0 0
        %1929 = vmatprep.subr.bf16.mxu0 0
        %1930 = vmatpush2.bf16.xpose.msra.mxu0 0
        %1931 = vmatprep.subr.bf16.mxu0 0
        %1932 = vmatpush2.bf16.xpose.msra.mxu0 0
        %1933 = vmatprep.subr.bf16.mxu0 0
        %1934 = vmatpush2.bf16.xpose.msra.mxu0 0
        %1935 = vmatprep.subr.bf16.mxu0 0
        %1936 = vmatpush2.bf16.xpose.msra.mxu0 0
        %1937 = vmatprep.mubr.bf16.mxu0 0
        %1938 = vmatmul.mubr.bf16.gmra.mxu0 %v1900
        %v1939 = vpop.f32.mrf.mxu0
        %v1940 = vadd.f32 0.0, %v1939
        %v1941 = vpop.f32.mrf.mxu0
        %v1942 = vpop.f32.mrf.mxu0
        %v1943 = vpop.f32.mrf.mxu0
        %1944 = vdwg.mxu0
        %v1946 = vsel %vm1190, %v1849, 0
        %v1949 = vsel %vm1190, %v1237, 0
        %1951 = vmatprep.subr.bf16.mxu0 0
        %1952 = vmatpush1.bf16.xpose.msra.mxu0 0
        %1953 = vmatprep.subr.bf16.mxu0 0
        %1954 = vmatpush1.bf16.xpose.msra.mxu0 0
        %1955 = vmatprep.subr.bf16.mxu0 0
        %1956 = vmatpush1.bf16.xpose.msra.mxu0 0
        %1957 = vmatprep.subr.bf16.mxu0 0
        %1958 = vmatpush1.bf16.xpose.msra.mxu0 0
        %1959 = vmatprep.subr.bf16.mxu0 0
        %1960 = vmatpush1.bf16.xpose.msra.mxu0 0
        %1961 = vmatprep.subr.bf16.mxu0 0
        %1962 = vmatpush1.bf16.xpose.msra.mxu0 0
        %1963 = vmatprep.subr.bf16.mxu0 0
        %1964 = vmatpush1.bf16.xpose.msra.mxu0 0
        %1965 = vmatprep.subr.bf16.mxu0 0
        %1966 = vmatpush1.bf16.xpose.msra.mxu0 %v1949
        %1967 = vmatprep.subr.bf16.mxu0 0
        %1968 = vmatpush2.bf16.xpose.msra.mxu0 0
        %1969 = vmatprep.subr.bf16.mxu0 0
        %1970 = vmatpush2.bf16.xpose.msra.mxu0 0
        %1971 = vmatprep.subr.bf16.mxu0 0
        %1972 = vmatpush2.bf16.xpose.msra.mxu0 0
        %1973 = vmatprep.subr.bf16.mxu0 0
        %1974 = vmatpush2.bf16.xpose.msra.mxu0 0
        %1975 = vmatprep.subr.bf16.mxu0 0
        %1976 = vmatpush2.bf16.xpose.msra.mxu0 0
        %1977 = vmatprep.subr.bf16.mxu0 0
        %1978 = vmatpush2.bf16.xpose.msra.mxu0 0
        %1979 = vmatprep.subr.bf16.mxu0 0
        %1980 = vmatpush2.bf16.xpose.msra.mxu0 0
        %1981 = vmatprep.subr.bf16.mxu0 0
        %1982 = vmatpush2.bf16.xpose.msra.mxu0 0
        %1983 = vmatprep.mubr.bf16.mxu0 0
        %1984 = vmatmul.mubr.bf16.gmra.mxu0 %v1946
        %v1985 = vpop.f32.mrf.mxu0
        %v1986 = vadd.f32 0.0, %v1985
        %v1987 = vpop.f32.mrf.mxu0
        %v1988 = vpop.f32.mrf.mxu0
        %v1989 = vpop.f32.mrf.mxu0
        %1990 = vdwg.mxu0
        %v1992 = vsel %vm1190, %v1852, 0
        %v1995 = vsel %vm1190, %v1238, 0
        %1997 = vmatprep.subr.bf16.mxu0 0
        %1998 = vmatpush1.bf16.xpose.msra.mxu0 0
        %1999 = vmatprep.subr.bf16.mxu0 0
        %2000 = vmatpush1.bf16.xpose.msra.mxu0 0
        %2001 = vmatprep.subr.bf16.mxu0 0
        %2002 = vmatpush1.bf16.xpose.msra.mxu0 0
        %2003 = vmatprep.subr.bf16.mxu0 0
        %2004 = vmatpush1.bf16.xpose.msra.mxu0 0
        %2005 = vmatprep.subr.bf16.mxu0 0
        %2006 = vmatpush1.bf16.xpose.msra.mxu0 0
        %2007 = vmatprep.subr.bf16.mxu0 0
        %2008 = vmatpush1.bf16.xpose.msra.mxu0 0
        %2009 = vmatprep.subr.bf16.mxu0 0
        %2010 = vmatpush1.bf16.xpose.msra.mxu0 0
        %2011 = vmatprep.subr.bf16.mxu0 0
        %2012 = vmatpush1.bf16.xpose.msra.mxu0 %v1995
        %2013 = vmatprep.subr.bf16.mxu0 0
        %2014 = vmatpush2.bf16.xpose.msra.mxu0 0
        %2015 = vmatprep.subr.bf16.mxu0 0
        %2016 = vmatpush2.bf16.xpose.msra.mxu0 0
        %2017 = vmatprep.subr.bf16.mxu0 0
        %2018 = vmatpush2.bf16.xpose.msra.mxu0 0
        %2019 = vmatprep.subr.bf16.mxu0 0
        %2020 = vmatpush2.bf16.xpose.msra.mxu0 0
        %2021 = vmatprep.subr.bf16.mxu0 0
        %2022 = vmatpush2.bf16.xpose.msra.mxu0 0
        %2023 = vmatprep.subr.bf16.mxu0 0
        %2024 = vmatpush2.bf16.xpose.msra.mxu0 0
        %2025 = vmatprep.subr.bf16.mxu0 0
        %2026 = vmatpush2.bf16.xpose.msra.mxu0 0
        %2027 = vmatprep.subr.bf16.mxu0 0
        %2028 = vmatpush2.bf16.xpose.msra.mxu0 0
        %2029 = vmatprep.mubr.bf16.mxu0 0
        %2030 = vmatmul.mubr.bf16.gmra.mxu0 %v1992
        %v2031 = vpop.f32.mrf.mxu0
        %v2032 = vadd.f32 0.0, %v2031
        %v2033 = vpop.f32.mrf.mxu0
        %v2034 = vpop.f32.mrf.mxu0
        %v2035 = vpop.f32.mrf.mxu0
        %2036 = vdwg.mxu0
        %2037 = vxpose.xlu0.b32.start [1/16] %v1894, 128
        %2038 = vxpose.xlu0.b32.cont [2/16] 0.0, 128
        %2039 = vxpose.xlu0.b32.cont [3/16] 0.0, 128
        %2040 = vxpose.xlu0.b32.cont [4/16] 0.0, 128
        %2041 = vxpose.xlu0.b32.cont [5/16] 0.0, 128
        %2042 = vxpose.xlu0.b32.cont [6/16] 0.0, 128
        %2043 = vxpose.xlu0.b32.cont [7/16] 0.0, 128
        %2044 = vxpose.xlu0.b32.cont [8/16] 0.0, 128
        %2045 = vxpose.xlu0.b32.cont [9/16] 0.0, 128
        %2046 = vxpose.xlu0.b32.cont [10/16] 0.0, 128
        %2047 = vxpose.xlu0.b32.cont [11/16] 0.0, 128
        %2048 = vxpose.xlu0.b32.cont [12/16] 0.0, 128
        %2049 = vxpose.xlu0.b32.cont [13/16] 0.0, 128
        %2050 = vxpose.xlu0.b32.cont [14/16] 0.0, 128
        %2051 = vxpose.xlu0.b32.cont [15/16] 0.0, 128
        %2052 = vxpose.xlu0.b32.end [16/16] 0.0, 128
        %v2053 = vpop.trf.xlu0
        %v2054 = vpop.trf.xlu0
        %v2055 = vpop.trf.xlu0
        %v2056 = vpop.trf.xlu0
        %v2057 = vpop.trf.xlu0
        %v2058 = vpop.trf.xlu0
        %v2059 = vpop.trf.xlu0
        %v2060 = vpop.trf.xlu0
        %v2061 = vpop.trf.xlu0
        %v2062 = vpop.trf.xlu0
        %v2063 = vpop.trf.xlu0
        %v2064 = vpop.trf.xlu0
        %v2065 = vpop.trf.xlu0
        %v2066 = vpop.trf.xlu0
        %v2067 = vpop.trf.xlu0
        %v2068 = vpop.trf.xlu0
        %2069 = vxpose.xlu0.b32.start [1/16] %v1940, 128
        %2070 = vxpose.xlu0.b32.cont [2/16] 0.0, 128
        %2071 = vxpose.xlu0.b32.cont [3/16] 0.0, 128
        %2072 = vxpose.xlu0.b32.cont [4/16] 0.0, 128
        %2073 = vxpose.xlu0.b32.cont [5/16] 0.0, 128
        %2074 = vxpose.xlu0.b32.cont [6/16] 0.0, 128
        %2075 = vxpose.xlu0.b32.cont [7/16] 0.0, 128
        %2076 = vxpose.xlu0.b32.cont [8/16] 0.0, 128
        %2077 = vxpose.xlu0.b32.cont [9/16] 0.0, 128
        %2078 = vxpose.xlu0.b32.cont [10/16] 0.0, 128
        %2079 = vxpose.xlu0.b32.cont [11/16] 0.0, 128
        %2080 = vxpose.xlu0.b32.cont [12/16] 0.0, 128
        %2081 = vxpose.xlu0.b32.cont [13/16] 0.0, 128
        %2082 = vxpose.xlu0.b32.cont [14/16] 0.0, 128
        %2083 = vxpose.xlu0.b32.cont [15/16] 0.0, 128
        %2084 = vxpose.xlu0.b32.end [16/16] 0.0, 128
        %v2085 = vpop.trf.xlu0
        %v2086 = vpop.trf.xlu0
        %v2087 = vpop.trf.xlu0
        %v2088 = vpop.trf.xlu0
        %v2089 = vpop.trf.xlu0
        %v2090 = vpop.trf.xlu0
        %v2091 = vpop.trf.xlu0
        %v2092 = vpop.trf.xlu0
        %v2093 = vpop.trf.xlu0
        %v2094 = vpop.trf.xlu0
        %v2095 = vpop.trf.xlu0
        %v2096 = vpop.trf.xlu0
        %v2097 = vpop.trf.xlu0
        %v2098 = vpop.trf.xlu0
        %v2099 = vpop.trf.xlu0
        %v2100 = vpop.trf.xlu0
        %2101 = vxpose.xlu0.b32.start [1/16] %v1986, 128
        %2102 = vxpose.xlu0.b32.cont [2/16] 0.0, 128
        %2103 = vxpose.xlu0.b32.cont [3/16] 0.0, 128
        %2104 = vxpose.xlu0.b32.cont [4/16] 0.0, 128
        %2105 = vxpose.xlu0.b32.cont [5/16] 0.0, 128
        %2106 = vxpose.xlu0.b32.cont [6/16] 0.0, 128
        %2107 = vxpose.xlu0.b32.cont [7/16] 0.0, 128
        %2108 = vxpose.xlu0.b32.cont [8/16] 0.0, 128
        %2109 = vxpose.xlu0.b32.cont [9/16] 0.0, 128
        %2110 = vxpose.xlu0.b32.cont [10/16] 0.0, 128
        %2111 = vxpose.xlu0.b32.cont [11/16] 0.0, 128
        %2112 = vxpose.xlu0.b32.cont [12/16] 0.0, 128
        %2113 = vxpose.xlu0.b32.cont [13/16] 0.0, 128
        %2114 = vxpose.xlu0.b32.cont [14/16] 0.0, 128
        %2115 = vxpose.xlu0.b32.cont [15/16] 0.0, 128
        %2116 = vxpose.xlu0.b32.end [16/16] 0.0, 128
        %v2117 = vpop.trf.xlu0
        %v2118 = vpop.trf.xlu0
        %v2119 = vpop.trf.xlu0
        %v2120 = vpop.trf.xlu0
        %v2121 = vpop.trf.xlu0
        %v2122 = vpop.trf.xlu0
        %v2123 = vpop.trf.xlu0
        %v2124 = vpop.trf.xlu0
        %v2125 = vpop.trf.xlu0
        %v2126 = vpop.trf.xlu0
        %v2127 = vpop.trf.xlu0
        %v2128 = vpop.trf.xlu0
        %v2129 = vpop.trf.xlu0
        %v2130 = vpop.trf.xlu0
        %v2131 = vpop.trf.xlu0
        %v2132 = vpop.trf.xlu0
        %2133 = vxpose.xlu0.b32.start [1/16] %v2032, 128
        %2134 = vxpose.xlu0.b32.cont [2/16] 0.0, 128
        %2135 = vxpose.xlu0.b32.cont [3/16] 0.0, 128
        %2136 = vxpose.xlu0.b32.cont [4/16] 0.0, 128
        %2137 = vxpose.xlu0.b32.cont [5/16] 0.0, 128
        %2138 = vxpose.xlu0.b32.cont [6/16] 0.0, 128
        %2139 = vxpose.xlu0.b32.cont [7/16] 0.0, 128
        %2140 = vxpose.xlu0.b32.cont [8/16] 0.0, 128
        %2141 = vxpose.xlu0.b32.cont [9/16] 0.0, 128
        %2142 = vxpose.xlu0.b32.cont [10/16] 0.0, 128
        %2143 = vxpose.xlu0.b32.cont [11/16] 0.0, 128
        %2144 = vxpose.xlu0.b32.cont [12/16] 0.0, 128
        %2145 = vxpose.xlu0.b32.cont [13/16] 0.0, 128
        %2146 = vxpose.xlu0.b32.cont [14/16] 0.0, 128
        %2147 = vxpose.xlu0.b32.cont [15/16] 0.0, 128
        %2148 = vxpose.xlu0.b32.end [16/16] 0.0, 128
        %v2149 = vpop.trf.xlu0
        %v2150 = vpop.trf.xlu0
        %v2151 = vpop.trf.xlu0
        %v2152 = vpop.trf.xlu0
        %v2153 = vpop.trf.xlu0
        %v2154 = vpop.trf.xlu0
        %v2155 = vpop.trf.xlu0
        %v2156 = vpop.trf.xlu0
        %v2157 = vpop.trf.xlu0
        %v2158 = vpop.trf.xlu0
        %v2159 = vpop.trf.xlu0
        %v2160 = vpop.trf.xlu0
        %v2161 = vpop.trf.xlu0
        %v2162 = vpop.trf.xlu0
        %v2163 = vpop.trf.xlu0
        %v2164 = vpop.trf.xlu0
        %v2165 = vcombine.low %v2053, %v2117
        %v2166 = vcombine.high %v2053, %v2117
        %v2168 = vunpack.c.l.s4 1983009808
        %v2169 = vunpack.c.0.s8 %v2168
        %v2170 = vlaneseq
        %v2171 = vshrl.u32 %v2170, 7
        %v2172 = vsub.s32 %v2169, %v2171
        %v2173 = vrot.slane %v2165, %v2172
        %v2175 = vunpack.c.l.s4 1983009808
        %v2176 = vunpack.c.0.s8 %v2175
        %v2177 = vlaneseq
        %v2178 = vshrl.u32 %v2177, 7
        %v2179 = vsub.s32 %v2176, %v2178
        %v2180 = vrot.slane %v2166, %v2179
        %v2181 = vcombine.low %v2085, %v2149
        %v2182 = vcombine.high %v2085, %v2149
        %v2184 = vunpack.c.l.s4 1983009808
        %v2185 = vunpack.c.0.s8 %v2184
        %v2186 = vlaneseq
        %v2187 = vshrl.u32 %v2186, 7
        %v2188 = vsub.s32 %v2185, %v2187
        %v2189 = vrot.slane %v2181, %v2188
        %v2191 = vunpack.c.l.s4 1983009808
        %v2192 = vunpack.c.0.s8 %v2191
        %v2193 = vlaneseq
        %v2194 = vshrl.u32 %v2193, 7
        %v2195 = vsub.s32 %v2192, %v2194
        %v2196 = vrot.slane %v2182, %v2195
        %v2197 = vcombine.low %v2173, %v2189
        %v2198 = vcombine.high %v2173, %v2189
        %v2200 = vunpack.c.l.s4 1934713408
        %v2201 = vunpack.c.0.s8 %v2200
        %v2202 = vlaneseq
        %v2203 = vshrl.u32 %v2202, 7
        %v2204 = vsub.s32 %v2201, %v2203
        %v2205 = vrot.slane %v2197, %v2204
        %v2207 = vunpack.c.l.s4 1934713408
        %v2208 = vunpack.c.0.s8 %v2207
        %v2209 = vlaneseq
        %v2210 = vshrl.u32 %v2209, 7
        %v2211 = vsub.s32 %v2208, %v2210
        %v2212 = vrot.slane %v2198, %v2211
        %v2213 = vcombine.low %v2180, %v2196
        %v2214 = vcombine.high %v2180, %v2196
        %v2216 = vunpack.c.l.s4 1934713408
        %v2217 = vunpack.c.0.s8 %v2216
        %v2218 = vlaneseq
        %v2219 = vshrl.u32 %v2218, 7
        %v2220 = vsub.s32 %v2217, %v2219
        %v2221 = vrot.slane %v2213, %v2220
        %v2223 = vunpack.c.l.s4 1934713408
        %v2224 = vunpack.c.0.s8 %v2223
        %v2225 = vlaneseq
        %v2226 = vshrl.u32 %v2225, 7
        %v2227 = vsub.s32 %v2224, %v2226
        %v2228 = vrot.slane %v2214, %v2227
        %v2229 = vcombine.high %v2205, 0.0
        %v2230 = vcombine.high %v2212, 0.0
        %v2231 = vcombine.high %v2221, 0.0
        %v2232 = vcombine.high %v2228, 0.0
        %v2233 = vcombine.low %v2205, %v2212
        %v2235 = vunpack.c.l.s4 1983009808
        %v2236 = vunpack.c.0.s8 %v2235
        %v2237 = vlaneseq
        %v2238 = vshrl.u32 %v2237, 7
        %v2239 = vsub.s32 %v2236, %v2238
        %v2240 = vrot.slane %v2233, %v2239
        %v2241 = vcombine.low %v2229, %v2230
        %v2243 = vunpack.c.l.s4 1983009808
        %v2244 = vunpack.c.0.s8 %v2243
        %v2245 = vlaneseq
        %v2246 = vshrl.u32 %v2245, 7
        %v2247 = vsub.s32 %v2244, %v2246
        %v2248 = vrot.slane %v2241, %v2247
        %v2249 = vcombine.low %v2221, %v2228
        %v2251 = vunpack.c.l.s4 1983009808
        %v2252 = vunpack.c.0.s8 %v2251
        %v2253 = vlaneseq
        %v2254 = vshrl.u32 %v2253, 7
        %v2255 = vsub.s32 %v2252, %v2254
        %v2256 = vrot.slane %v2249, %v2255
        %v2257 = vcombine.low %v2231, %v2232
        %v2259 = vunpack.c.l.s4 1983009808
        %v2260 = vunpack.c.0.s8 %v2259
        %v2261 = vlaneseq
        %v2262 = vshrl.u32 %v2261, 7
        %v2263 = vsub.s32 %v2260, %v2262
        %v2264 = vrot.slane %v2257, %v2263
        %v2265 = vcombine.low %v2240, %v2248
        %v2266 = vcombine.high %v2240, %v2248
        %v2268 = vunpack.c.l.s4 1934713408
        %v2269 = vunpack.c.0.s8 %v2268
        %v2270 = vlaneseq
        %v2271 = vshrl.u32 %v2270, 7
        %v2272 = vsub.s32 %v2269, %v2271
        %v2273 = vrot.slane %v2265, %v2272
        %v2275 = vunpack.c.l.s4 1934713408
        %v2276 = vunpack.c.0.s8 %v2275
        %v2277 = vlaneseq
        %v2278 = vshrl.u32 %v2277, 7
        %v2279 = vsub.s32 %v2276, %v2278
        %v2280 = vrot.slane %v2266, %v2279
        %v2281 = vcombine.low %v2256, %v2264
        %v2282 = vcombine.high %v2256, %v2264
        %v2284 = vunpack.c.l.s4 1934713408
        %v2285 = vunpack.c.0.s8 %v2284
        %v2286 = vlaneseq
        %v2287 = vshrl.u32 %v2286, 7
        %v2288 = vsub.s32 %v2285, %v2287
        %v2289 = vrot.slane %v2281, %v2288
        %v2291 = vunpack.c.l.s4 1934713408
        %v2292 = vunpack.c.0.s8 %v2291
        %v2293 = vlaneseq
        %v2294 = vshrl.u32 %v2293, 7
        %v2295 = vsub.s32 %v2292, %v2294
        %v2296 = vrot.slane %v2282, %v2295
        %v2297 = vcombine.low %v2273, %v2289
        %v2298 = vcombine.high %v2273, %v2289
        %v2299 = vcombine.low %v2280, %v2296
        %v2300 = vcombine.high %v2280, %v2296
        %2302 = vrot.lane.b32.xlu0 %v2298, 8
        %v2303 = vpop.permute.xlu0 %2302
        %2306 = vrot.lane.b32.xlu0 %v2299, 16
        %v2307 = vpop.permute.xlu0 %2306
        %2310 = vrot.lane.b32.xlu0 %v2300, 24
        %v2311 = vpop.permute.xlu0 %2310
        %v2313 = vsel %vm991, %v2297, %v2303
        %v2314 = vsel %vm1190, %v2313, %v2307
        %vm2315 = vcmask 195584
        %v2316 = vsel %vm2315, %v2314, %v2311
        %v2317 = vld [vmem:[#allocation2] sm:$0xff]
        %v2318 = vld [vmem:[#allocation2 + $0x8] sm:$0xff]
        %v2319 = vpack.c.bf16 %v2316, %v2316
        %v2320 = vld [vmem:[%s7] sm:$0xff]
        %v2321 = vld [vmem:[%s7 + $0x8] sm:$0xff]
        %v2322 = vld [vmem:[%s7 + $0x10] sm:$0xff]
        %v2323 = vld [vmem:[%s7 + $0x18] sm:$0xff]
        %v2328 = vunpack.c.l.b16 %v2320
        %v2329 = vunpack.c.h.b16 %v2320
        %v2330 = vunpack.c.l.b16 %v2321
        %v2331 = vunpack.c.h.b16 %v2321
        %v2332 = vunpack.c.l.b16 %v2322
        %v2333 = vunpack.c.h.b16 %v2322
        %v2334 = vunpack.c.l.b16 %v2323
        %v2335 = vunpack.c.h.b16 %v2323
        %v2336 = vpack.c.b16 %v2330, %v2328
        %v2337 = vpack.c.b16 %v2331, %v2329
        %v2338 = vpack.c.b16 %v2334, %v2332
        %v2339 = vpack.c.b16 %v2335, %v2333
        %v2345 = vsel %vm410, %v2319, 0
        %2347 = vmatprep.subr.bf16.mxu0 0
        %2348 = vmatpush1.bf16.msra.mxu0 0
        %2349 = vmatprep.subr.bf16.mxu0 0
        %2350 = vmatpush1.bf16.msra.mxu0 0
        %2351 = vmatprep.subr.bf16.mxu0 0
        %2352 = vmatpush1.bf16.msra.mxu0 0
        %2353 = vmatprep.subr.bf16.mxu0 0
        %2354 = vmatpush1.bf16.msra.mxu0 0
        %2355 = vmatprep.subr.bf16.mxu0 0
        %2356 = vmatpush1.bf16.msra.mxu0 0
        %2357 = vmatprep.subr.bf16.mxu0 0
        %2358 = vmatpush1.bf16.msra.mxu0 0
        %2359 = vmatprep.subr.bf16.mxu0 %v2339
        %2360 = vmatpush1.bf16.msra.mxu0 %v2338
        %2361 = vmatprep.subr.bf16.mxu0 %v2337
        %2362 = vmatpush1.bf16.msra.mxu0 %v2336
        %2363 = vmatprep.subr.bf16.mxu0 0
        %2364 = vmatpush2.bf16.msra.mxu0 0
        %2365 = vmatprep.subr.bf16.mxu0 0
        %2366 = vmatpush2.bf16.msra.mxu0 0
        %2367 = vmatprep.subr.bf16.mxu0 0
        %2368 = vmatpush2.bf16.msra.mxu0 0
        %2369 = vmatprep.subr.bf16.mxu0 0
        %2370 = vmatpush2.bf16.msra.mxu0 0
        %2371 = vmatprep.subr.bf16.mxu0 0
        %2372 = vmatpush2.bf16.msra.mxu0 0
        %2373 = vmatprep.subr.bf16.mxu0 0
        %2374 = vmatpush2.bf16.msra.mxu0 0
        %2375 = vmatprep.subr.bf16.mxu0 0
        %2376 = vmatpush2.bf16.msra.mxu0 0
        %2377 = vmatprep.subr.bf16.mxu0 0
        %2378 = vmatpush2.bf16.msra.mxu0 0
        %2379 = vmatprep.mubr.bf16.mxu0 0
        %2380 = vmatmul.mubr.bf16.gmra.mxu0 %v2345
        %v2381 = vpop.f32.mrf.mxu0
        %v2382 = vadd.f32 0.0, %v2381
        %v2383 = vpop.f32.mrf.mxu0
        %v2384 = vadd.f32 0.0, %v2383
        %v2385 = vpop.f32.mrf.mxu0
        %v2386 = vpop.f32.mrf.mxu0
        %2387 = vdwg.mxu0
        %v2388 = vadd.f32 %v2317, %v2382
        %v2389 = vadd.f32 %v2318, %v2384
        %2390 = vst [vmem:[#allocation2] sm:$0xff] %v2388
        %2391 = vst [vmem:[#allocation2 + $0x8] sm:$0xff] %v2389
        %v2392 = vlaneseq
        %v2393 = vshrl.u32 %v2392, 7
        %v2394 = vsub.s32 1, %v2393
        %v2395 = vrot.slane %v1179, %v2394
        %2397 = vrot.lane.b32.xlu0 %v2395, 16
        %v2398 = vpop.permute.xlu0 %2397
        %v2400 = vadd.f32 %v1034, %v2398
        %v2401 = vadd.f32 %v1080, %v2398
        %v2402 = vadd.f32 %v1126, %v2398
        %v2403 = vadd.f32 %v1172, %v2398
        %vm2404 = vcmask 261248
        %v2405 = vsel %vm2404, %v2400, -inf
        %2406 = vmax.xlane.f32.xlu0 %v2405
        %v2407 = vpop.xlane.xlu0 %2406
        %v2408 = vsel %vm2404, %v2401, -inf
        %2409 = vmax.xlane.f32.xlu0 %v2408
        %v2410 = vpop.xlane.xlu0 %2409
        %v2411 = vsel %vm2404, %v2402, -inf
        %2412 = vmax.xlane.f32.xlu0 %v2411
        %v2413 = vpop.xlane.xlu0 %2412
        %v2414 = vsel %vm2404, %v2403, -inf
        %2415 = vmax.xlane.f32.xlu0 %v2414
        %v2416 = vpop.xlane.xlu0 %2415
        %v2417 = vsub.f32 %v2400, %v2407
        %v2418 = vsub.f32 %v2401, %v2410
        %v2419 = vsub.f32 %v2402, %v2413
        %v2420 = vsub.f32 %v2403, %v2416
        %v2421 = vmul.f32 %v2417, 1.442695
        %v2422 = vpow.pop %v2421
        %v2423 = vmul.f32 %v2418, 1.442695
        %v2424 = vpow.pop %v2423
        %v2425 = vmul.f32 %v2419, 1.442695
        %v2426 = vpow.pop %v2425
        %v2427 = vmul.f32 %v2420, 1.442695
        %v2428 = vpow.pop %v2427
        %2433 = vrot.lane.b32.xlu0 %v2422, 112
        %v2434 = vpop.permute.xlu0 %2433
        %2435 = vrot.lane.b32.xlu0 %v2424, 112
        %v2436 = vpop.permute.xlu0 %2435
        %2437 = vrot.lane.b32.xlu0 %v2426, 112
        %v2438 = vpop.permute.xlu0 %2437
        %2439 = vrot.lane.b32.xlu0 %v2428, 112
        %v2440 = vpop.permute.xlu0 %2439
        %v2445 = vsel %vm1190, %v2434, 0.0
        %2446 = vadd.xlane.f32.xlu0 %v2445
        %v2447 = vpop.xlane.xlu0 %2446
        %v2448 = vsel %vm1190, %v2436, 0.0
        %2449 = vadd.xlane.f32.xlu0 %v2448
        %v2450 = vpop.xlane.xlu0 %2449
        %v2451 = vsel %vm1190, %v2438, 0.0
        %2452 = vadd.xlane.f32.xlu0 %v2451
        %v2453 = vpop.xlane.xlu0 %2452
        %v2454 = vsel %vm1190, %v2440, 0.0
        %2455 = vadd.xlane.f32.xlu0 %v2454
        %v2456 = vpop.xlane.xlu0 %2455
        %v2457 = vrcp.pop %v2447
        %v2458 = vrcp.pop %v2450
        %v2459 = vrcp.pop %v2453
        %v2460 = vrcp.pop %v2456
        %v2461 = vmul.f32 %v2422, %v2457
        %v2462 = vmul.f32 %v2424, %v2458
        %v2463 = vmul.f32 %v2426, %v2459
        %v2464 = vmul.f32 %v2428, %v2460
        %v2465 = vpack.c.bf16 %v2461, %v2461
        %v2466 = vpack.c.bf16 %v2462, %v2462
        %v2467 = vpack.c.bf16 %v2463, %v2463
        %v2468 = vpack.c.bf16 %v2464, %v2464
        %2469 = vxpose.xlu0.c.b16.start [1/8] %v833, 128
        %2470 = vxpose.xlu0.c.b16.cont [2/8] 0, 128
        %2471 = vxpose.xlu0.c.b16.cont [3/8] 0, 128
        %2472 = vxpose.xlu0.c.b16.cont [4/8] 0, 128
        %2473 = vxpose.xlu0.c.b16.cont [5/8] 0, 128
        %2474 = vxpose.xlu0.c.b16.cont [6/8] 0, 128
        %2475 = vxpose.xlu0.c.b16.cont [7/8] 0, 128
        %2476 = vxpose.xlu0.c.b16.end [8/8] 0, 128
        %v2477 = vpop.trf.xlu0
        %v2478 = vpop.trf.xlu0
        %v2479 = vpop.trf.xlu0
        %v2480 = vpop.trf.xlu0
        %v2481 = vpop.trf.xlu0
        %v2482 = vpop.trf.xlu0
        %v2483 = vpop.trf.xlu0
        %v2484 = vpop.trf.xlu0
        %2485 = vxpose.xlu0.c.b16.start [1/8] %v899, 128
        %2486 = vxpose.xlu0.c.b16.cont [2/8] 0, 128
        %2487 = vxpose.xlu0.c.b16.cont [3/8] 0, 128
        %2488 = vxpose.xlu0.c.b16.cont [4/8] 0, 128
        %2489 = vxpose.xlu0.c.b16.cont [5/8] 0, 128
        %2490 = vxpose.xlu0.c.b16.cont [6/8] 0, 128
        %2491 = vxpose.xlu0.c.b16.cont [7/8] 0, 128
        %2492 = vxpose.xlu0.c.b16.end [8/8] 0, 128
        %v2493 = vpop.trf.xlu0
        %v2494 = vpop.trf.xlu0
        %v2495 = vpop.trf.xlu0
        %v2496 = vpop.trf.xlu0
        %v2497 = vpop.trf.xlu0
        %v2498 = vpop.trf.xlu0
        %v2499 = vpop.trf.xlu0
        %v2500 = vpop.trf.xlu0
        %2501 = vxpose.xlu0.c.b16.start [1/8] %v857, 128
        %2502 = vxpose.xlu0.c.b16.cont [2/8] 0, 128
        %2503 = vxpose.xlu0.c.b16.cont [3/8] 0, 128
        %2504 = vxpose.xlu0.c.b16.cont [4/8] 0, 128
        %2505 = vxpose.xlu0.c.b16.cont [5/8] 0, 128
        %2506 = vxpose.xlu0.c.b16.cont [6/8] 0, 128
        %2507 = vxpose.xlu0.c.b16.cont [7/8] 0, 128
        %2508 = vxpose.xlu0.c.b16.end [8/8] 0, 128
        %v2509 = vpop.trf.xlu0
        %v2510 = vpop.trf.xlu0
        %v2511 = vpop.trf.xlu0
        %v2512 = vpop.trf.xlu0
        %v2513 = vpop.trf.xlu0
        %v2514 = vpop.trf.xlu0
        %v2515 = vpop.trf.xlu0
        %v2516 = vpop.trf.xlu0
        %2517 = vxpose.xlu0.c.b16.start [1/8] %v923, 128
        %2518 = vxpose.xlu0.c.b16.cont [2/8] 0, 128
        %2519 = vxpose.xlu0.c.b16.cont [3/8] 0, 128
        %2520 = vxpose.xlu0.c.b16.cont [4/8] 0, 128
        %2521 = vxpose.xlu0.c.b16.cont [5/8] 0, 128
        %2522 = vxpose.xlu0.c.b16.cont [6/8] 0, 128
        %2523 = vxpose.xlu0.c.b16.cont [7/8] 0, 128
        %2524 = vxpose.xlu0.c.b16.end [8/8] 0, 128
        %v2525 = vpop.trf.xlu0
        %v2526 = vpop.trf.xlu0
        %v2527 = vpop.trf.xlu0
        %v2528 = vpop.trf.xlu0
        %v2529 = vpop.trf.xlu0
        %v2530 = vpop.trf.xlu0
        %v2531 = vpop.trf.xlu0
        %v2532 = vpop.trf.xlu0
        %2533 = vxpose.xlu0.c.b16.start [1/8] %v840, 128
        %2534 = vxpose.xlu0.c.b16.cont [2/8] 0, 128
        %2535 = vxpose.xlu0.c.b16.cont [3/8] 0, 128
        %2536 = vxpose.xlu0.c.b16.cont [4/8] 0, 128
        %2537 = vxpose.xlu0.c.b16.cont [5/8] 0, 128
        %2538 = vxpose.xlu0.c.b16.cont [6/8] 0, 128
        %2539 = vxpose.xlu0.c.b16.cont [7/8] 0, 128
        %2540 = vxpose.xlu0.c.b16.end [8/8] 0, 128
        %v2541 = vpop.trf.xlu0
        %v2542 = vpop.trf.xlu0
        %v2543 = vpop.trf.xlu0
        %v2544 = vpop.trf.xlu0
        %v2545 = vpop.trf.xlu0
        %v2546 = vpop.trf.xlu0
        %v2547 = vpop.trf.xlu0
        %v2548 = vpop.trf.xlu0
        %2549 = vxpose.xlu0.c.b16.start [1/8] %v906, 128
        %2550 = vxpose.xlu0.c.b16.cont [2/8] 0, 128
        %2551 = vxpose.xlu0.c.b16.cont [3/8] 0, 128
        %2552 = vxpose.xlu0.c.b16.cont [4/8] 0, 128
        %2553 = vxpose.xlu0.c.b16.cont [5/8] 0, 128
        %2554 = vxpose.xlu0.c.b16.cont [6/8] 0, 128
        %2555 = vxpose.xlu0.c.b16.cont [7/8] 0, 128
        %2556 = vxpose.xlu0.c.b16.end [8/8] 0, 128
        %v2557 = vpop.trf.xlu0
        %v2558 = vpop.trf.xlu0
        %v2559 = vpop.trf.xlu0
        %v2560 = vpop.trf.xlu0
        %v2561 = vpop.trf.xlu0
        %v2562 = vpop.trf.xlu0
        %v2563 = vpop.trf.xlu0
        %v2564 = vpop.trf.xlu0
        %2565 = vxpose.xlu0.c.b16.start [1/8] %v858, 128
        %2566 = vxpose.xlu0.c.b16.cont [2/8] 0, 128
        %2567 = vxpose.xlu0.c.b16.cont [3/8] 0, 128
        %2568 = vxpose.xlu0.c.b16.cont [4/8] 0, 128
        %2569 = vxpose.xlu0.c.b16.cont [5/8] 0, 128
        %2570 = vxpose.xlu0.c.b16.cont [6/8] 0, 128
        %2571 = vxpose.xlu0.c.b16.cont [7/8] 0, 128
        %2572 = vxpose.xlu0.c.b16.end [8/8] 0, 128
        %v2573 = vpop.trf.xlu0
        %v2574 = vpop.trf.xlu0
        %v2575 = vpop.trf.xlu0
        %v2576 = vpop.trf.xlu0
        %v2577 = vpop.trf.xlu0
        %v2578 = vpop.trf.xlu0
        %v2579 = vpop.trf.xlu0
        %v2580 = vpop.trf.xlu0
        %2581 = vxpose.xlu0.c.b16.start [1/8] %v924, 128
        %2582 = vxpose.xlu0.c.b16.cont [2/8] 0, 128
        %2583 = vxpose.xlu0.c.b16.cont [3/8] 0, 128
        %2584 = vxpose.xlu0.c.b16.cont [4/8] 0, 128
        %2585 = vxpose.xlu0.c.b16.cont [5/8] 0, 128
        %2586 = vxpose.xlu0.c.b16.cont [6/8] 0, 128
        %2587 = vxpose.xlu0.c.b16.cont [7/8] 0, 128
        %2588 = vxpose.xlu0.c.b16.end [8/8] 0, 128
        %v2589 = vpop.trf.xlu0
        %v2590 = vpop.trf.xlu0
        %v2591 = vpop.trf.xlu0
        %v2592 = vpop.trf.xlu0
        %v2593 = vpop.trf.xlu0
        %v2594 = vpop.trf.xlu0
        %v2595 = vpop.trf.xlu0
        %v2596 = vpop.trf.xlu0
        %2597 = vxpose.xlu0.c.b16.start [1/8] %v849, 128
        %2598 = vxpose.xlu0.c.b16.cont [2/8] 0, 128
        %2599 = vxpose.xlu0.c.b16.cont [3/8] 0, 128
        %2600 = vxpose.xlu0.c.b16.cont [4/8] 0, 128
        %2601 = vxpose.xlu0.c.b16.cont [5/8] 0, 128
        %2602 = vxpose.xlu0.c.b16.cont [6/8] 0, 128
        %2603 = vxpose.xlu0.c.b16.cont [7/8] 0, 128
        %2604 = vxpose.xlu0.c.b16.end [8/8] 0, 128
        %v2605 = vpop.trf.xlu0
        %v2606 = vpop.trf.xlu0
        %v2607 = vpop.trf.xlu0
        %v2608 = vpop.trf.xlu0
        %v2609 = vpop.trf.xlu0
        %v2610 = vpop.trf.xlu0
        %v2611 = vpop.trf.xlu0
        %v2612 = vpop.trf.xlu0
        %2613 = vxpose.xlu0.c.b16.start [1/8] %v915, 128
        %2614 = vxpose.xlu0.c.b16.cont [2/8] 0, 128
        %2615 = vxpose.xlu0.c.b16.cont [3/8] 0, 128
        %2616 = vxpose.xlu0.c.b16.cont [4/8] 0, 128
        %2617 = vxpose.xlu0.c.b16.cont [5/8] 0, 128
        %2618 = vxpose.xlu0.c.b16.cont [6/8] 0, 128
        %2619 = vxpose.xlu0.c.b16.cont [7/8] 0, 128
        %2620 = vxpose.xlu0.c.b16.end [8/8] 0, 128
        %v2621 = vpop.trf.xlu0
        %v2622 = vpop.trf.xlu0
        %v2623 = vpop.trf.xlu0
        %v2624 = vpop.trf.xlu0
        %v2625 = vpop.trf.xlu0
        %v2626 = vpop.trf.xlu0
        %v2627 = vpop.trf.xlu0
        %v2628 = vpop.trf.xlu0
        %2629 = vxpose.xlu0.c.b16.start [1/8] %v859, 128
        %2630 = vxpose.xlu0.c.b16.cont [2/8] 0, 128
        %2631 = vxpose.xlu0.c.b16.cont [3/8] 0, 128
        %2632 = vxpose.xlu0.c.b16.cont [4/8] 0, 128
        %2633 = vxpose.xlu0.c.b16.cont [5/8] 0, 128
        %2634 = vxpose.xlu0.c.b16.cont [6/8] 0, 128
        %2635 = vxpose.xlu0.c.b16.cont [7/8] 0, 128
        %2636 = vxpose.xlu0.c.b16.end [8/8] 0, 128
        %v2637 = vpop.trf.xlu0
        %v2638 = vpop.trf.xlu0
        %v2639 = vpop.trf.xlu0
        %v2640 = vpop.trf.xlu0
        %v2641 = vpop.trf.xlu0
        %v2642 = vpop.trf.xlu0
        %v2643 = vpop.trf.xlu0
        %v2644 = vpop.trf.xlu0
        %2645 = vxpose.xlu0.c.b16.start [1/8] %v925, 128
        %2646 = vxpose.xlu0.c.b16.cont [2/8] 0, 128
        %2647 = vxpose.xlu0.c.b16.cont [3/8] 0, 128
        %2648 = vxpose.xlu0.c.b16.cont [4/8] 0, 128
        %2649 = vxpose.xlu0.c.b16.cont [5/8] 0, 128
        %2650 = vxpose.xlu0.c.b16.cont [6/8] 0, 128
        %2651 = vxpose.xlu0.c.b16.cont [7/8] 0, 128
        %2652 = vxpose.xlu0.c.b16.end [8/8] 0, 128
        %v2653 = vpop.trf.xlu0
        %v2654 = vpop.trf.xlu0
        %v2655 = vpop.trf.xlu0
        %v2656 = vpop.trf.xlu0
        %v2657 = vpop.trf.xlu0
        %v2658 = vpop.trf.xlu0
        %v2659 = vpop.trf.xlu0
        %v2660 = vpop.trf.xlu0
        %2661 = vxpose.xlu0.c.b16.start [1/8] %v856, 128
        %2662 = vxpose.xlu0.c.b16.cont [2/8] 0, 128
        %2663 = vxpose.xlu0.c.b16.cont [3/8] 0, 128
        %2664 = vxpose.xlu0.c.b16.cont [4/8] 0, 128
        %2665 = vxpose.xlu0.c.b16.cont [5/8] 0, 128
        %2666 = vxpose.xlu0.c.b16.cont [6/8] 0, 128
        %2667 = vxpose.xlu0.c.b16.cont [7/8] 0, 128
        %2668 = vxpose.xlu0.c.b16.end [8/8] 0, 128
        %v2669 = vpop.trf.xlu0
        %v2670 = vpop.trf.xlu0
        %v2671 = vpop.trf.xlu0
        %v2672 = vpop.trf.xlu0
        %v2673 = vpop.trf.xlu0
        %v2674 = vpop.trf.xlu0
        %v2675 = vpop.trf.xlu0
        %v2676 = vpop.trf.xlu0
        %2677 = vxpose.xlu0.c.b16.start [1/8] %v922, 128
        %2678 = vxpose.xlu0.c.b16.cont [2/8] 0, 128
        %2679 = vxpose.xlu0.c.b16.cont [3/8] 0, 128
        %2680 = vxpose.xlu0.c.b16.cont [4/8] 0, 128
        %2681 = vxpose.xlu0.c.b16.cont [5/8] 0, 128
        %2682 = vxpose.xlu0.c.b16.cont [6/8] 0, 128
        %2683 = vxpose.xlu0.c.b16.cont [7/8] 0, 128
        %2684 = vxpose.xlu0.c.b16.end [8/8] 0, 128
        %v2685 = vpop.trf.xlu0
        %v2686 = vpop.trf.xlu0
        %v2687 = vpop.trf.xlu0
        %v2688 = vpop.trf.xlu0
        %v2689 = vpop.trf.xlu0
        %v2690 = vpop.trf.xlu0
        %v2691 = vpop.trf.xlu0
        %v2692 = vpop.trf.xlu0
        %2693 = vxpose.xlu0.c.b16.start [1/8] %v860, 128
        %2694 = vxpose.xlu0.c.b16.cont [2/8] 0, 128
        %2695 = vxpose.xlu0.c.b16.cont [3/8] 0, 128
        %2696 = vxpose.xlu0.c.b16.cont [4/8] 0, 128
        %2697 = vxpose.xlu0.c.b16.cont [5/8] 0, 128
        %2698 = vxpose.xlu0.c.b16.cont [6/8] 0, 128
        %2699 = vxpose.xlu0.c.b16.cont [7/8] 0, 128
        %2700 = vxpose.xlu0.c.b16.end [8/8] 0, 128
        %v2701 = vpop.trf.xlu0
        %v2702 = vpop.trf.xlu0
        %v2703 = vpop.trf.xlu0
        %v2704 = vpop.trf.xlu0
        %v2705 = vpop.trf.xlu0
        %v2706 = vpop.trf.xlu0
        %v2707 = vpop.trf.xlu0
        %v2708 = vpop.trf.xlu0
        %2709 = vxpose.xlu0.c.b16.start [1/8] %v926, 128
        %2710 = vxpose.xlu0.c.b16.cont [2/8] 0, 128
        %2711 = vxpose.xlu0.c.b16.cont [3/8] 0, 128
        %2712 = vxpose.xlu0.c.b16.cont [4/8] 0, 128
        %2713 = vxpose.xlu0.c.b16.cont [5/8] 0, 128
        %2714 = vxpose.xlu0.c.b16.cont [6/8] 0, 128
        %2715 = vxpose.xlu0.c.b16.cont [7/8] 0, 128
        %2716 = vxpose.xlu0.c.b16.end [8/8] 0, 128
        %v2717 = vpop.trf.xlu0
        %v2718 = vpop.trf.xlu0
        %v2719 = vpop.trf.xlu0
        %v2720 = vpop.trf.xlu0
        %v2721 = vpop.trf.xlu0
        %v2722 = vpop.trf.xlu0
        %v2723 = vpop.trf.xlu0
        %v2724 = vpop.trf.xlu0
        %v2725 = vcombine.low %v2477, %v2541
        %v2727 = vunpack.c.l.s4 1983009808
        %v2728 = vunpack.c.0.s8 %v2727
        %v2729 = vlaneseq
        %v2730 = vshrl.u32 %v2729, 7
        %v2731 = vsub.s32 %v2728, %v2730
        %v2732 = vrot.slane %v2725, %v2731
        %v2733 = vcombine.low %v2509, %v2573
        %v2735 = vunpack.c.l.s4 1983009808
        %v2736 = vunpack.c.0.s8 %v2735
        %v2737 = vlaneseq
        %v2738 = vshrl.u32 %v2737, 7
        %v2739 = vsub.s32 %v2736, %v2738
        %v2740 = vrot.slane %v2733, %v2739
        %v2741 = vcombine.low %v2605, %v2669
        %v2743 = vunpack.c.l.s4 1983009808
        %v2744 = vunpack.c.0.s8 %v2743
        %v2745 = vlaneseq
        %v2746 = vshrl.u32 %v2745, 7
        %v2747 = vsub.s32 %v2744, %v2746
        %v2748 = vrot.slane %v2741, %v2747
        %v2749 = vcombine.low %v2637, %v2701
        %v2751 = vunpack.c.l.s4 1983009808
        %v2752 = vunpack.c.0.s8 %v2751
        %v2753 = vlaneseq
        %v2754 = vshrl.u32 %v2753, 7
        %v2755 = vsub.s32 %v2752, %v2754
        %v2756 = vrot.slane %v2749, %v2755
        %v2757 = vcombine.low %v2732, %v2740
        %v2758 = vcombine.high %v2732, %v2740
        %v2760 = vunpack.c.l.s4 1934713408
        %v2761 = vunpack.c.0.s8 %v2760
        %v2762 = vlaneseq
        %v2763 = vshrl.u32 %v2762, 7
        %v2764 = vsub.s32 %v2761, %v2763
        %v2765 = vrot.slane %v2757, %v2764
        %v2767 = vunpack.c.l.s4 1934713408
        %v2768 = vunpack.c.0.s8 %v2767
        %v2769 = vlaneseq
        %v2770 = vshrl.u32 %v2769, 7
        %v2771 = vsub.s32 %v2768, %v2770
        %v2772 = vrot.slane %v2758, %v2771
        %v2773 = vcombine.low %v2748, %v2756
        %v2774 = vcombine.high %v2748, %v2756
        %v2776 = vunpack.c.l.s4 1934713408
        %v2777 = vunpack.c.0.s8 %v2776
        %v2778 = vlaneseq
        %v2779 = vshrl.u32 %v2778, 7
        %v2780 = vsub.s32 %v2777, %v2779
        %v2781 = vrot.slane %v2773, %v2780
        %v2783 = vunpack.c.l.s4 1934713408
        %v2784 = vunpack.c.0.s8 %v2783
        %v2785 = vlaneseq
        %v2786 = vshrl.u32 %v2785, 7
        %v2787 = vsub.s32 %v2784, %v2786
        %v2788 = vrot.slane %v2774, %v2787
        %v2789 = vcombine.low %v2765, %v2781
        %v2790 = vcombine.high %v2765, %v2781
        %v2791 = vcombine.low %v2772, %v2788
        %v2792 = vcombine.high %v2772, %v2788
        %v2793 = vcombine.low %v2493, %v2557
        %v2795 = vunpack.c.l.s4 1983009808
        %v2796 = vunpack.c.0.s8 %v2795
        %v2797 = vlaneseq
        %v2798 = vshrl.u32 %v2797, 7
        %v2799 = vsub.s32 %v2796, %v2798
        %v2800 = vrot.slane %v2793, %v2799
        %v2801 = vcombine.low %v2525, %v2589
        %v2803 = vunpack.c.l.s4 1983009808
        %v2804 = vunpack.c.0.s8 %v2803
        %v2805 = vlaneseq
        %v2806 = vshrl.u32 %v2805, 7
        %v2807 = vsub.s32 %v2804, %v2806
        %v2808 = vrot.slane %v2801, %v2807
        %v2809 = vcombine.low %v2621, %v2685
        %v2811 = vunpack.c.l.s4 1983009808
        %v2812 = vunpack.c.0.s8 %v2811
        %v2813 = vlaneseq
        %v2814 = vshrl.u32 %v2813, 7
        %v2815 = vsub.s32 %v2812, %v2814
        %v2816 = vrot.slane %v2809, %v2815
        %v2817 = vcombine.low %v2653, %v2717
        %v2819 = vunpack.c.l.s4 1983009808
        %v2820 = vunpack.c.0.s8 %v2819
        %v2821 = vlaneseq
        %v2822 = vshrl.u32 %v2821, 7
        %v2823 = vsub.s32 %v2820, %v2822
        %v2824 = vrot.slane %v2817, %v2823
        %v2825 = vcombine.low %v2800, %v2808
        %v2826 = vcombine.high %v2800, %v2808
        %v2828 = vunpack.c.l.s4 1934713408
        %v2829 = vunpack.c.0.s8 %v2828
        %v2830 = vlaneseq
        %v2831 = vshrl.u32 %v2830, 7
        %v2832 = vsub.s32 %v2829, %v2831
        %v2833 = vrot.slane %v2825, %v2832
        %v2835 = vunpack.c.l.s4 1934713408
        %v2836 = vunpack.c.0.s8 %v2835
        %v2837 = vlaneseq
        %v2838 = vshrl.u32 %v2837, 7
        %v2839 = vsub.s32 %v2836, %v2838
        %v2840 = vrot.slane %v2826, %v2839
        %v2841 = vcombine.low %v2816, %v2824
        %v2842 = vcombine.high %v2816, %v2824
        %v2844 = vunpack.c.l.s4 1934713408
        %v2845 = vunpack.c.0.s8 %v2844
        %v2846 = vlaneseq
        %v2847 = vshrl.u32 %v2846, 7
        %v2848 = vsub.s32 %v2845, %v2847
        %v2849 = vrot.slane %v2841, %v2848
        %v2851 = vunpack.c.l.s4 1934713408
        %v2852 = vunpack.c.0.s8 %v2851
        %v2853 = vlaneseq
        %v2854 = vshrl.u32 %v2853, 7
        %v2855 = vsub.s32 %v2852, %v2854
        %v2856 = vrot.slane %v2842, %v2855
        %v2857 = vcombine.low %v2833, %v2849
        %v2858 = vcombine.high %v2833, %v2849
        %v2859 = vcombine.low %v2840, %v2856
        %v2860 = vcombine.high %v2840, %v2856
        %v2863 = vpack.i.b16 %v2857, %v2789
        %v2865 = vshrl.u32 %v2789, 16
        %v2866 = vshrl.u32 %v2857, 16
        %v2867 = vpack.i.b16 %v2866, %v2865
        %v2871 = vpack.i.b16 %v2858, %v2790
        %v2873 = vshrl.u32 %v2790, 16
        %v2874 = vshrl.u32 %v2858, 16
        %v2875 = vpack.i.b16 %v2874, %v2873
        %v2879 = vpack.i.b16 %v2859, %v2791
        %v2881 = vshrl.u32 %v2791, 16
        %v2882 = vshrl.u32 %v2859, 16
        %v2883 = vpack.i.b16 %v2882, %v2881
        %v2887 = vpack.i.b16 %v2860, %v2792
        %v2889 = vshrl.u32 %v2792, 16
        %v2890 = vshrl.u32 %v2860, 16
        %v2891 = vpack.i.b16 %v2890, %v2889
        %2893 = vxpose.xlu0.c.b16.start [1/8] %v2863, 128
        %2894 = vxpose.xlu0.c.b16.cont [2/8] 0, 128
        %2895 = vxpose.xlu0.c.b16.cont [3/8] 0, 128
        %2896 = vxpose.xlu0.c.b16.cont [4/8] 0, 128
        %2897 = vxpose.xlu0.c.b16.cont [5/8] 0, 128
        %2898 = vxpose.xlu0.c.b16.cont [6/8] 0, 128
        %2899 = vxpose.xlu0.c.b16.cont [7/8] 0, 128
        %2900 = vxpose.xlu0.c.b16.end [8/8] 0, 128
        %v2901 = vpop.trf.xlu0
        %v2902 = vpop.trf.xlu0
        %v2903 = vpop.trf.xlu0
        %v2904 = vpop.trf.xlu0
        %v2905 = vpop.trf.xlu0
        %v2906 = vpop.trf.xlu0
        %v2907 = vpop.trf.xlu0
        %v2908 = vpop.trf.xlu0
        %2909 = vxpose.xlu0.c.b16.start [1/8] %v2867, 128
        %2910 = vxpose.xlu0.c.b16.cont [2/8] 0, 128
        %2911 = vxpose.xlu0.c.b16.cont [3/8] 0, 128
        %2912 = vxpose.xlu0.c.b16.cont [4/8] 0, 128
        %2913 = vxpose.xlu0.c.b16.cont [5/8] 0, 128
        %2914 = vxpose.xlu0.c.b16.cont [6/8] 0, 128
        %2915 = vxpose.xlu0.c.b16.cont [7/8] 0, 128
        %2916 = vxpose.xlu0.c.b16.end [8/8] 0, 128
        %v2917 = vpop.trf.xlu0
        %v2918 = vpop.trf.xlu0
        %v2919 = vpop.trf.xlu0
        %v2920 = vpop.trf.xlu0
        %v2921 = vpop.trf.xlu0
        %v2922 = vpop.trf.xlu0
        %v2923 = vpop.trf.xlu0
        %v2924 = vpop.trf.xlu0
        %2925 = vxpose.xlu0.c.b16.start [1/8] %v2871, 128
        %2926 = vxpose.xlu0.c.b16.cont [2/8] 0, 128
        %2927 = vxpose.xlu0.c.b16.cont [3/8] 0, 128
        %2928 = vxpose.xlu0.c.b16.cont [4/8] 0, 128
        %2929 = vxpose.xlu0.c.b16.cont [5/8] 0, 128
        %2930 = vxpose.xlu0.c.b16.cont [6/8] 0, 128
        %2931 = vxpose.xlu0.c.b16.cont [7/8] 0, 128
        %2932 = vxpose.xlu0.c.b16.end [8/8] 0, 128
        %v2933 = vpop.trf.xlu0
        %v2934 = vpop.trf.xlu0
        %v2935 = vpop.trf.xlu0
        %v2936 = vpop.trf.xlu0
        %v2937 = vpop.trf.xlu0
        %v2938 = vpop.trf.xlu0
        %v2939 = vpop.trf.xlu0
        %v2940 = vpop.trf.xlu0
        %2941 = vxpose.xlu0.c.b16.start [1/8] %v2875, 128
        %2942 = vxpose.xlu0.c.b16.cont [2/8] 0, 128
        %2943 = vxpose.xlu0.c.b16.cont [3/8] 0, 128
        %2944 = vxpose.xlu0.c.b16.cont [4/8] 0, 128
        %2945 = vxpose.xlu0.c.b16.cont [5/8] 0, 128
        %2946 = vxpose.xlu0.c.b16.cont [6/8] 0, 128
        %2947 = vxpose.xlu0.c.b16.cont [7/8] 0, 128
        %2948 = vxpose.xlu0.c.b16.end [8/8] 0, 128
        %v2949 = vpop.trf.xlu0
        %v2950 = vpop.trf.xlu0
        %v2951 = vpop.trf.xlu0
        %v2952 = vpop.trf.xlu0
        %v2953 = vpop.trf.xlu0
        %v2954 = vpop.trf.xlu0
        %v2955 = vpop.trf.xlu0
        %v2956 = vpop.trf.xlu0
        %2957 = vxpose.xlu0.c.b16.start [1/8] %v2879, 128
        %2958 = vxpose.xlu0.c.b16.cont [2/8] 0, 128
        %2959 = vxpose.xlu0.c.b16.cont [3/8] 0, 128
        %2960 = vxpose.xlu0.c.b16.cont [4/8] 0, 128
        %2961 = vxpose.xlu0.c.b16.cont [5/8] 0, 128
        %2962 = vxpose.xlu0.c.b16.cont [6/8] 0, 128
        %2963 = vxpose.xlu0.c.b16.cont [7/8] 0, 128
        %2964 = vxpose.xlu0.c.b16.end [8/8] 0, 128
        %v2965 = vpop.trf.xlu0
        %v2966 = vpop.trf.xlu0
        %v2967 = vpop.trf.xlu0
        %v2968 = vpop.trf.xlu0
        %v2969 = vpop.trf.xlu0
        %v2970 = vpop.trf.xlu0
        %v2971 = vpop.trf.xlu0
        %v2972 = vpop.trf.xlu0
        %2973 = vxpose.xlu0.c.b16.start [1/8] %v2883, 128
        %2974 = vxpose.xlu0.c.b16.cont [2/8] 0, 128
        %2975 = vxpose.xlu0.c.b16.cont [3/8] 0, 128
        %2976 = vxpose.xlu0.c.b16.cont [4/8] 0, 128
        %2977 = vxpose.xlu0.c.b16.cont [5/8] 0, 128
        %2978 = vxpose.xlu0.c.b16.cont [6/8] 0, 128
        %2979 = vxpose.xlu0.c.b16.cont [7/8] 0, 128
        %2980 = vxpose.xlu0.c.b16.end [8/8] 0, 128
        %v2981 = vpop.trf.xlu0
        %v2982 = vpop.trf.xlu0
        %v2983 = vpop.trf.xlu0
        %v2984 = vpop.trf.xlu0
        %v2985 = vpop.trf.xlu0
        %v2986 = vpop.trf.xlu0
        %v2987 = vpop.trf.xlu0
        %v2988 = vpop.trf.xlu0
        %2989 = vxpose.xlu0.c.b16.start [1/8] %v2887, 128
        %2990 = vxpose.xlu0.c.b16.cont [2/8] 0, 128
        %2991 = vxpose.xlu0.c.b16.cont [3/8] 0, 128
        %2992 = vxpose.xlu0.c.b16.cont [4/8] 0, 128
        %2993 = vxpose.xlu0.c.b16.cont [5/8] 0, 128
        %2994 = vxpose.xlu0.c.b16.cont [6/8] 0, 128
        %2995 = vxpose.xlu0.c.b16.cont [7/8] 0, 128
        %2996 = vxpose.xlu0.c.b16.end [8/8] 0, 128
        %v2997 = vpop.trf.xlu0
        %v2998 = vpop.trf.xlu0
        %v2999 = vpop.trf.xlu0
        %v3000 = vpop.trf.xlu0
        %v3001 = vpop.trf.xlu0
        %v3002 = vpop.trf.xlu0
        %v3003 = vpop.trf.xlu0
        %v3004 = vpop.trf.xlu0
        %3005 = vxpose.xlu0.c.b16.start [1/8] %v2891, 128
        %3006 = vxpose.xlu0.c.b16.cont [2/8] 0, 128
        %3007 = vxpose.xlu0.c.b16.cont [3/8] 0, 128
        %3008 = vxpose.xlu0.c.b16.cont [4/8] 0, 128
        %3009 = vxpose.xlu0.c.b16.cont [5/8] 0, 128
        %3010 = vxpose.xlu0.c.b16.cont [6/8] 0, 128
        %3011 = vxpose.xlu0.c.b16.cont [7/8] 0, 128
        %3012 = vxpose.xlu0.c.b16.end [8/8] 0, 128
        %v3013 = vpop.trf.xlu0
        %v3014 = vpop.trf.xlu0
        %v3015 = vpop.trf.xlu0
        %v3016 = vpop.trf.xlu0
        %v3017 = vpop.trf.xlu0
        %v3018 = vpop.trf.xlu0
        %v3019 = vpop.trf.xlu0
        %v3020 = vpop.trf.xlu0
        %v3021 = vcombine.low %v2901, %v2965
        %v3023 = vunpack.c.l.s4 1983009808
        %v3024 = vunpack.c.0.s8 %v3023
        %v3025 = vlaneseq
        %v3026 = vshrl.u32 %v3025, 7
        %v3027 = vsub.s32 %v3024, %v3026
        %v3028 = vrot.slane %v3021, %v3027
        %v3029 = vcombine.low %v2933, %v2997
        %v3031 = vunpack.c.l.s4 1983009808
        %v3032 = vunpack.c.0.s8 %v3031
        %v3033 = vlaneseq
        %v3034 = vshrl.u32 %v3033, 7
        %v3035 = vsub.s32 %v3032, %v3034
        %v3036 = vrot.slane %v3029, %v3035
        %v3037 = vcombine.low %v3028, %v3036
        %v3039 = vunpack.c.l.s4 1934713408
        %v3040 = vunpack.c.0.s8 %v3039
        %v3041 = vlaneseq
        %v3042 = vshrl.u32 %v3041, 7
        %v3043 = vsub.s32 %v3040, %v3042
        %v3044 = vrot.slane %v3037, %v3043
        %v3045 = vcombine.high %v3044, 0
        %v3046 = vcombine.low %v2917, %v2981
        %v3048 = vunpack.c.l.s4 1983009808
        %v3049 = vunpack.c.0.s8 %v3048
        %v3050 = vlaneseq
        %v3051 = vshrl.u32 %v3050, 7
        %v3052 = vsub.s32 %v3049, %v3051
        %v3053 = vrot.slane %v3046, %v3052
        %v3054 = vcombine.low %v2949, %v3013
        %v3056 = vunpack.c.l.s4 1983009808
        %v3057 = vunpack.c.0.s8 %v3056
        %v3058 = vlaneseq
        %v3059 = vshrl.u32 %v3058, 7
        %v3060 = vsub.s32 %v3057, %v3059
        %v3061 = vrot.slane %v3054, %v3060
        %v3062 = vcombine.low %v3053, %v3061
        %v3064 = vunpack.c.l.s4 1934713408
        %v3065 = vunpack.c.0.s8 %v3064
        %v3066 = vlaneseq
        %v3067 = vshrl.u32 %v3066, 7
        %v3068 = vsub.s32 %v3065, %v3067
        %v3069 = vrot.slane %v3062, %v3068
        %v3070 = vcombine.high %v3069, 0
        %v3073 = vpack.i.b16 %v3069, %v3044
        %v3074 = vshrl.u32 %v3044, 16
        %v3075 = vshrl.u32 %v3069, 16
        %v3076 = vpack.i.b16 %v3075, %v3074
        %v3079 = vpack.i.b16 %v3070, %v3045
        %v3080 = vshrl.u32 %v3045, 16
        %v3081 = vshrl.u32 %v3070, 16
        %v3082 = vpack.i.b16 %v3081, %v3080
        %3084 = vrot.lane.b32.xlu0 %v2465, 112
        %v3085 = vpop.permute.xlu0 %3084
        %v3087 = vsel %vm1190, %v3073, 0
        %v3090 = vsel %vm1190, %v3085, 0
        %3092 = vmatprep.subr.bf16.mxu0 0
        %3093 = vmatpush1.bf16.xpose.msra.mxu0 0
        %3094 = vmatprep.subr.bf16.mxu0 0
        %3095 = vmatpush1.bf16.xpose.msra.mxu0 0
        %3096 = vmatprep.subr.bf16.mxu0 0
        %3097 = vmatpush1.bf16.xpose.msra.mxu0 0
        %3098 = vmatprep.subr.bf16.mxu0 0
        %3099 = vmatpush1.bf16.xpose.msra.mxu0 0
        %3100 = vmatprep.subr.bf16.mxu0 0
        %3101 = vmatpush1.bf16.xpose.msra.mxu0 0
        %3102 = vmatprep.subr.bf16.mxu0 0
        %3103 = vmatpush1.bf16.xpose.msra.mxu0 0
        %3104 = vmatprep.subr.bf16.mxu0 0
        %3105 = vmatpush1.bf16.xpose.msra.mxu0 0
        %3106 = vmatprep.subr.bf16.mxu0 0
        %3107 = vmatpush1.bf16.xpose.msra.mxu0 %v3090
        %3108 = vmatprep.subr.bf16.mxu0 0
        %3109 = vmatpush2.bf16.xpose.msra.mxu0 0
        %3110 = vmatprep.subr.bf16.mxu0 0
        %3111 = vmatpush2.bf16.xpose.msra.mxu0 0
        %3112 = vmatprep.subr.bf16.mxu0 0
        %3113 = vmatpush2.bf16.xpose.msra.mxu0 0
        %3114 = vmatprep.subr.bf16.mxu0 0
        %3115 = vmatpush2.bf16.xpose.msra.mxu0 0
        %3116 = vmatprep.subr.bf16.mxu0 0
        %3117 = vmatpush2.bf16.xpose.msra.mxu0 0
        %3118 = vmatprep.subr.bf16.mxu0 0
        %3119 = vmatpush2.bf16.xpose.msra.mxu0 0
        %3120 = vmatprep.subr.bf16.mxu0 0
        %3121 = vmatpush2.bf16.xpose.msra.mxu0 0
        %3122 = vmatprep.subr.bf16.mxu0 0
        %3123 = vmatpush2.bf16.xpose.msra.mxu0 0
        %3124 = vmatprep.mubr.bf16.mxu0 0
        %3125 = vmatmul.mubr.bf16.gmra.mxu0 %v3087
        %v3126 = vpop.f32.mrf.mxu0
        %v3127 = vadd.f32 0.0, %v3126
        %v3128 = vpop.f32.mrf.mxu0
        %v3129 = vpop.f32.mrf.mxu0
        %v3130 = vpop.f32.mrf.mxu0
        %3131 = vdwg.mxu0
        %3133 = vrot.lane.b32.xlu0 %v2466, 112
        %v3134 = vpop.permute.xlu0 %3133
        %v3136 = vsel %vm1190, %v3076, 0
        %v3139 = vsel %vm1190, %v3134, 0
        %3141 = vmatprep.subr.bf16.mxu0 0
        %3142 = vmatpush1.bf16.xpose.msra.mxu0 0
        %3143 = vmatprep.subr.bf16.mxu0 0
        %3144 = vmatpush1.bf16.xpose.msra.mxu0 0
        %3145 = vmatprep.subr.bf16.mxu0 0
        %3146 = vmatpush1.bf16.xpose.msra.mxu0 0
        %3147 = vmatprep.subr.bf16.mxu0 0
        %3148 = vmatpush1.bf16.xpose.msra.mxu0 0
        %3149 = vmatprep.subr.bf16.mxu0 0
        %3150 = vmatpush1.bf16.xpose.msra.mxu0 0
        %3151 = vmatprep.subr.bf16.mxu0 0
        %3152 = vmatpush1.bf16.xpose.msra.mxu0 0
        %3153 = vmatprep.subr.bf16.mxu0 0
        %3154 = vmatpush1.bf16.xpose.msra.mxu0 0
        %3155 = vmatprep.subr.bf16.mxu0 0
        %3156 = vmatpush1.bf16.xpose.msra.mxu0 %v3139
        %3157 = vmatprep.subr.bf16.mxu0 0
        %3158 = vmatpush2.bf16.xpose.msra.mxu0 0
        %3159 = vmatprep.subr.bf16.mxu0 0
        %3160 = vmatpush2.bf16.xpose.msra.mxu0 0
        %3161 = vmatprep.subr.bf16.mxu0 0
        %3162 = vmatpush2.bf16.xpose.msra.mxu0 0
        %3163 = vmatprep.subr.bf16.mxu0 0
        %3164 = vmatpush2.bf16.xpose.msra.mxu0 0
        %3165 = vmatprep.subr.bf16.mxu0 0
        %3166 = vmatpush2.bf16.xpose.msra.mxu0 0
        %3167 = vmatprep.subr.bf16.mxu0 0
        %3168 = vmatpush2.bf16.xpose.msra.mxu0 0
        %3169 = vmatprep.subr.bf16.mxu0 0
        %3170 = vmatpush2.bf16.xpose.msra.mxu0 0
        %3171 = vmatprep.subr.bf16.mxu0 0
        %3172 = vmatpush2.bf16.xpose.msra.mxu0 0
        %3173 = vmatprep.mubr.bf16.mxu0 0
        %3174 = vmatmul.mubr.bf16.gmra.mxu0 %v3136
        %v3175 = vpop.f32.mrf.mxu0
        %v3176 = vadd.f32 0.0, %v3175
        %v3177 = vpop.f32.mrf.mxu0
        %v3178 = vpop.f32.mrf.mxu0
        %v3179 = vpop.f32.mrf.mxu0
        %3180 = vdwg.mxu0
        %3182 = vrot.lane.b32.xlu0 %v2467, 112
        %v3183 = vpop.permute.xlu0 %3182
        %v3185 = vsel %vm1190, %v3079, 0
        %v3188 = vsel %vm1190, %v3183, 0
        %3190 = vmatprep.subr.bf16.mxu0 0
        %3191 = vmatpush1.bf16.xpose.msra.mxu0 0
        %3192 = vmatprep.subr.bf16.mxu0 0
        %3193 = vmatpush1.bf16.xpose.msra.mxu0 0
        %3194 = vmatprep.subr.bf16.mxu0 0
        %3195 = vmatpush1.bf16.xpose.msra.mxu0 0
        %3196 = vmatprep.subr.bf16.mxu0 0
        %3197 = vmatpush1.bf16.xpose.msra.mxu0 0
        %3198 = vmatprep.subr.bf16.mxu0 0
        %3199 = vmatpush1.bf16.xpose.msra.mxu0 0
        %3200 = vmatprep.subr.bf16.mxu0 0
        %3201 = vmatpush1.bf16.xpose.msra.mxu0 0
        %3202 = vmatprep.subr.bf16.mxu0 0
        %3203 = vmatpush1.bf16.xpose.msra.mxu0 0
        %3204 = vmatprep.subr.bf16.mxu0 0
        %3205 = vmatpush1.bf16.xpose.msra.mxu0 %v3188
        %3206 = vmatprep.subr.bf16.mxu0 0
        %3207 = vmatpush2.bf16.xpose.msra.mxu0 0
        %3208 = vmatprep.subr.bf16.mxu0 0
        %3209 = vmatpush2.bf16.xpose.msra.mxu0 0
        %3210 = vmatprep.subr.bf16.mxu0 0
        %3211 = vmatpush2.bf16.xpose.msra.mxu0 0
        %3212 = vmatprep.subr.bf16.mxu0 0
        %3213 = vmatpush2.bf16.xpose.msra.mxu0 0
        %3214 = vmatprep.subr.bf16.mxu0 0
        %3215 = vmatpush2.bf16.xpose.msra.mxu0 0
        %3216 = vmatprep.subr.bf16.mxu0 0
        %3217 = vmatpush2.bf16.xpose.msra.mxu0 0
        %3218 = vmatprep.subr.bf16.mxu0 0
        %3219 = vmatpush2.bf16.xpose.msra.mxu0 0
        %3220 = vmatprep.subr.bf16.mxu0 0
        %3221 = vmatpush2.bf16.xpose.msra.mxu0 0
        %3222 = vmatprep.mubr.bf16.mxu0 0
        %3223 = vmatmul.mubr.bf16.gmra.mxu0 %v3185
        %v3224 = vpop.f32.mrf.mxu0
        %v3225 = vadd.f32 0.0, %v3224
        %v3226 = vpop.f32.mrf.mxu0
        %v3227 = vpop.f32.mrf.mxu0
        %v3228 = vpop.f32.mrf.mxu0
        %3229 = vdwg.mxu0
        %3231 = vrot.lane.b32.xlu0 %v2468, 112
        %v3232 = vpop.permute.xlu0 %3231
        %v3234 = vsel %vm1190, %v3082, 0
        %v3237 = vsel %vm1190, %v3232, 0
        %3239 = vmatprep.subr.bf16.mxu0 0
        %3240 = vmatpush1.bf16.xpose.msra.mxu0 0
        %3241 = vmatprep.subr.bf16.mxu0 0
        %3242 = vmatpush1.bf16.xpose.msra.mxu0 0
        %3243 = vmatprep.subr.bf16.mxu0 0
        %3244 = vmatpush1.bf16.xpose.msra.mxu0 0
        %3245 = vmatprep.subr.bf16.mxu0 0
        %3246 = vmatpush1.bf16.xpose.msra.mxu0 0
        %3247 = vmatprep.subr.bf16.mxu0 0
        %3248 = vmatpush1.bf16.xpose.msra.mxu0 0
        %3249 = vmatprep.subr.bf16.mxu0 0
        %3250 = vmatpush1.bf16.xpose.msra.mxu0 0
        %3251 = vmatprep.subr.bf16.mxu0 0
        %3252 = vmatpush1.bf16.xpose.msra.mxu0 0
        %3253 = vmatprep.subr.bf16.mxu0 0
        %3254 = vmatpush1.bf16.xpose.msra.mxu0 %v3237
        %3255 = vmatprep.subr.bf16.mxu0 0
        %3256 = vmatpush2.bf16.xpose.msra.mxu0 0
        %3257 = vmatprep.subr.bf16.mxu0 0
        %3258 = vmatpush2.bf16.xpose.msra.mxu0 0
        %3259 = vmatprep.subr.bf16.mxu0 0
        %3260 = vmatpush2.bf16.xpose.msra.mxu0 0
        %3261 = vmatprep.subr.bf16.mxu0 0
        %3262 = vmatpush2.bf16.xpose.msra.mxu0 0
        %3263 = vmatprep.subr.bf16.mxu0 0
        %3264 = vmatpush2.bf16.xpose.msra.mxu0 0
        %3265 = vmatprep.subr.bf16.mxu0 0
        %3266 = vmatpush2.bf16.xpose.msra.mxu0 0
        %3267 = vmatprep.subr.bf16.mxu0 0
        %3268 = vmatpush2.bf16.xpose.msra.mxu0 0
        %3269 = vmatprep.subr.bf16.mxu0 0
        %3270 = vmatpush2.bf16.xpose.msra.mxu0 0
        %3271 = vmatprep.mubr.bf16.mxu0 0
        %3272 = vmatmul.mubr.bf16.gmra.mxu0 %v3234
        %v3273 = vpop.f32.mrf.mxu0
        %v3274 = vadd.f32 0.0, %v3273
        %v3275 = vpop.f32.mrf.mxu0
        %v3276 = vpop.f32.mrf.mxu0
        %v3277 = vpop.f32.mrf.mxu0
        %3278 = vdwg.mxu0
        %3279 = vxpose.xlu0.b32.start [1/16] %v3127, 128
        %3280 = vxpose.xlu0.b32.cont [2/16] 0.0, 128
        %3281 = vxpose.xlu0.b32.cont [3/16] 0.0, 128
        %3282 = vxpose.xlu0.b32.cont [4/16] 0.0, 128
        %3283 = vxpose.xlu0.b32.cont [5/16] 0.0, 128
        %3284 = vxpose.xlu0.b32.cont [6/16] 0.0, 128
        %3285 = vxpose.xlu0.b32.cont [7/16] 0.0, 128
        %3286 = vxpose.xlu0.b32.cont [8/16] 0.0, 128
        %3287 = vxpose.xlu0.b32.cont [9/16] 0.0, 128
        %3288 = vxpose.xlu0.b32.cont [10/16] 0.0, 128
        %3289 = vxpose.xlu0.b32.cont [11/16] 0.0, 128
        %3290 = vxpose.xlu0.b32.cont [12/16] 0.0, 128
        %3291 = vxpose.xlu0.b32.cont [13/16] 0.0, 128
        %3292 = vxpose.xlu0.b32.cont [14/16] 0.0, 128
        %3293 = vxpose.xlu0.b32.cont [15/16] 0.0, 128
        %3294 = vxpose.xlu0.b32.end [16/16] 0.0, 128
        %v3295 = vpop.trf.xlu0
        %v3296 = vpop.trf.xlu0
        %v3297 = vpop.trf.xlu0
        %v3298 = vpop.trf.xlu0
        %v3299 = vpop.trf.xlu0
        %v3300 = vpop.trf.xlu0
        %v3301 = vpop.trf.xlu0
        %v3302 = vpop.trf.xlu0
        %v3303 = vpop.trf.xlu0
        %v3304 = vpop.trf.xlu0
        %v3305 = vpop.trf.xlu0
        %v3306 = vpop.trf.xlu0
        %v3307 = vpop.trf.xlu0
        %v3308 = vpop.trf.xlu0
        %v3309 = vpop.trf.xlu0
        %v3310 = vpop.trf.xlu0
        %3311 = vxpose.xlu0.b32.start [1/16] %v3176, 128
        %3312 = vxpose.xlu0.b32.cont [2/16] 0.0, 128
        %3313 = vxpose.xlu0.b32.cont [3/16] 0.0, 128
        %3314 = vxpose.xlu0.b32.cont [4/16] 0.0, 128
        %3315 = vxpose.xlu0.b32.cont [5/16] 0.0, 128
        %3316 = vxpose.xlu0.b32.cont [6/16] 0.0, 128
        %3317 = vxpose.xlu0.b32.cont [7/16] 0.0, 128
        %3318 = vxpose.xlu0.b32.cont [8/16] 0.0, 128
        %3319 = vxpose.xlu0.b32.cont [9/16] 0.0, 128
        %3320 = vxpose.xlu0.b32.cont [10/16] 0.0, 128
        %3321 = vxpose.xlu0.b32.cont [11/16] 0.0, 128
        %3322 = vxpose.xlu0.b32.cont [12/16] 0.0, 128
        %3323 = vxpose.xlu0.b32.cont [13/16] 0.0, 128
        %3324 = vxpose.xlu0.b32.cont [14/16] 0.0, 128
        %3325 = vxpose.xlu0.b32.cont [15/16] 0.0, 128
        %3326 = vxpose.xlu0.b32.end [16/16] 0.0, 128
        %v3327 = vpop.trf.xlu0
        %v3328 = vpop.trf.xlu0
        %v3329 = vpop.trf.xlu0
        %v3330 = vpop.trf.xlu0
        %v3331 = vpop.trf.xlu0
        %v3332 = vpop.trf.xlu0
        %v3333 = vpop.trf.xlu0
        %v3334 = vpop.trf.xlu0
        %v3335 = vpop.trf.xlu0
        %v3336 = vpop.trf.xlu0
        %v3337 = vpop.trf.xlu0
        %v3338 = vpop.trf.xlu0
        %v3339 = vpop.trf.xlu0
        %v3340 = vpop.trf.xlu0
        %v3341 = vpop.trf.xlu0
        %v3342 = vpop.trf.xlu0
        %3343 = vxpose.xlu0.b32.start [1/16] %v3225, 128
        %3344 = vxpose.xlu0.b32.cont [2/16] 0.0, 128
        %3345 = vxpose.xlu0.b32.cont [3/16] 0.0, 128
        %3346 = vxpose.xlu0.b32.cont [4/16] 0.0, 128
        %3347 = vxpose.xlu0.b32.cont [5/16] 0.0, 128
        %3348 = vxpose.xlu0.b32.cont [6/16] 0.0, 128
        %3349 = vxpose.xlu0.b32.cont [7/16] 0.0, 128
        %3350 = vxpose.xlu0.b32.cont [8/16] 0.0, 128
        %3351 = vxpose.xlu0.b32.cont [9/16] 0.0, 128
        %3352 = vxpose.xlu0.b32.cont [10/16] 0.0, 128
        %3353 = vxpose.xlu0.b32.cont [11/16] 0.0, 128
        %3354 = vxpose.xlu0.b32.cont [12/16] 0.0, 128
        %3355 = vxpose.xlu0.b32.cont [13/16] 0.0, 128
        %3356 = vxpose.xlu0.b32.cont [14/16] 0.0, 128
        %3357 = vxpose.xlu0.b32.cont [15/16] 0.0, 128
        %3358 = vxpose.xlu0.b32.end [16/16] 0.0, 128
        %v3359 = vpop.trf.xlu0
        %v3360 = vpop.trf.xlu0
        %v3361 = vpop.trf.xlu0
        %v3362 = vpop.trf.xlu0
        %v3363 = vpop.trf.xlu0
        %v3364 = vpop.trf.xlu0
        %v3365 = vpop.trf.xlu0
        %v3366 = vpop.trf.xlu0
        %v3367 = vpop.trf.xlu0
        %v3368 = vpop.trf.xlu0
        %v3369 = vpop.trf.xlu0
        %v3370 = vpop.trf.xlu0
        %v3371 = vpop.trf.xlu0
        %v3372 = vpop.trf.xlu0
        %v3373 = vpop.trf.xlu0
        %v3374 = vpop.trf.xlu0
        %3375 = vxpose.xlu0.b32.start [1/16] %v3274, 128
        %3376 = vxpose.xlu0.b32.cont [2/16] 0.0, 128
        %3377 = vxpose.xlu0.b32.cont [3/16] 0.0, 128
        %3378 = vxpose.xlu0.b32.cont [4/16] 0.0, 128
        %3379 = vxpose.xlu0.b32.cont [5/16] 0.0, 128
        %3380 = vxpose.xlu0.b32.cont [6/16] 0.0, 128
        %3381 = vxpose.xlu0.b32.cont [7/16] 0.0, 128
        %3382 = vxpose.xlu0.b32.cont [8/16] 0.0, 128
        %3383 = vxpose.xlu0.b32.cont [9/16] 0.0, 128
        %3384 = vxpose.xlu0.b32.cont [10/16] 0.0, 128
        %3385 = vxpose.xlu0.b32.cont [11/16] 0.0, 128
        %3386 = vxpose.xlu0.b32.cont [12/16] 0.0, 128
        %3387 = vxpose.xlu0.b32.cont [13/16] 0.0, 128
        %3388 = vxpose.xlu0.b32.cont [14/16] 0.0, 128
        %3389 = vxpose.xlu0.b32.cont [15/16] 0.0, 128
        %3390 = vxpose.xlu0.b32.end [16/16] 0.0, 128
        %v3391 = vpop.trf.xlu0
        %v3392 = vpop.trf.xlu0
        %v3393 = vpop.trf.xlu0
        %v3394 = vpop.trf.xlu0
        %v3395 = vpop.trf.xlu0
        %v3396 = vpop.trf.xlu0
        %v3397 = vpop.trf.xlu0
        %v3398 = vpop.trf.xlu0
        %v3399 = vpop.trf.xlu0
        %v3400 = vpop.trf.xlu0
        %v3401 = vpop.trf.xlu0
        %v3402 = vpop.trf.xlu0
        %v3403 = vpop.trf.xlu0
        %v3404 = vpop.trf.xlu0
        %v3405 = vpop.trf.xlu0
        %v3406 = vpop.trf.xlu0
        %v3407 = vcombine.low %v3295, %v3359
        %v3408 = vcombine.high %v3295, %v3359
        %v3410 = vunpack.c.l.s4 1983009808
        %v3411 = vunpack.c.0.s8 %v3410
        %v3412 = vlaneseq
        %v3413 = vshrl.u32 %v3412, 7
        %v3414 = vsub.s32 %v3411, %v3413
        %v3415 = vrot.slane %v3407, %v3414
        %v3417 = vunpack.c.l.s4 1983009808
        %v3418 = vunpack.c.0.s8 %v3417
        %v3419 = vlaneseq
        %v3420 = vshrl.u32 %v3419, 7
        %v3421 = vsub.s32 %v3418, %v3420
        %v3422 = vrot.slane %v3408, %v3421
        %v3423 = vcombine.low %v3327, %v3391
        %v3424 = vcombine.high %v3327, %v3391
        %v3426 = vunpack.c.l.s4 1983009808
        %v3427 = vunpack.c.0.s8 %v3426
        %v3428 = vlaneseq
        %v3429 = vshrl.u32 %v3428, 7
        %v3430 = vsub.s32 %v3427, %v3429
        %v3431 = vrot.slane %v3423, %v3430
        %v3433 = vunpack.c.l.s4 1983009808
        %v3434 = vunpack.c.0.s8 %v3433
        %v3435 = vlaneseq
        %v3436 = vshrl.u32 %v3435, 7
        %v3437 = vsub.s32 %v3434, %v3436
        %v3438 = vrot.slane %v3424, %v3437
        %v3439 = vcombine.low %v3415, %v3431
        %v3440 = vcombine.high %v3415, %v3431
        %v3442 = vunpack.c.l.s4 1934713408
        %v3443 = vunpack.c.0.s8 %v3442
        %v3444 = vlaneseq
        %v3445 = vshrl.u32 %v3444, 7
        %v3446 = vsub.s32 %v3443, %v3445
        %v3447 = vrot.slane %v3439, %v3446
        %v3449 = vunpack.c.l.s4 1934713408
        %v3450 = vunpack.c.0.s8 %v3449
        %v3451 = vlaneseq
        %v3452 = vshrl.u32 %v3451, 7
        %v3453 = vsub.s32 %v3450, %v3452
        %v3454 = vrot.slane %v3440, %v3453
        %v3455 = vcombine.low %v3422, %v3438
        %v3456 = vcombine.high %v3422, %v3438
        %v3458 = vunpack.c.l.s4 1934713408
        %v3459 = vunpack.c.0.s8 %v3458
        %v3460 = vlaneseq
        %v3461 = vshrl.u32 %v3460, 7
        %v3462 = vsub.s32 %v3459, %v3461
        %v3463 = vrot.slane %v3455, %v3462
        %v3465 = vunpack.c.l.s4 1934713408
        %v3466 = vunpack.c.0.s8 %v3465
        %v3467 = vlaneseq
        %v3468 = vshrl.u32 %v3467, 7
        %v3469 = vsub.s32 %v3466, %v3468
        %v3470 = vrot.slane %v3456, %v3469
        %v3471 = vcombine.high %v3447, 0.0
        %v3472 = vcombine.high %v3454, 0.0
        %v3473 = vcombine.high %v3463, 0.0
        %v3474 = vcombine.high %v3470, 0.0
        %v3475 = vcombine.low %v3447, %v3454
        %v3477 = vunpack.c.l.s4 1983009808
        %v3478 = vunpack.c.0.s8 %v3477
        %v3479 = vlaneseq
        %v3480 = vshrl.u32 %v3479, 7
        %v3481 = vsub.s32 %v3478, %v3480
        %v3482 = vrot.slane %v3475, %v3481
        %v3483 = vcombine.low %v3471, %v3472
        %v3485 = vunpack.c.l.s4 1983009808
        %v3486 = vunpack.c.0.s8 %v3485
        %v3487 = vlaneseq
        %v3488 = vshrl.u32 %v3487, 7
        %v3489 = vsub.s32 %v3486, %v3488
        %v3490 = vrot.slane %v3483, %v3489
        %v3491 = vcombine.low %v3463, %v3470
        %v3493 = vunpack.c.l.s4 1983009808
        %v3494 = vunpack.c.0.s8 %v3493
        %v3495 = vlaneseq
        %v3496 = vshrl.u32 %v3495, 7
        %v3497 = vsub.s32 %v3494, %v3496
        %v3498 = vrot.slane %v3491, %v3497
        %v3499 = vcombine.low %v3473, %v3474
        %v3501 = vunpack.c.l.s4 1983009808
        %v3502 = vunpack.c.0.s8 %v3501
        %v3503 = vlaneseq
        %v3504 = vshrl.u32 %v3503, 7
        %v3505 = vsub.s32 %v3502, %v3504
        %v3506 = vrot.slane %v3499, %v3505
        %v3507 = vcombine.low %v3482, %v3490
        %v3508 = vcombine.high %v3482, %v3490
        %v3510 = vunpack.c.l.s4 1934713408
        %v3511 = vunpack.c.0.s8 %v3510
        %v3512 = vlaneseq
        %v3513 = vshrl.u32 %v3512, 7
        %v3514 = vsub.s32 %v3511, %v3513
        %v3515 = vrot.slane %v3507, %v3514
        %v3517 = vunpack.c.l.s4 1934713408
        %v3518 = vunpack.c.0.s8 %v3517
        %v3519 = vlaneseq
        %v3520 = vshrl.u32 %v3519, 7
        %v3521 = vsub.s32 %v3518, %v3520
        %v3522 = vrot.slane %v3508, %v3521
        %v3523 = vcombine.low %v3498, %v3506
        %v3524 = vcombine.high %v3498, %v3506
        %v3526 = vunpack.c.l.s4 1934713408
        %v3527 = vunpack.c.0.s8 %v3526
        %v3528 = vlaneseq
        %v3529 = vshrl.u32 %v3528, 7
        %v3530 = vsub.s32 %v3527, %v3529
        %v3531 = vrot.slane %v3523, %v3530
        %v3533 = vunpack.c.l.s4 1934713408
        %v3534 = vunpack.c.0.s8 %v3533
        %v3535 = vlaneseq
        %v3536 = vshrl.u32 %v3535, 7
        %v3537 = vsub.s32 %v3534, %v3536
        %v3538 = vrot.slane %v3524, %v3537
        %v3539 = vcombine.low %v3515, %v3531
        %v3540 = vcombine.high %v3515, %v3531
        %v3541 = vcombine.low %v3522, %v3538
        %v3542 = vcombine.high %v3522, %v3538
        %3544 = vrot.lane.b32.xlu0 %v3540, 8
        %v3545 = vpop.permute.xlu0 %3544
        %3548 = vrot.lane.b32.xlu0 %v3541, 16
        %v3549 = vpop.permute.xlu0 %3548
        %3552 = vrot.lane.b32.xlu0 %v3542, 24
        %v3553 = vpop.permute.xlu0 %3552
        %v3555 = vsel %vm991, %v3539, %v3545
        %v3556 = vsel %vm1190, %v3555, %v3549
        %v3557 = vsel %vm2315, %v3556, %v3553
        %v3558 = vld [vmem:[#allocation2] sm:$0xff]
        %v3559 = vld [vmem:[#allocation2 + $0x8] sm:$0xff]
        %v3560 = vpack.c.bf16 %v3557, %v3557
        %v3561 = vld [vmem:[%s7 + $0x20] sm:$0xff]
        %v3562 = vld [vmem:[%s7 + $0x28] sm:$0xff]
        %v3563 = vld [vmem:[%s7 + $0x30] sm:$0xff]
        %v3564 = vld [vmem:[%s7 + $0x38] sm:$0xff]
        %v3569 = vunpack.c.l.b16 %v3561
        %v3570 = vunpack.c.h.b16 %v3561
        %v3571 = vunpack.c.l.b16 %v3562
        %v3572 = vunpack.c.h.b16 %v3562
        %v3573 = vunpack.c.l.b16 %v3563
        %v3574 = vunpack.c.h.b16 %v3563
        %v3575 = vunpack.c.l.b16 %v3564
        %v3576 = vunpack.c.h.b16 %v3564
        %v3577 = vpack.c.b16 %v3571, %v3569
        %v3578 = vpack.c.b16 %v3572, %v3570
        %v3579 = vpack.c.b16 %v3575, %v3573
        %v3580 = vpack.c.b16 %v3576, %v3574
        %v3586 = vsel %vm410, %v3560, 0
        %3588 = vmatprep.subr.bf16.mxu0 0
        %3589 = vmatpush1.bf16.msra.mxu0 0
        %3590 = vmatprep.subr.bf16.mxu0 0
        %3591 = vmatpush1.bf16.msra.mxu0 0
        %3592 = vmatprep.subr.bf16.mxu0 0
        %3593 = vmatpush1.bf16.msra.mxu0 0
        %3594 = vmatprep.subr.bf16.mxu0 0
        %3595 = vmatpush1.bf16.msra.mxu0 0
        %3596 = vmatprep.subr.bf16.mxu0 0
        %3597 = vmatpush1.bf16.msra.mxu0 0
        %3598 = vmatprep.subr.bf16.mxu0 0
        %3599 = vmatpush1.bf16.msra.mxu0 0
        %3600 = vmatprep.subr.bf16.mxu0 %v3580
        %3601 = vmatpush1.bf16.msra.mxu0 %v3579
        %3602 = vmatprep.subr.bf16.mxu0 %v3578
        %3603 = vmatpush1.bf16.msra.mxu0 %v3577
        %3604 = vmatprep.subr.bf16.mxu0 0
        %3605 = vmatpush2.bf16.msra.mxu0 0
        %3606 = vmatprep.subr.bf16.mxu0 0
        %3607 = vmatpush2.bf16.msra.mxu0 0
        %3608 = vmatprep.subr.bf16.mxu0 0
        %3609 = vmatpush2.bf16.msra.mxu0 0
        %3610 = vmatprep.subr.bf16.mxu0 0
        %3611 = vmatpush2.bf16.msra.mxu0 0
        %3612 = vmatprep.subr.bf16.mxu0 0
        %3613 = vmatpush2.bf16.msra.mxu0 0
        %3614 = vmatprep.subr.bf16.mxu0 0
        %3615 = vmatpush2.bf16.msra.mxu0 0
        %3616 = vmatprep.subr.bf16.mxu0 0
        %3617 = vmatpush2.bf16.msra.mxu0 0
        %3618 = vmatprep.subr.bf16.mxu0 0
        %3619 = vmatpush2.bf16.msra.mxu0 0
        %3620 = vmatprep.mubr.bf16.mxu0 0
        %3621 = vmatmul.mubr.bf16.gmra.mxu0 %v3586
        %v3622 = vpop.f32.mrf.mxu0
        %v3623 = vadd.f32 0.0, %v3622
        %v3624 = vpop.f32.mrf.mxu0
        %v3625 = vadd.f32 0.0, %v3624
        %v3626 = vpop.f32.mrf.mxu0
        %v3627 = vpop.f32.mrf.mxu0
        %3628 = vdwg.mxu0
        %v3629 = vadd.f32 %v3558, %v3623
        %v3630 = vadd.f32 %v3559, %v3625
        %3631 = vst [vmem:[#allocation2] sm:$0xff] %v3629
        %3632 = vst [vmem:[#allocation2 + $0x8] sm:$0xff] %v3630
        %v3633 = vld [vmem:[#allocation2] sm:$0xff]
        %v3634 = vld [vmem:[#allocation2 + $0x8] sm:$0xff]
        %v3635 = vmul.f32 %v3633, 0.5
        %v3636 = vmul.f32 %v3634, 0.5
        %v3637 = vmul.f32 %v3633, %v3633
        %v3638 = vmul.f32 %v3634, %v3634
        %v3639 = vmul.f32 %v3633, %v3637
        %v3640 = vmul.f32 %v3634, %v3638
        %v3641 = vmul.f32 %v3639, 0.044715
        %v3642 = vmul.f32 %v3640, 0.044715
        %v3643 = vadd.f32 %v3633, %v3641
        %v3644 = vadd.f32 %v3634, %v3642
        %v3645 = vmul.f32 %v3643, 0.7978846
        %v3646 = vmul.f32 %v3644, 0.7978846
        %v3647 = vtanh.pop %v3645
        %v3648 = vtanh.pop %v3646
        %v3649 = vadd.f32 %v3647, 1.0
        %v3650 = vadd.f32 %v3648, 1.0
        %v3651 = vmul.f32 %v3635, %v3649
        %v3652 = vmul.f32 %v3636, %v3650
        %v3653 = vpack.c.bf16 %v3651, %v3651
        %v3654 = vpack.c.bf16 %v3652, %v3652
        %v3655 = vld [vmem:[%s8] sm:$0xf]
        %v3656 = vld [vmem:[%s8 + $0x4] sm:$0xf]
        %v3657 = vld [vmem:[%s8 + $0x8] sm:$0xf]
        %v3658 = vld [vmem:[%s8 + $0xc] sm:$0xf]
        %v3659 = vld [vmem:[%s8 + $0x10] sm:$0xf]
        %v3660 = vld [vmem:[%s8 + $0x14] sm:$0xf]
        %v3661 = vld [vmem:[%s8 + $0x18] sm:$0xf]
        %v3662 = vld [vmem:[%s8 + $0x1c] sm:$0xf]
        %v3663 = vld [vmem:[%s8 + $0x20] sm:$0xf]
        %v3664 = vld [vmem:[%s8 + $0x24] sm:$0xf]
        %v3665 = vld [vmem:[%s8 + $0x28] sm:$0xf]
        %v3666 = vld [vmem:[%s8 + $0x2c] sm:$0xf]
        %v3667 = vld [vmem:[%s8 + $0x30] sm:$0xf]
        %v3668 = vld [vmem:[%s8 + $0x34] sm:$0xf]
        %v3669 = vld [vmem:[%s8 + $0x38] sm:$0xf]
        %v3670 = vld [vmem:[%s8 + $0x3c] sm:$0xf]
        %v3671 = vld [vmem:[%s8 + $0x40] sm:$0xf]
        %v3672 = vld [vmem:[%s8 + $0x44] sm:$0xf]
        %v3673 = vld [vmem:[%s8 + $0x48] sm:$0xf]
        %v3674 = vld [vmem:[%s8 + $0x4c] sm:$0xf]
        %v3675 = vld [vmem:[%s8 + $0x50] sm:$0xf]
        %v3676 = vld [vmem:[%s8 + $0x54] sm:$0xf]
        %v3677 = vld [vmem:[%s8 + $0x58] sm:$0xf]
        %v3678 = vld [vmem:[%s8 + $0x5c] sm:$0xf]
        %v3679 = vld [vmem:[%s8 + $0x60] sm:$0xf]
        %v3680 = vld [vmem:[%s8 + $0x64] sm:$0xf]
        %v3681 = vld [vmem:[%s8 + $0x68] sm:$0xf]
        %v3682 = vld [vmem:[%s8 + $0x6c] sm:$0xf]
        %v3683 = vld [vmem:[%s8 + $0x70] sm:$0xf]
        %v3684 = vld [vmem:[%s8 + $0x74] sm:$0xf]
        %v3685 = vld [vmem:[%s8 + $0x78] sm:$0xf]
        %v3686 = vld [vmem:[%s8 + $0x7c] sm:$0xf]
        %v3719 = vunpack.c.l.b16 %v3655
        %v3720 = vunpack.c.l.b16 %v3656
        %v3721 = vunpack.c.l.b16 %v3657
        %v3722 = vunpack.c.l.b16 %v3658
        %v3723 = vunpack.c.l.b16 %v3659
        %v3724 = vunpack.c.l.b16 %v3660
        %v3725 = vunpack.c.l.b16 %v3661
        %v3726 = vunpack.c.l.b16 %v3662
        %v3727 = vunpack.c.l.b16 %v3663
        %v3728 = vunpack.c.l.b16 %v3664
        %v3729 = vunpack.c.l.b16 %v3665
        %v3730 = vunpack.c.l.b16 %v3666
        %v3731 = vunpack.c.l.b16 %v3667
        %v3732 = vunpack.c.l.b16 %v3668
        %v3733 = vunpack.c.l.b16 %v3669
        %v3734 = vunpack.c.l.b16 %v3670
        %v3735 = vunpack.c.l.b16 %v3671
        %v3736 = vunpack.c.l.b16 %v3672
        %v3737 = vunpack.c.l.b16 %v3673
        %v3738 = vunpack.c.l.b16 %v3674
        %v3739 = vunpack.c.l.b16 %v3675
        %v3740 = vunpack.c.l.b16 %v3676
        %v3741 = vunpack.c.l.b16 %v3677
        %v3742 = vunpack.c.l.b16 %v3678
        %v3743 = vunpack.c.l.b16 %v3679
        %v3744 = vunpack.c.l.b16 %v3680
        %v3745 = vunpack.c.l.b16 %v3681
        %v3746 = vunpack.c.l.b16 %v3682
        %v3747 = vunpack.c.l.b16 %v3683
        %v3748 = vunpack.c.l.b16 %v3684
        %v3749 = vunpack.c.l.b16 %v3685
        %v3750 = vunpack.c.l.b16 %v3686
        %v3751 = vpack.c.b16 %v3720, %v3719
        %v3752 = vpack.c.b16 %v3722, %v3721
        %v3753 = vpack.c.b16 %v3724, %v3723
        %v3754 = vpack.c.b16 %v3726, %v3725
        %v3755 = vpack.c.b16 %v3728, %v3727
        %v3756 = vpack.c.b16 %v3730, %v3729
        %v3757 = vpack.c.b16 %v3732, %v3731
        %v3758 = vpack.c.b16 %v3734, %v3733
        %v3759 = vpack.c.b16 %v3736, %v3735
        %v3760 = vpack.c.b16 %v3738, %v3737
        %v3761 = vpack.c.b16 %v3740, %v3739
        %v3762 = vpack.c.b16 %v3742, %v3741
        %v3763 = vpack.c.b16 %v3744, %v3743
        %v3764 = vpack.c.b16 %v3746, %v3745
        %v3765 = vpack.c.b16 %v3748, %v3747
        %v3766 = vpack.c.b16 %v3750, %v3749
        %3783 = vmatprep.subr.bf16.mxu0 0
        %3784 = vmatpush1.bf16.msra.mxu0 %v3758
        %3785 = vmatprep.subr.bf16.mxu0 0
        %3786 = vmatpush1.bf16.msra.mxu0 %v3757
        %3787 = vmatprep.subr.bf16.mxu0 0
        %3788 = vmatpush1.bf16.msra.mxu0 %v3756
        %3789 = vmatprep.subr.bf16.mxu0 0
        %3790 = vmatpush1.bf16.msra.mxu0 %v3755
        %3791 = vmatprep.subr.bf16.mxu0 0
        %3792 = vmatpush1.bf16.msra.mxu0 %v3754
        %3793 = vmatprep.subr.bf16.mxu0 0
        %3794 = vmatpush1.bf16.msra.mxu0 %v3753
        %3795 = vmatprep.subr.bf16.mxu0 0
        %3796 = vmatpush1.bf16.msra.mxu0 %v3752
        %3797 = vmatprep.subr.bf16.mxu0 0
        %3798 = vmatpush1.bf16.msra.mxu0 %v3751
        %3799 = vmatprep.subr.bf16.mxu0 0
        %3800 = vmatpush2.bf16.msra.mxu0 %v3766
        %3801 = vmatprep.subr.bf16.mxu0 0
        %3802 = vmatpush2.bf16.msra.mxu0 %v3765
        %3803 = vmatprep.subr.bf16.mxu0 0
        %3804 = vmatpush2.bf16.msra.mxu0 %v3764
        %3805 = vmatprep.subr.bf16.mxu0 0
        %3806 = vmatpush2.bf16.msra.mxu0 %v3763
        %3807 = vmatprep.subr.bf16.mxu0 0
        %3808 = vmatpush2.bf16.msra.mxu0 %v3762
        %3809 = vmatprep.subr.bf16.mxu0 0
        %3810 = vmatpush2.bf16.msra.mxu0 %v3761
        %3811 = vmatprep.subr.bf16.mxu0 0
        %3812 = vmatpush2.bf16.msra.mxu0 %v3760
        %3813 = vmatprep.subr.bf16.mxu0 0
        %3814 = vmatpush2.bf16.msra.mxu0 %v3759
        %3815 = vmatprep.mubr.bf16.mxu0 %v3654
        %3816 = vmatmul.mubr.bf16.gmra.mxu0 %v3653
        %v3817 = vpop.f32.mrf.mxu0
        %v3818 = vadd.f32 0.0, %v3817
        %v3819 = vpop.f32.mrf.mxu0
        %v3820 = vpop.f32.mrf.mxu0
        %v3821 = vpop.f32.mrf.mxu0
        %3822 = vdwg.mxu0
        %s3823 = sld [smem:[#allocation3]]
        %v3824 = vstv %s3823
        %v3825 = vmul.f32 %v3824, %v3818
        %v3826 = vadd.f32 %v409, %v3825
        %3827 = vst.msk [vmem:[%s394] sm:$0xff] %vm410, %v3826
        %s3828 = sand.u32 %s259, 1
        %s3829 = scalar_lea.sflag [#allocation6], %s3828
        %s3830 = sand.u32 %s259, 1
        %s3831 = smul.addr %s3830, 8
        %s3832 = scalar_lea.vmem [#allocation7], %s3831
        // Predicated region
        $region65: #{tpu_custom_call.1} parent=59 // pred_check
          %p3833 = pneg %p269
        $region66: #{tpu_custom_call.1} parent=59 // pred_check_branch
          %3835 = sbr.rel (%p3833) target = $region68
        $region67: #{tpu_custom_call.1} parent=59 // pred_region
          %s3837 = ssub.s32 128, 128
          %3838 = vsyncadd %s3829, %s3837
          %s3839 = smul.addr %s26, 128
          %s3840 = scalar_lea.hbm %s10, %s3839
          %s3842 = sshll.u32 %s3832, 4
          %s3843 = int_to_ptr.vmem [resolvable:$true] %s3842
          %3845 = dma.vmem_to_hbm [thread:$0]  %s3843, 128, %s3840, %s3829
        $region68: #{tpu_custom_call.1} parent=59 // pred_fallthru
          _
      $region60: #{tpu_custom_call.1} parent=5 // pred_fallthru
        _
      %p3846 = scmp.le.s32.totalorder 2, %s21
      // Predicated region
      $region69: #{tpu_custom_call.1} parent=5 // pred_check
        %p3847 = pneg %p3846
      $region70: #{tpu_custom_call.1} parent=5 // pred_check_branch
        %3849 = sbr.rel (%p3847) target = $region72
      $region71: #{tpu_custom_call.1} parent=5 // pred_region
        %s3850 = ssub.s32 %s21, 2
        // Predicated region
        $region73: #{tpu_custom_call.1} parent=71 // pred_check
          %p3851 = pneg %p275
        $region74: #{tpu_custom_call.1} parent=71 // pred_check_branch
          %3853 = sbr.rel (%p3851) target = $region76
        $region75: #{tpu_custom_call.1} parent=71 // pred_region
          %s3854 = sand.u32 %s260, 1
          %s3855 = scalar_lea.sflag [#allocation6], %s3854
          %s3856 = sand.u32 %s260, 1
          %s3857 = smul.addr %s3856, 8
          %s3858 = scalar_lea.vmem [#allocation7], %s3857
          %3859 = dma.done %s3855, 128
        $region76: #{tpu_custom_call.1} parent=71 // pred_fallthru
          _
      $region72: #{tpu_custom_call.1} parent=5 // pred_fallthru
        _
    $region6: #{tpu_custom_call.1} parent=1 // loop_footer
      %s25 = sadd.s32 1, %s21
    $region7: #{tpu_custom_call.1} parent=1 // loop_footer_branch
      %20 = sbr.rel target = $region3
    $region8: #{tpu_custom_call.1} parent=1 // loop_exit
      _
    %3860 = vsyncpa [#allocation5], 1
    %s3861 = scalar_lea.sflag [#allocation5], 1
    %3862 = vsyncpa %s3861, 1
    %3863 = vsyncpa [#allocation6], 1
    %s3864 = scalar_lea.sflag [#allocation6], 1
    %3865 = vsyncpa %s3864, 1

</llo_original>
